<compile_context>
chip_gen: v5e
topology: v5e:2x2
jax: 0.10.0
libtpu: 0.0.40
codegen_flags: <defaults>
</compile_context>

<pallas_src>
import functools

import jax
import jax.numpy as jnp
from jax.experimental import pallas as pl
from jax.experimental.pallas import tpu as pltpu


def _border_masks(H, W, L):
    """'same'-padding validity masks per (dy, dx) tap, shape (1, L) bool."""
    pos = jax.lax.broadcasted_iota(jnp.int32, (1, L), 1)
    if (W & (W - 1)) == 0:                       # power-of-two width: cheap AND
        col = jnp.bitwise_and(pos, W - 1)
    else:
        col = jax.lax.rem(pos, W)
    row_ok = {-1: pos >= W, 0: None, 1: pos < (H - 1) * W}
    col_ok = {-1: col >= 1, 0: None, 1: col <= (W - 2)}
    masks = {}
    for dy in (-1, 0, 1):
        for dx in (-1, 0, 1):
            r, c = row_ok[dy], col_ok[dx]
            if r is None:
                masks[(dy, dx)] = c
            elif c is None:
                masks[(dy, dx)] = r
            else:
                masks[(dy, dx)] = jnp.logical_and(r, c)
    return masks


def _conv3x3_relu(a, w_ref, b_ref, masks, W, L):
    """3x3 'same' conv + bias + ReLU, channels-leading.

    a     : (Cin, L) f32 activations (L = H*W, lane-dense).
    w_ref : (9, Cout, Cin) bf16 weights, tap-major (k = (dy+1)*3 + (dx+1)).
    b_ref : (Cout, 1) f32 bias.
    masks : dict {(dy, dx): (1, L) bool or None}.
    returns (Cout, L) f32.
    """
    acc = None
    for dy in (-1, 0, 1):
        for dx in (-1, 0, 1):
            d = dy * W + dx
            # out[:, p] must see in[:, p + d]  ->  roll by -d (cyclic; wraps
            # are zeroed by the border mask below).
            s = a if d == 0 else pltpu.roll(a, shift=(-d) % L, axis=1)
            m = masks[(dy, dx)]
            if m is not None:
                s = jnp.where(m, s, 0.0)
            contrib = jax.lax.dot_general(
                w_ref[(dy + 1) * 3 + (dx + 1)], s.astype(jnp.bfloat16),
                (((1,), (0,)), ((), ())),
                preferred_element_type=jnp.float32)
            acc = contrib if acc is None else acc + contrib
    return jnp.maximum(acc + b_ref[...], 0.0)     # f32, lane-dense epilogue


def _encoder_kernel(x_ref, w1_ref, b1_ref, w2_ref, b2_ref, w3_ref, b3_ref,
                    o_ref, *, H, W):
    # x_ref : (1, 8, H*W)   one image, channels-leading, f32 (channels 3->8 padded)
    # wN_ref: (9, Cout, Cin) bf16 tap-major weights (VMEM-resident)
    # bN_ref: (Cout, 1)     f32
    # o_ref : (1, 64, H*W)  channels-leading output, lane-dense store
    L = H * W
    masks = _border_masks(H, W, L)
    a = x_ref[0]                                              # (8, L)  f32
    a = _conv3x3_relu(a, w1_ref, b1_ref, masks, W, L)         # (16, L) f32
    a = _conv3x3_relu(a, w2_ref, b2_ref, masks, W, L)         # (32, L) f32
    a = _conv3x3_relu(a, w3_ref, b3_ref, masks, W, L)         # (64, L) f32
    o_ref[0] = a.astype(o_ref.dtype)


def shared_encoder_forward(x_nchw, params):
    """Mirrors SharedEncoder.forward. x_nchw: (N, 3, H, W) f32 -> (N, 64, H, W)."""
    N, cin0, H, W = x_nchw.shape
    assert cin0 == 3
    L = H * W
    cin0_p = 8          # pad layer-1 channels to the f32 sublane tile (8 rows)

    # NCHW -> (N, C, H*W): pure reshape (no transpose), then zero-pad channels.
    x_cl = x_nchw.reshape(N, cin0, L)
    x_cl = jnp.pad(x_cl, ((0, 0), (0, cin0_p - cin0), (0, 0)))

    flat = []
    couts = []
    for li, (w, b) in enumerate(params):        # w: HWIO (3, 3, Cin, Cout)
        kh, kw, cin, cout = w.shape
        assert (kh, kw) == (3, 3)
        w_cl = jnp.transpose(w, (0, 1, 3, 2)).reshape(9, cout, cin)  # (9, Cout, Cin)
        if li == 0:
            w_cl = jnp.pad(w_cl, ((0, 0), (0, 0), (0, cin0_p - cin)))
        flat.append(w_cl.astype(jnp.bfloat16))
        flat.append(b.reshape(cout, 1).astype(jnp.float32))
        couts.append(cout)
    w1, b1, w2, b2, w3, b3 = flat
    cout_last = couts[-1]

    kernel = functools.partial(_encoder_kernel, H=H, W=W)

    def _resident(arr):
        zeros = (0,) * arr.ndim
        return pl.BlockSpec(arr.shape, lambda n: zeros)   # VMEM-resident constant

    out = pl.pallas_call(
        kernel,
        out_shape=jax.ShapeDtypeStruct((N, cout_last, L), jnp.float32),
        grid_spec=pltpu.PrefetchScalarGridSpec(
            num_scalar_prefetch=0,
            grid=(N,),
            in_specs=[
                pl.BlockSpec((1, cin0_p, L), lambda n: (n, 0, 0)),
                _resident(w1), _resident(b1),
                _resident(w2), _resident(b2),
                _resident(w3), _resident(b3),
            ],
            out_specs=pl.BlockSpec((1, cout_last, L), lambda n: (n, 0, 0)),
        ),
        compiler_params=pltpu.CompilerParams(
            dimension_semantics=("parallel",),
            vmem_limit_bytes=32 * 1024 * 1024,
        ),
    )(x_cl, w1, b1, w2, b2, w3, b3)

    return out.reshape(N, cout_last, H, W)      # contiguous reshape (no transpose)


def init_shared_encoder_params(key):
    """Deterministic synthetic params matching SharedEncoder's conv shapes (HWIO)."""
    dims = [(3, 16), (16, 32), (32, 64)]
    params = []
    for i, (cin, cout) in enumerate(dims):
        kw, kb = jax.random.split(jax.random.fold_in(key, i))
        fan_in = cin * 9
        bound = 1.0 / jnp.sqrt(fan_in)
        w = jax.random.uniform(kw, (3, 3, cin, cout), jnp.float32, -bound, bound)
        b = jax.random.uniform(kb, (cout,), jnp.float32, -bound, bound)
        params.append((w, b))
    return params


def _reference_forward(x_nchw, params):
    """Pure-JAX f32 reference (lax.conv) for correctness check."""
    x = x_nchw
    for (w, b) in params:
        y = jax.lax.conv_general_dilated(
            x, w, window_strides=(1, 1), padding="SAME",
            dimension_numbers=("NCHW", "HWIO", "NCHW"))
        y = y + b.reshape(1, -1, 1, 1)
        x = jnp.maximum(y, 0.0)
    return x


if __name__ == "__main__":
    key = jax.random.PRNGKey(0)
    k_in, k_par = jax.random.split(key)

    # Small NCHW input consistent with the module: batch=2, channels=3, 16x16.
    x = jax.random.normal(k_in, (2, 3, 16, 16), jnp.float32)
    params = init_shared_encoder_params(k_par)

    out = shared_encoder_forward(x, params)
    out = jax.block_until_ready(out)

    assert out.shape == (2, 64, 16, 16), out.shape

    ref = _reference_forward(x, params)
    # bf16 MXU operands (f32 accumulation) through 3 layers -> loose tolerance.
    assert jnp.allclose(out, ref, atol=5e-2, rtol=5e-2), (
        float(jnp.max(jnp.abs(out - ref))))

    print("KERNEL_OK")
</pallas_src>

<mosaic_0001>
module attributes {stable_mosaic.version = 11 : i64} {
  func.func @_encoder_kernel(%arg0: i32, %arg1: memref<1x8x256xf32, #tpu.memory_space<vmem>>, %arg2: memref<9x16x8xbf16, #tpu.memory_space<vmem>>, %arg3: memref<16x1xf32, #tpu.memory_space<vmem>>, %arg4: memref<9x32x16xbf16, #tpu.memory_space<vmem>>, %arg5: memref<32x1xf32, #tpu.memory_space<vmem>>, %arg6: memref<9x64x32xbf16, #tpu.memory_space<vmem>>, %arg7: memref<64x1xf32, #tpu.memory_space<vmem>>, %arg8: memref<1x64x256xf32, #tpu.memory_space<vmem>>) attributes {dimension_semantics = [#tpu.dimension_semantics<parallel>], iteration_bounds = array<i64: 2>, scalar_prefetch = 0 : i64, scratch_operands = 0 : i64, tpu.core_type = #tpu.core_type<tc>, window_params = [{transform_indices = @transform_0, window_bounds = array<i64: 1, 8, 256>}, {pipeline_mode = #tpu.pipeline_mode<synchronous>, transform_indices = @transform_1, window_bounds = array<i64: 9, 16, 8>}, {pipeline_mode = #tpu.pipeline_mode<synchronous>, transform_indices = @transform_2, window_bounds = array<i64: 16, 1>}, {pipeline_mode = #tpu.pipeline_mode<synchronous>, transform_indices = @transform_3, window_bounds = array<i64: 9, 32, 16>}, {pipeline_mode = #tpu.pipeline_mode<synchronous>, transform_indices = @transform_4, window_bounds = array<i64: 32, 1>}, {pipeline_mode = #tpu.pipeline_mode<synchronous>, transform_indices = @transform_5, window_bounds = array<i64: 9, 64, 32>}, {pipeline_mode = #tpu.pipeline_mode<synchronous>, transform_indices = @transform_6, window_bounds = array<i64: 64, 1>}, {transform_indices = @transform_7, window_bounds = array<i64: 1, 64, 256>}]} {
    %0 = tpu.iota {dimensions = array<i32: 1>} : vector<1x256xi32>
    %c15_i32 = arith.constant 15 : i32
    %1 = vector.broadcast %c15_i32 : i32 to vector<1x256xi32>
    %2 = arith.andi %0, %1 : vector<1x256xi32>
    %c16_i32 = arith.constant 16 : i32
    %3 = vector.broadcast %c16_i32 : i32 to vector<1x256xi32>
    %4 = arith.cmpi sge, %0, %3 : vector<1x256xi32>
    %c240_i32 = arith.constant 240 : i32
    %5 = vector.broadcast %c240_i32 : i32 to vector<1x256xi32>
    %6 = arith.cmpi slt, %0, %5 : vector<1x256xi32>
    %c1_i32 = arith.constant 1 : i32
    %7 = vector.broadcast %c1_i32 : i32 to vector<1x256xi32>
    %8 = arith.cmpi sge, %2, %7 : vector<1x256xi32>
    %c14_i32 = arith.constant 14 : i32
    %9 = vector.broadcast %c14_i32 : i32 to vector<1x256xi32>
    %10 = arith.cmpi sle, %2, %9 : vector<1x256xi32>
    %11 = arith.andi %4, %8 : vector<1x256xi1>
    %12 = arith.andi %4, %10 : vector<1x256xi1>
    %13 = arith.andi %6, %8 : vector<1x256xi1>
    %14 = arith.andi %6, %10 : vector<1x256xi1>
    %c0 = arith.constant 0 : index
    %c0_0 = arith.constant 0 : index
    %c0_1 = arith.constant 0 : index
    %15 = vector.load %arg1[%c0, %c0_0, %c0_1] : memref<1x8x256xf32, #tpu.memory_space<vmem>>, vector<1x8x256xf32>
    %16 = vector.shape_cast %15 : vector<1x8x256xf32> to vector<8x256xf32>
    %c17_i32 = arith.constant 17 : i32
    %17 = tpu.dynamic_rotate %16 by %c17_i32 dim 1 : vector<8x256xf32>, i32 -> vector<8x256xf32>
    %cst = arith.constant 0.000000e+00 : f32
    %18 = vector.shape_cast %11 : vector<1x256xi1> to vector<1x256xi1>
    %19 = vector.broadcast %18 : vector<1x256xi1> to vector<8x256xi1>
    %20 = vector.broadcast %cst : f32 to vector<8x256xf32>
    %21 = arith.select %19, %17, %20 : vector<8x256xi1>, vector<8x256xf32>
    %c0_2 = arith.constant 0 : index
    %c0_3 = arith.constant 0 : index
    %c0_4 = arith.constant 0 : index
    %22 = vector.load %arg2[%c0_2, %c0_3, %c0_4] : memref<9x16x8xbf16, #tpu.memory_space<vmem>>, vector<1x16x8xbf16>
    %23 = vector.shape_cast %22 : vector<1x16x8xbf16> to vector<16x8xbf16>
    %24 = arith.truncf %21 : vector<8x256xf32> to vector<8x256xbf16>
    %cst_5 = arith.constant dense<0.000000e+00> : vector<16x256xf32>
    %25 = tpu.matmul %23, %24, %cst_5 {dimension_numbers = #tpu.dot_dimension_numbers<[1], [0], [0], [1], [0, 0, 1, 1], [], []>} : vector<16x8xbf16>, vector<8x256xbf16>, vector<16x256xf32> -> vector<16x256xf32>
    %c16_i32_6 = arith.constant 16 : i32
    %26 = tpu.dynamic_rotate %16 by %c16_i32_6 dim 1 : vector<8x256xf32>, i32 -> vector<8x256xf32>
    %cst_7 = arith.constant 0.000000e+00 : f32
    %27 = vector.shape_cast %4 : vector<1x256xi1> to vector<1x256xi1>
    %28 = vector.broadcast %27 : vector<1x256xi1> to vector<8x256xi1>
    %29 = vector.broadcast %cst_7 : f32 to vector<8x256xf32>
    %30 = arith.select %28, %26, %29 : vector<8x256xi1>, vector<8x256xf32>
    %c1 = arith.constant 1 : index
    %c0_8 = arith.constant 0 : index
    %c0_9 = arith.constant 0 : index
    %31 = vector.load %arg2[%c1, %c0_8, %c0_9] : memref<9x16x8xbf16, #tpu.memory_space<vmem>>, vector<1x16x8xbf16>
    %32 = vector.shape_cast %31 : vector<1x16x8xbf16> to vector<16x8xbf16>
    %33 = arith.truncf %30 : vector<8x256xf32> to vector<8x256xbf16>
    %cst_10 = arith.constant dense<0.000000e+00> : vector<16x256xf32>
    %34 = tpu.matmul %32, %33, %cst_10 {dimension_numbers = #tpu.dot_dimension_numbers<[1], [0], [0], [1], [0, 0, 1, 1], [], []>} : vector<16x8xbf16>, vector<8x256xbf16>, vector<16x256xf32> -> vector<16x256xf32>
    %35 = arith.addf %25, %34 : vector<16x256xf32>
    %c15_i32_11 = arith.constant 15 : i32
    %36 = tpu.dynamic_rotate %16 by %c15_i32_11 dim 1 : vector<8x256xf32>, i32 -> vector<8x256xf32>
    %cst_12 = arith.constant 0.000000e+00 : f32
    %37 = vector.shape_cast %12 : vector<1x256xi1> to vector<1x256xi1>
    %38 = vector.broadcast %37 : vector<1x256xi1> to vector<8x256xi1>
    %39 = vector.broadcast %cst_12 : f32 to vector<8x256xf32>
    %40 = arith.select %38, %36, %39 : vector<8x256xi1>, vector<8x256xf32>
    %c2 = arith.constant 2 : index
    %c0_13 = arith.constant 0 : index
    %c0_14 = arith.constant 0 : index
    %41 = vector.load %arg2[%c2, %c0_13, %c0_14] : memref<9x16x8xbf16, #tpu.memory_space<vmem>>, vector<1x16x8xbf16>
    %42 = vector.shape_cast %41 : vector<1x16x8xbf16> to vector<16x8xbf16>
    %43 = arith.truncf %40 : vector<8x256xf32> to vector<8x256xbf16>
    %cst_15 = arith.constant dense<0.000000e+00> : vector<16x256xf32>
    %44 = tpu.matmul %42, %43, %cst_15 {dimension_numbers = #tpu.dot_dimension_numbers<[1], [0], [0], [1], [0, 0, 1, 1], [], []>} : vector<16x8xbf16>, vector<8x256xbf16>, vector<16x256xf32> -> vector<16x256xf32>
    %45 = arith.addf %35, %44 : vector<16x256xf32>
    %c1_i32_16 = arith.constant 1 : i32
    %46 = tpu.dynamic_rotate %16 by %c1_i32_16 dim 1 : vector<8x256xf32>, i32 -> vector<8x256xf32>
    %cst_17 = arith.constant 0.000000e+00 : f32
    %47 = vector.shape_cast %8 : vector<1x256xi1> to vector<1x256xi1>
    %48 = vector.broadcast %47 : vector<1x256xi1> to vector<8x256xi1>
    %49 = vector.broadcast %cst_17 : f32 to vector<8x256xf32>
    %50 = arith.select %48, %46, %49 : vector<8x256xi1>, vector<8x256xf32>
    %c3 = arith.constant 3 : index
    %c0_18 = arith.constant 0 : index
    %c0_19 = arith.constant 0 : index
    %51 = vector.load %arg2[%c3, %c0_18, %c0_19] : memref<9x16x8xbf16, #tpu.memory_space<vmem>>, vector<1x16x8xbf16>
    %52 = vector.shape_cast %51 : vector<1x16x8xbf16> to vector<16x8xbf16>
    %53 = arith.truncf %50 : vector<8x256xf32> to vector<8x256xbf16>
    %cst_20 = arith.constant dense<0.000000e+00> : vector<16x256xf32>
    %54 = tpu.matmul %52, %53, %cst_20 {dimension_numbers = #tpu.dot_dimension_numbers<[1], [0], [0], [1], [0, 0, 1, 1], [], []>} : vector<16x8xbf16>, vector<8x256xbf16>, vector<16x256xf32> -> vector<16x256xf32>
    %55 = arith.addf %45, %54 : vector<16x256xf32>
    %c4 = arith.constant 4 : index
    %c0_21 = arith.constant 0 : index
    %c0_22 = arith.constant 0 : index
    %56 = vector.load %arg2[%c4, %c0_21, %c0_22] : memref<9x16x8xbf16, #tpu.memory_space<vmem>>, vector<1x16x8xbf16>
    %57 = vector.shape_cast %56 : vector<1x16x8xbf16> to vector<16x8xbf16>
    %58 = arith.truncf %16 : vector<8x256xf32> to vector<8x256xbf16>
    %cst_23 = arith.constant dense<0.000000e+00> : vector<16x256xf32>
    %59 = tpu.matmul %57, %58, %cst_23 {dimension_numbers = #tpu.dot_dimension_numbers<[1], [0], [0], [1], [0, 0, 1, 1], [], []>} : vector<16x8xbf16>, vector<8x256xbf16>, vector<16x256xf32> -> vector<16x256xf32>
    %60 = arith.addf %55, %59 : vector<16x256xf32>
    %c255_i32 = arith.constant 255 : i32
    %61 = tpu.dynamic_rotate %16 by %c255_i32 dim 1 : vector<8x256xf32>, i32 -> vector<8x256xf32>
    %cst_24 = arith.constant 0.000000e+00 : f32
    %62 = vector.shape_cast %10 : vector<1x256xi1> to vector<1x256xi1>
    %63 = vector.broadcast %62 : vector<1x256xi1> to vector<8x256xi1>
    %64 = vector.broadcast %cst_24 : f32 to vector<8x256xf32>
    %65 = arith.select %63, %61, %64 : vector<8x256xi1>, vector<8x256xf32>
    %c5 = arith.constant 5 : index
    %c0_25 = arith.constant 0 : index
    %c0_26 = arith.constant 0 : index
    %66 = vector.load %arg2[%c5, %c0_25, %c0_26] : memref<9x16x8xbf16, #tpu.memory_space<vmem>>, vector<1x16x8xbf16>
    %67 = vector.shape_cast %66 : vector<1x16x8xbf16> to vector<16x8xbf16>
    %68 = arith.truncf %65 : vector<8x256xf32> to vector<8x256xbf16>
    %cst_27 = arith.constant dense<0.000000e+00> : vector<16x256xf32>
    %69 = tpu.matmul %67, %68, %cst_27 {dimension_numbers = #tpu.dot_dimension_numbers<[1], [0], [0], [1], [0, 0, 1, 1], [], []>} : vector<16x8xbf16>, vector<8x256xbf16>, vector<16x256xf32> -> vector<16x256xf32>
    %70 = arith.addf %60, %69 : vector<16x256xf32>
    %c241_i32 = arith.constant 241 : i32
    %71 = tpu.dynamic_rotate %16 by %c241_i32 dim 1 : vector<8x256xf32>, i32 -> vector<8x256xf32>
    %cst_28 = arith.constant 0.000000e+00 : f32
    %72 = vector.shape_cast %13 : vector<1x256xi1> to vector<1x256xi1>
    %73 = vector.broadcast %72 : vector<1x256xi1> to vector<8x256xi1>
    %74 = vector.broadcast %cst_28 : f32 to vector<8x256xf32>
    %75 = arith.select %73, %71, %74 : vector<8x256xi1>, vector<8x256xf32>
    %c6 = arith.constant 6 : index
    %c0_29 = arith.constant 0 : index
    %c0_30 = arith.constant 0 : index
    %76 = vector.load %arg2[%c6, %c0_29, %c0_30] : memref<9x16x8xbf16, #tpu.memory_space<vmem>>, vector<1x16x8xbf16>
    %77 = vector.shape_cast %76 : vector<1x16x8xbf16> to vector<16x8xbf16>
    %78 = arith.truncf %75 : vector<8x256xf32> to vector<8x256xbf16>
    %cst_31 = arith.constant dense<0.000000e+00> : vector<16x256xf32>
    %79 = tpu.matmul %77, %78, %cst_31 {dimension_numbers = #tpu.dot_dimension_numbers<[1], [0], [0], [1], [0, 0, 1, 1], [], []>} : vector<16x8xbf16>, vector<8x256xbf16>, vector<16x256xf32> -> vector<16x256xf32>
    %80 = arith.addf %70, %79 : vector<16x256xf32>
    %c240_i32_32 = arith.constant 240 : i32
    %81 = tpu.dynamic_rotate %16 by %c240_i32_32 dim 1 : vector<8x256xf32>, i32 -> vector<8x256xf32>
    %cst_33 = arith.constant 0.000000e+00 : f32
    %82 = vector.shape_cast %6 : vector<1x256xi1> to vector<1x256xi1>
    %83 = vector.broadcast %82 : vector<1x256xi1> to vector<8x256xi1>
    %84 = vector.broadcast %cst_33 : f32 to vector<8x256xf32>
    %85 = arith.select %83, %81, %84 : vector<8x256xi1>, vector<8x256xf32>
    %c7 = arith.constant 7 : index
    %c0_34 = arith.constant 0 : index
    %c0_35 = arith.constant 0 : index
    %86 = vector.load %arg2[%c7, %c0_34, %c0_35] : memref<9x16x8xbf16, #tpu.memory_space<vmem>>, vector<1x16x8xbf16>
    %87 = vector.shape_cast %86 : vector<1x16x8xbf16> to vector<16x8xbf16>
    %88 = arith.truncf %85 : vector<8x256xf32> to vector<8x256xbf16>
    %cst_36 = arith.constant dense<0.000000e+00> : vector<16x256xf32>
    %89 = tpu.matmul %87, %88, %cst_36 {dimension_numbers = #tpu.dot_dimension_numbers<[1], [0], [0], [1], [0, 0, 1, 1], [], []>} : vector<16x8xbf16>, vector<8x256xbf16>, vector<16x256xf32> -> vector<16x256xf32>
    %90 = arith.addf %80, %89 : vector<16x256xf32>
    %c239_i32 = arith.constant 239 : i32
    %91 = tpu.dynamic_rotate %16 by %c239_i32 dim 1 : vector<8x256xf32>, i32 -> vector<8x256xf32>
    %cst_37 = arith.constant 0.000000e+00 : f32
    %92 = vector.shape_cast %14 : vector<1x256xi1> to vector<1x256xi1>
    %93 = vector.broadcast %92 : vector<1x256xi1> to vector<8x256xi1>
    %94 = vector.broadcast %cst_37 : f32 to vector<8x256xf32>
    %95 = arith.select %93, %91, %94 : vector<8x256xi1>, vector<8x256xf32>
    %c8 = arith.constant 8 : index
    %c0_38 = arith.constant 0 : index
    %c0_39 = arith.constant 0 : index
    %96 = vector.load %arg2[%c8, %c0_38, %c0_39] : memref<9x16x8xbf16, #tpu.memory_space<vmem>>, vector<1x16x8xbf16>
    %97 = vector.shape_cast %96 : vector<1x16x8xbf16> to vector<16x8xbf16>
    %98 = arith.truncf %95 : vector<8x256xf32> to vector<8x256xbf16>
    %cst_40 = arith.constant dense<0.000000e+00> : vector<16x256xf32>
    %99 = tpu.matmul %97, %98, %cst_40 {dimension_numbers = #tpu.dot_dimension_numbers<[1], [0], [0], [1], [0, 0, 1, 1], [], []>} : vector<16x8xbf16>, vector<8x256xbf16>, vector<16x256xf32> -> vector<16x256xf32>
    %100 = arith.addf %90, %99 : vector<16x256xf32>
    %c0_41 = arith.constant 0 : index
    %c0_42 = arith.constant 0 : index
    %101 = vector.load %arg3[%c0_41, %c0_42] : memref<16x1xf32, #tpu.memory_space<vmem>>, vector<16x1xf32>
    %102 = vector.broadcast %101 : vector<16x1xf32> to vector<16x256xf32>
    %103 = arith.addf %100, %102 : vector<16x256xf32>
    %cst_43 = arith.constant 0.000000e+00 : f32
    %104 = vector.broadcast %cst_43 : f32 to vector<16x256xf32>
    %105 = arith.maximumf %103, %104 : vector<16x256xf32>
    %c17_i32_44 = arith.constant 17 : i32
    %106 = tpu.dynamic_rotate %105 by %c17_i32_44 dim 1 : vector<16x256xf32>, i32 -> vector<16x256xf32>
    %cst_45 = arith.constant 0.000000e+00 : f32
    %107 = vector.shape_cast %11 : vector<1x256xi1> to vector<1x256xi1>
    %108 = vector.broadcast %107 : vector<1x256xi1> to vector<16x256xi1>
    %109 = vector.broadcast %cst_45 : f32 to vector<16x256xf32>
    %110 = arith.select %108, %106, %109 : vector<16x256xi1>, vector<16x256xf32>
    %c0_46 = arith.constant 0 : index
    %c0_47 = arith.constant 0 : index
    %c0_48 = arith.constant 0 : index
    %111 = vector.load %arg4[%c0_46, %c0_47, %c0_48] : memref<9x32x16xbf16, #tpu.memory_space<vmem>>, vector<1x32x16xbf16>
    %112 = vector.shape_cast %111 : vector<1x32x16xbf16> to vector<32x16xbf16>
    %113 = arith.truncf %110 : vector<16x256xf32> to vector<16x256xbf16>
    %cst_49 = arith.constant dense<0.000000e+00> : vector<32x256xf32>
    %114 = tpu.matmul %112, %113, %cst_49 {dimension_numbers = #tpu.dot_dimension_numbers<[1], [0], [0], [1], [0, 0, 1, 1], [], []>} : vector<32x16xbf16>, vector<16x256xbf16>, vector<32x256xf32> -> vector<32x256xf32>
    %c16_i32_50 = arith.constant 16 : i32
    %115 = tpu.dynamic_rotate %105 by %c16_i32_50 dim 1 : vector<16x256xf32>, i32 -> vector<16x256xf32>
    %cst_51 = arith.constant 0.000000e+00 : f32
    %116 = vector.shape_cast %4 : vector<1x256xi1> to vector<1x256xi1>
    %117 = vector.broadcast %116 : vector<1x256xi1> to vector<16x256xi1>
    %118 = vector.broadcast %cst_51 : f32 to vector<16x256xf32>
    %119 = arith.select %117, %115, %118 : vector<16x256xi1>, vector<16x256xf32>
    %c1_52 = arith.constant 1 : index
    %c0_53 = arith.constant 0 : index
    %c0_54 = arith.constant 0 : index
    %120 = vector.load %arg4[%c1_52, %c0_53, %c0_54] : memref<9x32x16xbf16, #tpu.memory_space<vmem>>, vector<1x32x16xbf16>
    %121 = vector.shape_cast %120 : vector<1x32x16xbf16> to vector<32x16xbf16>
    %122 = arith.truncf %119 : vector<16x256xf32> to vector<16x256xbf16>
    %cst_55 = arith.constant dense<0.000000e+00> : vector<32x256xf32>
    %123 = tpu.matmul %121, %122, %cst_55 {dimension_numbers = #tpu.dot_dimension_numbers<[1], [0], [0], [1], [0, 0, 1, 1], [], []>} : vector<32x16xbf16>, vector<16x256xbf16>, vector<32x256xf32> -> vector<32x256xf32>
    %124 = arith.addf %114, %123 : vector<32x256xf32>
    %c15_i32_56 = arith.constant 15 : i32
    %125 = tpu.dynamic_rotate %105 by %c15_i32_56 dim 1 : vector<16x256xf32>, i32 -> vector<16x256xf32>
    %cst_57 = arith.constant 0.000000e+00 : f32
    %126 = vector.shape_cast %12 : vector<1x256xi1> to vector<1x256xi1>
    %127 = vector.broadcast %126 : vector<1x256xi1> to vector<16x256xi1>
    %128 = vector.broadcast %cst_57 : f32 to vector<16x256xf32>
    %129 = arith.select %127, %125, %128 : vector<16x256xi1>, vector<16x256xf32>
    %c2_58 = arith.constant 2 : index
    %c0_59 = arith.constant 0 : index
    %c0_60 = arith.constant 0 : index
    %130 = vector.load %arg4[%c2_58, %c0_59, %c0_60] : memref<9x32x16xbf16, #tpu.memory_space<vmem>>, vector<1x32x16xbf16>
    %131 = vector.shape_cast %130 : vector<1x32x16xbf16> to vector<32x16xbf16>
    %132 = arith.truncf %129 : vector<16x256xf32> to vector<16x256xbf16>
    %cst_61 = arith.constant dense<0.000000e+00> : vector<32x256xf32>
    %133 = tpu.matmul %131, %132, %cst_61 {dimension_numbers = #tpu.dot_dimension_numbers<[1], [0], [0], [1], [0, 0, 1, 1], [], []>} : vector<32x16xbf16>, vector<16x256xbf16>, vector<32x256xf32> -> vector<32x256xf32>
    %134 = arith.addf %124, %133 : vector<32x256xf32>
    %c1_i32_62 = arith.constant 1 : i32
    %135 = tpu.dynamic_rotate %105 by %c1_i32_62 dim 1 : vector<16x256xf32>, i32 -> vector<16x256xf32>
    %cst_63 = arith.constant 0.000000e+00 : f32
    %136 = vector.shape_cast %8 : vector<1x256xi1> to vector<1x256xi1>
    %137 = vector.broadcast %136 : vector<1x256xi1> to vector<16x256xi1>
    %138 = vector.broadcast %cst_63 : f32 to vector<16x256xf32>
    %139 = arith.select %137, %135, %138 : vector<16x256xi1>, vector<16x256xf32>
    %c3_64 = arith.constant 3 : index
    %c0_65 = arith.constant 0 : index
    %c0_66 = arith.constant 0 : index
    %140 = vector.load %arg4[%c3_64, %c0_65, %c0_66] : memref<9x32x16xbf16, #tpu.memory_space<vmem>>, vector<1x32x16xbf16>
    %141 = vector.shape_cast %140 : vector<1x32x16xbf16> to vector<32x16xbf16>
    %142 = arith.truncf %139 : vector<16x256xf32> to vector<16x256xbf16>
    %cst_67 = arith.constant dense<0.000000e+00> : vector<32x256xf32>
    %143 = tpu.matmul %141, %142, %cst_67 {dimension_numbers = #tpu.dot_dimension_numbers<[1], [0], [0], [1], [0, 0, 1, 1], [], []>} : vector<32x16xbf16>, vector<16x256xbf16>, vector<32x256xf32> -> vector<32x256xf32>
    %144 = arith.addf %134, %143 : vector<32x256xf32>
    %c4_68 = arith.constant 4 : index
    %c0_69 = arith.constant 0 : index
    %c0_70 = arith.constant 0 : index
    %145 = vector.load %arg4[%c4_68, %c0_69, %c0_70] : memref<9x32x16xbf16, #tpu.memory_space<vmem>>, vector<1x32x16xbf16>
    %146 = vector.shape_cast %145 : vector<1x32x16xbf16> to vector<32x16xbf16>
    %147 = arith.truncf %105 : vector<16x256xf32> to vector<16x256xbf16>
    %cst_71 = arith.constant dense<0.000000e+00> : vector<32x256xf32>
    %148 = tpu.matmul %146, %147, %cst_71 {dimension_numbers = #tpu.dot_dimension_numbers<[1], [0], [0], [1], [0, 0, 1, 1], [], []>} : vector<32x16xbf16>, vector<16x256xbf16>, vector<32x256xf32> -> vector<32x256xf32>
    %149 = arith.addf %144, %148 : vector<32x256xf32>
    %c255_i32_72 = arith.constant 255 : i32
    %150 = tpu.dynamic_rotate %105 by %c255_i32_72 dim 1 : vector<16x256xf32>, i32 -> vector<16x256xf32>
    %cst_73 = arith.constant 0.000000e+00 : f32
    %151 = vector.shape_cast %10 : vector<1x256xi1> to vector<1x256xi1>
    %152 = vector.broadcast %151 : vector<1x256xi1> to vector<16x256xi1>
    %153 = vector.broadcast %cst_73 : f32 to vector<16x256xf32>
    %154 = arith.select %152, %150, %153 : vector<16x256xi1>, vector<16x256xf32>
    %c5_74 = arith.constant 5 : index
    %c0_75 = arith.constant 0 : index
    %c0_76 = arith.constant 0 : index
    %155 = vector.load %arg4[%c5_74, %c0_75, %c0_76] : memref<9x32x16xbf16, #tpu.memory_space<vmem>>, vector<1x32x16xbf16>
    %156 = vector.shape_cast %155 : vector<1x32x16xbf16> to vector<32x16xbf16>
    %157 = arith.truncf %154 : vector<16x256xf32> to vector<16x256xbf16>
    %cst_77 = arith.constant dense<0.000000e+00> : vector<32x256xf32>
    %158 = tpu.matmul %156, %157, %cst_77 {dimension_numbers = #tpu.dot_dimension_numbers<[1], [0], [0], [1], [0, 0, 1, 1], [], []>} : vector<32x16xbf16>, vector<16x256xbf16>, vector<32x256xf32> -> vector<32x256xf32>
    %159 = arith.addf %149, %158 : vector<32x256xf32>
    %c241_i32_78 = arith.constant 241 : i32
    %160 = tpu.dynamic_rotate %105 by %c241_i32_78 dim 1 : vector<16x256xf32>, i32 -> vector<16x256xf32>
    %cst_79 = arith.constant 0.000000e+00 : f32
    %161 = vector.shape_cast %13 : vector<1x256xi1> to vector<1x256xi1>
    %162 = vector.broadcast %161 : vector<1x256xi1> to vector<16x256xi1>
    %163 = vector.broadcast %cst_79 : f32 to vector<16x256xf32>
    %164 = arith.select %162, %160, %163 : vector<16x256xi1>, vector<16x256xf32>
    %c6_80 = arith.constant 6 : index
    %c0_81 = arith.constant 0 : index
    %c0_82 = arith.constant 0 : index
    %165 = vector.load %arg4[%c6_80, %c0_81, %c0_82] : memref<9x32x16xbf16, #tpu.memory_space<vmem>>, vector<1x32x16xbf16>
    %166 = vector.shape_cast %165 : vector<1x32x16xbf16> to vector<32x16xbf16>
    %167 = arith.truncf %164 : vector<16x256xf32> to vector<16x256xbf16>
    %cst_83 = arith.constant dense<0.000000e+00> : vector<32x256xf32>
    %168 = tpu.matmul %166, %167, %cst_83 {dimension_numbers = #tpu.dot_dimension_numbers<[1], [0], [0], [1], [0, 0, 1, 1], [], []>} : vector<32x16xbf16>, vector<16x256xbf16>, vector<32x256xf32> -> vector<32x256xf32>
    %169 = arith.addf %159, %168 : vector<32x256xf32>
    %c240_i32_84 = arith.constant 240 : i32
    %170 = tpu.dynamic_rotate %105 by %c240_i32_84 dim 1 : vector<16x256xf32>, i32 -> vector<16x256xf32>
    %cst_85 = arith.constant 0.000000e+00 : f32
    %171 = vector.shape_cast %6 : vector<1x256xi1> to vector<1x256xi1>
    %172 = vector.broadcast %171 : vector<1x256xi1> to vector<16x256xi1>
    %173 = vector.broadcast %cst_85 : f32 to vector<16x256xf32>
    %174 = arith.select %172, %170, %173 : vector<16x256xi1>, vector<16x256xf32>
    %c7_86 = arith.constant 7 : index
    %c0_87 = arith.constant 0 : index
    %c0_88 = arith.constant 0 : index
    %175 = vector.load %arg4[%c7_86, %c0_87, %c0_88] : memref<9x32x16xbf16, #tpu.memory_space<vmem>>, vector<1x32x16xbf16>
    %176 = vector.shape_cast %175 : vector<1x32x16xbf16> to vector<32x16xbf16>
    %177 = arith.truncf %174 : vector<16x256xf32> to vector<16x256xbf16>
    %cst_89 = arith.constant dense<0.000000e+00> : vector<32x256xf32>
    %178 = tpu.matmul %176, %177, %cst_89 {dimension_numbers = #tpu.dot_dimension_numbers<[1], [0], [0], [1], [0, 0, 1, 1], [], []>} : vector<32x16xbf16>, vector<16x256xbf16>, vector<32x256xf32> -> vector<32x256xf32>
    %179 = arith.addf %169, %178 : vector<32x256xf32>
    %c239_i32_90 = arith.constant 239 : i32
    %180 = tpu.dynamic_rotate %105 by %c239_i32_90 dim 1 : vector<16x256xf32>, i32 -> vector<16x256xf32>
    %cst_91 = arith.constant 0.000000e+00 : f32
    %181 = vector.shape_cast %14 : vector<1x256xi1> to vector<1x256xi1>
    %182 = vector.broadcast %181 : vector<1x256xi1> to vector<16x256xi1>
    %183 = vector.broadcast %cst_91 : f32 to vector<16x256xf32>
    %184 = arith.select %182, %180, %183 : vector<16x256xi1>, vector<16x256xf32>
    %c8_92 = arith.constant 8 : index
    %c0_93 = arith.constant 0 : index
    %c0_94 = arith.constant 0 : index
    %185 = vector.load %arg4[%c8_92, %c0_93, %c0_94] : memref<9x32x16xbf16, #tpu.memory_space<vmem>>, vector<1x32x16xbf16>
    %186 = vector.shape_cast %185 : vector<1x32x16xbf16> to vector<32x16xbf16>
    %187 = arith.truncf %184 : vector<16x256xf32> to vector<16x256xbf16>
    %cst_95 = arith.constant dense<0.000000e+00> : vector<32x256xf32>
    %188 = tpu.matmul %186, %187, %cst_95 {dimension_numbers = #tpu.dot_dimension_numbers<[1], [0], [0], [1], [0, 0, 1, 1], [], []>} : vector<32x16xbf16>, vector<16x256xbf16>, vector<32x256xf32> -> vector<32x256xf32>
    %189 = arith.addf %179, %188 : vector<32x256xf32>
    %c0_96 = arith.constant 0 : index
    %c0_97 = arith.constant 0 : index
    %190 = vector.load %arg5[%c0_96, %c0_97] : memref<32x1xf32, #tpu.memory_space<vmem>>, vector<32x1xf32>
    %191 = vector.broadcast %190 : vector<32x1xf32> to vector<32x256xf32>
    %192 = arith.addf %189, %191 : vector<32x256xf32>
    %cst_98 = arith.constant 0.000000e+00 : f32
    %193 = vector.broadcast %cst_98 : f32 to vector<32x256xf32>
    %194 = arith.maximumf %192, %193 : vector<32x256xf32>
    %c17_i32_99 = arith.constant 17 : i32
    %195 = tpu.dynamic_rotate %194 by %c17_i32_99 dim 1 : vector<32x256xf32>, i32 -> vector<32x256xf32>
    %cst_100 = arith.constant 0.000000e+00 : f32
    %196 = vector.shape_cast %11 : vector<1x256xi1> to vector<1x256xi1>
    %197 = vector.broadcast %196 : vector<1x256xi1> to vector<32x256xi1>
    %198 = vector.broadcast %cst_100 : f32 to vector<32x256xf32>
    %199 = arith.select %197, %195, %198 : vector<32x256xi1>, vector<32x256xf32>
    %c0_101 = arith.constant 0 : index
    %c0_102 = arith.constant 0 : index
    %c0_103 = arith.constant 0 : index
    %200 = vector.load %arg6[%c0_101, %c0_102, %c0_103] : memref<9x64x32xbf16, #tpu.memory_space<vmem>>, vector<1x64x32xbf16>
    %201 = vector.shape_cast %200 : vector<1x64x32xbf16> to vector<64x32xbf16>
    %202 = arith.truncf %199 : vector<32x256xf32> to vector<32x256xbf16>
    %cst_104 = arith.constant dense<0.000000e+00> : vector<64x256xf32>
    %203 = tpu.matmul %201, %202, %cst_104 {dimension_numbers = #tpu.dot_dimension_numbers<[1], [0], [0], [1], [0, 0, 1, 1], [], []>} : vector<64x32xbf16>, vector<32x256xbf16>, vector<64x256xf32> -> vector<64x256xf32>
    %c16_i32_105 = arith.constant 16 : i32
    %204 = tpu.dynamic_rotate %194 by %c16_i32_105 dim 1 : vector<32x256xf32>, i32 -> vector<32x256xf32>
    %cst_106 = arith.constant 0.000000e+00 : f32
    %205 = vector.shape_cast %4 : vector<1x256xi1> to vector<1x256xi1>
    %206 = vector.broadcast %205 : vector<1x256xi1> to vector<32x256xi1>
    %207 = vector.broadcast %cst_106 : f32 to vector<32x256xf32>
    %208 = arith.select %206, %204, %207 : vector<32x256xi1>, vector<32x256xf32>
    %c1_107 = arith.constant 1 : index
    %c0_108 = arith.constant 0 : index
    %c0_109 = arith.constant 0 : index
    %209 = vector.load %arg6[%c1_107, %c0_108, %c0_109] : memref<9x64x32xbf16, #tpu.memory_space<vmem>>, vector<1x64x32xbf16>
    %210 = vector.shape_cast %209 : vector<1x64x32xbf16> to vector<64x32xbf16>
    %211 = arith.truncf %208 : vector<32x256xf32> to vector<32x256xbf16>
    %cst_110 = arith.constant dense<0.000000e+00> : vector<64x256xf32>
    %212 = tpu.matmul %210, %211, %cst_110 {dimension_numbers = #tpu.dot_dimension_numbers<[1], [0], [0], [1], [0, 0, 1, 1], [], []>} : vector<64x32xbf16>, vector<32x256xbf16>, vector<64x256xf32> -> vector<64x256xf32>
    %213 = arith.addf %203, %212 : vector<64x256xf32>
    %c15_i32_111 = arith.constant 15 : i32
    %214 = tpu.dynamic_rotate %194 by %c15_i32_111 dim 1 : vector<32x256xf32>, i32 -> vector<32x256xf32>
    %cst_112 = arith.constant 0.000000e+00 : f32
    %215 = vector.shape_cast %12 : vector<1x256xi1> to vector<1x256xi1>
    %216 = vector.broadcast %215 : vector<1x256xi1> to vector<32x256xi1>
    %217 = vector.broadcast %cst_112 : f32 to vector<32x256xf32>
    %218 = arith.select %216, %214, %217 : vector<32x256xi1>, vector<32x256xf32>
    %c2_113 = arith.constant 2 : index
    %c0_114 = arith.constant 0 : index
    %c0_115 = arith.constant 0 : index
    %219 = vector.load %arg6[%c2_113, %c0_114, %c0_115] : memref<9x64x32xbf16, #tpu.memory_space<vmem>>, vector<1x64x32xbf16>
    %220 = vector.shape_cast %219 : vector<1x64x32xbf16> to vector<64x32xbf16>
    %221 = arith.truncf %218 : vector<32x256xf32> to vector<32x256xbf16>
    %cst_116 = arith.constant dense<0.000000e+00> : vector<64x256xf32>
    %222 = tpu.matmul %220, %221, %cst_116 {dimension_numbers = #tpu.dot_dimension_numbers<[1], [0], [0], [1], [0, 0, 1, 1], [], []>} : vector<64x32xbf16>, vector<32x256xbf16>, vector<64x256xf32> -> vector<64x256xf32>
    %223 = arith.addf %213, %222 : vector<64x256xf32>
    %c1_i32_117 = arith.constant 1 : i32
    %224 = tpu.dynamic_rotate %194 by %c1_i32_117 dim 1 : vector<32x256xf32>, i32 -> vector<32x256xf32>
    %cst_118 = arith.constant 0.000000e+00 : f32
    %225 = vector.shape_cast %8 : vector<1x256xi1> to vector<1x256xi1>
    %226 = vector.broadcast %225 : vector<1x256xi1> to vector<32x256xi1>
    %227 = vector.broadcast %cst_118 : f32 to vector<32x256xf32>
    %228 = arith.select %226, %224, %227 : vector<32x256xi1>, vector<32x256xf32>
    %c3_119 = arith.constant 3 : index
    %c0_120 = arith.constant 0 : index
    %c0_121 = arith.constant 0 : index
    %229 = vector.load %arg6[%c3_119, %c0_120, %c0_121] : memref<9x64x32xbf16, #tpu.memory_space<vmem>>, vector<1x64x32xbf16>
    %230 = vector.shape_cast %229 : vector<1x64x32xbf16> to vector<64x32xbf16>
    %231 = arith.truncf %228 : vector<32x256xf32> to vector<32x256xbf16>
    %cst_122 = arith.constant dense<0.000000e+00> : vector<64x256xf32>
    %232 = tpu.matmul %230, %231, %cst_122 {dimension_numbers = #tpu.dot_dimension_numbers<[1], [0], [0], [1], [0, 0, 1, 1], [], []>} : vector<64x32xbf16>, vector<32x256xbf16>, vector<64x256xf32> -> vector<64x256xf32>
    %233 = arith.addf %223, %232 : vector<64x256xf32>
    %c4_123 = arith.constant 4 : index
    %c0_124 = arith.constant 0 : index
    %c0_125 = arith.constant 0 : index
    %234 = vector.load %arg6[%c4_123, %c0_124, %c0_125] : memref<9x64x32xbf16, #tpu.memory_space<vmem>>, vector<1x64x32xbf16>
    %235 = vector.shape_cast %234 : vector<1x64x32xbf16> to vector<64x32xbf16>
    %236 = arith.truncf %194 : vector<32x256xf32> to vector<32x256xbf16>
    %cst_126 = arith.constant dense<0.000000e+00> : vector<64x256xf32>
    %237 = tpu.matmul %235, %236, %cst_126 {dimension_numbers = #tpu.dot_dimension_numbers<[1], [0], [0], [1], [0, 0, 1, 1], [], []>} : vector<64x32xbf16>, vector<32x256xbf16>, vector<64x256xf32> -> vector<64x256xf32>
    %238 = arith.addf %233, %237 : vector<64x256xf32>
    %c255_i32_127 = arith.constant 255 : i32
    %239 = tpu.dynamic_rotate %194 by %c255_i32_127 dim 1 : vector<32x256xf32>, i32 -> vector<32x256xf32>
    %cst_128 = arith.constant 0.000000e+00 : f32
    %240 = vector.shape_cast %10 : vector<1x256xi1> to vector<1x256xi1>
    %241 = vector.broadcast %240 : vector<1x256xi1> to vector<32x256xi1>
    %242 = vector.broadcast %cst_128 : f32 to vector<32x256xf32>
    %243 = arith.select %241, %239, %242 : vector<32x256xi1>, vector<32x256xf32>
    %c5_129 = arith.constant 5 : index
    %c0_130 = arith.constant 0 : index
    %c0_131 = arith.constant 0 : index
    %244 = vector.load %arg6[%c5_129, %c0_130, %c0_131] : memref<9x64x32xbf16, #tpu.memory_space<vmem>>, vector<1x64x32xbf16>
    %245 = vector.shape_cast %244 : vector<1x64x32xbf16> to vector<64x32xbf16>
    %246 = arith.truncf %243 : vector<32x256xf32> to vector<32x256xbf16>
    %cst_132 = arith.constant dense<0.000000e+00> : vector<64x256xf32>
    %247 = tpu.matmul %245, %246, %cst_132 {dimension_numbers = #tpu.dot_dimension_numbers<[1], [0], [0], [1], [0, 0, 1, 1], [], []>} : vector<64x32xbf16>, vector<32x256xbf16>, vector<64x256xf32> -> vector<64x256xf32>
    %248 = arith.addf %238, %247 : vector<64x256xf32>
    %c241_i32_133 = arith.constant 241 : i32
    %249 = tpu.dynamic_rotate %194 by %c241_i32_133 dim 1 : vector<32x256xf32>, i32 -> vector<32x256xf32>
    %cst_134 = arith.constant 0.000000e+00 : f32
    %250 = vector.shape_cast %13 : vector<1x256xi1> to vector<1x256xi1>
    %251 = vector.broadcast %250 : vector<1x256xi1> to vector<32x256xi1>
    %252 = vector.broadcast %cst_134 : f32 to vector<32x256xf32>
    %253 = arith.select %251, %249, %252 : vector<32x256xi1>, vector<32x256xf32>
    %c6_135 = arith.constant 6 : index
    %c0_136 = arith.constant 0 : index
    %c0_137 = arith.constant 0 : index
    %254 = vector.load %arg6[%c6_135, %c0_136, %c0_137] : memref<9x64x32xbf16, #tpu.memory_space<vmem>>, vector<1x64x32xbf16>
    %255 = vector.shape_cast %254 : vector<1x64x32xbf16> to vector<64x32xbf16>
    %256 = arith.truncf %253 : vector<32x256xf32> to vector<32x256xbf16>
    %cst_138 = arith.constant dense<0.000000e+00> : vector<64x256xf32>
    %257 = tpu.matmul %255, %256, %cst_138 {dimension_numbers = #tpu.dot_dimension_numbers<[1], [0], [0], [1], [0, 0, 1, 1], [], []>} : vector<64x32xbf16>, vector<32x256xbf16>, vector<64x256xf32> -> vector<64x256xf32>
    %258 = arith.addf %248, %257 : vector<64x256xf32>
    %c240_i32_139 = arith.constant 240 : i32
    %259 = tpu.dynamic_rotate %194 by %c240_i32_139 dim 1 : vector<32x256xf32>, i32 -> vector<32x256xf32>
    %cst_140 = arith.constant 0.000000e+00 : f32
    %260 = vector.shape_cast %6 : vector<1x256xi1> to vector<1x256xi1>
    %261 = vector.broadcast %260 : vector<1x256xi1> to vector<32x256xi1>
    %262 = vector.broadcast %cst_140 : f32 to vector<32x256xf32>
    %263 = arith.select %261, %259, %262 : vector<32x256xi1>, vector<32x256xf32>
    %c7_141 = arith.constant 7 : index
    %c0_142 = arith.constant 0 : index
    %c0_143 = arith.constant 0 : index
    %264 = vector.load %arg6[%c7_141, %c0_142, %c0_143] : memref<9x64x32xbf16, #tpu.memory_space<vmem>>, vector<1x64x32xbf16>
    %265 = vector.shape_cast %264 : vector<1x64x32xbf16> to vector<64x32xbf16>
    %266 = arith.truncf %263 : vector<32x256xf32> to vector<32x256xbf16>
    %cst_144 = arith.constant dense<0.000000e+00> : vector<64x256xf32>
    %267 = tpu.matmul %265, %266, %cst_144 {dimension_numbers = #tpu.dot_dimension_numbers<[1], [0], [0], [1], [0, 0, 1, 1], [], []>} : vector<64x32xbf16>, vector<32x256xbf16>, vector<64x256xf32> -> vector<64x256xf32>
    %268 = arith.addf %258, %267 : vector<64x256xf32>
    %c239_i32_145 = arith.constant 239 : i32
    %269 = tpu.dynamic_rotate %194 by %c239_i32_145 dim 1 : vector<32x256xf32>, i32 -> vector<32x256xf32>
    %cst_146 = arith.constant 0.000000e+00 : f32
    %270 = vector.shape_cast %14 : vector<1x256xi1> to vector<1x256xi1>
    %271 = vector.broadcast %270 : vector<1x256xi1> to vector<32x256xi1>
    %272 = vector.broadcast %cst_146 : f32 to vector<32x256xf32>
    %273 = arith.select %271, %269, %272 : vector<32x256xi1>, vector<32x256xf32>
    %c8_147 = arith.constant 8 : index
    %c0_148 = arith.constant 0 : index
    %c0_149 = arith.constant 0 : index
    %274 = vector.load %arg6[%c8_147, %c0_148, %c0_149] : memref<9x64x32xbf16, #tpu.memory_space<vmem>>, vector<1x64x32xbf16>
    %275 = vector.shape_cast %274 : vector<1x64x32xbf16> to vector<64x32xbf16>
    %276 = arith.truncf %273 : vector<32x256xf32> to vector<32x256xbf16>
    %cst_150 = arith.constant dense<0.000000e+00> : vector<64x256xf32>
    %277 = tpu.matmul %275, %276, %cst_150 {dimension_numbers = #tpu.dot_dimension_numbers<[1], [0], [0], [1], [0, 0, 1, 1], [], []>} : vector<64x32xbf16>, vector<32x256xbf16>, vector<64x256xf32> -> vector<64x256xf32>
    %278 = arith.addf %268, %277 : vector<64x256xf32>
    %c0_151 = arith.constant 0 : index
    %c0_152 = arith.constant 0 : index
    %279 = vector.load %arg7[%c0_151, %c0_152] : memref<64x1xf32, #tpu.memory_space<vmem>>, vector<64x1xf32>
    %280 = vector.broadcast %279 : vector<64x1xf32> to vector<64x256xf32>
    %281 = arith.addf %278, %280 : vector<64x256xf32>
    %cst_153 = arith.constant 0.000000e+00 : f32
    %282 = vector.broadcast %cst_153 : f32 to vector<64x256xf32>
    %283 = arith.maximumf %281, %282 : vector<64x256xf32>
    %c0_154 = arith.constant 0 : index
    %c0_155 = arith.constant 0 : index
    %c0_156 = arith.constant 0 : index
    %284 = vector.load %arg8[%c0_154, %c0_155, %c0_156] : memref<1x64x256xf32, #tpu.memory_space<vmem>>, vector<1x64x256xf32>
    %285 = vector.shape_cast %284 : vector<1x64x256xf32> to vector<64x256xf32>
    %286 = vector.shape_cast %283 : vector<64x256xf32> to vector<1x64x256xf32>
    tpu.vector_store %arg8[%c0_154, %c0_155, %c0_156], %286 {strides = array<i32>} : memref<1x64x256xf32, #tpu.memory_space<vmem>>, vector<1x64x256xf32>,
    return
  }
  func.func @transform_0(%arg0: i32) -> (i32, i32, i32) {
    %c0_i32 = arith.constant 0 : i32
    %c0_i32_0 = arith.constant 0 : i32
    %c0_i32_1 = arith.constant 0 : i32
    return %arg0, %c0_i32, %c0_i32_0 : i32, i32, i32
  }
  func.func @transform_1(%arg0: i32) -> (i32, i32, i32) {
    %c0_i32 = arith.constant 0 : i32
    %c0_i32_0 = arith.constant 0 : i32
    %c0_i32_1 = arith.constant 0 : i32
    %c0_i32_2 = arith.constant 0 : i32
    return %c0_i32, %c0_i32_0, %c0_i32_1 : i32, i32, i32
  }
  func.func @transform_2(%arg0: i32) -> (i32, i32) {
    %c0_i32 = arith.constant 0 : i32
    %c0_i32_0 = arith.constant 0 : i32
    %c0_i32_1 = arith.constant 0 : i32
    return %c0_i32, %c0_i32_0 : i32, i32
  }
  func.func @transform_3(%arg0: i32) -> (i32, i32, i32) {
    %c0_i32 = arith.constant 0 : i32
    %c0_i32_0 = arith.constant 0 : i32
    %c0_i32_1 = arith.constant 0 : i32
    %c0_i32_2 = arith.constant 0 : i32
    return %c0_i32, %c0_i32_0, %c0_i32_1 : i32, i32, i32
  }
  func.func @transform_4(%arg0: i32) -> (i32, i32) {
    %c0_i32 = arith.constant 0 : i32
    %c0_i32_0 = arith.constant 0 : i32
    %c0_i32_1 = arith.constant 0 : i32
    return %c0_i32, %c0_i32_0 : i32, i32
  }
  func.func @transform_5(%arg0: i32) -> (i32, i32, i32) {
    %c0_i32 = arith.constant 0 : i32
    %c0_i32_0 = arith.constant 0 : i32
    %c0_i32_1 = arith.constant 0 : i32
    %c0_i32_2 = arith.constant 0 : i32
    return %c0_i32, %c0_i32_0, %c0_i32_1 : i32, i32, i32
  }
  func.func @transform_6(%arg0: i32) -> (i32, i32) {
    %c0_i32 = arith.constant 0 : i32
    %c0_i32_0 = arith.constant 0 : i32
    %c0_i32_1 = arith.constant 0 : i32
    return %c0_i32, %c0_i32_0 : i32, i32
  }
  func.func @transform_7(%arg0: i32) -> (i32, i32, i32) {
    %c0_i32 = arith.constant 0 : i32
    %c0_i32_0 = arith.constant 0 : i32
    %c0_i32_1 = arith.constant 0 : i32
    return %arg0, %c0_i32, %c0_i32_0 : i32, i32, i32
  }
}

</mosaic_0001>

<llo_original>
// kernel: tpu_custom_call.1
$region0: #{tpu_custom_call.1}
  #allocation0 [shape = 'u32[]', space=smem, size = 0x4, offset = 0x4, fixed_abs, tag = 'smem constant byte address 0x4 - core index']
  #allocation1 [shape = 'u32[72,128]{1,0:T(1,128)}', space=vmem, size = 0x9000, scoped, tag = 'internal scratch']
  %s0 = inlined_call_operand.vmem [shape: f32[2,8,256], index: 0, kind: input, shape index: {}]
  %s1 = inlined_call_operand.vmem [shape: bf16[9,16,8], index: 1, kind: input, shape index: {}]
  %s2 = inlined_call_operand.vmem [shape: f32[16,1], index: 2, kind: input, shape index: {}]
  %s3 = inlined_call_operand.vmem [shape: bf16[9,32,16], index: 3, kind: input, shape index: {}]
  %s4 = inlined_call_operand.vmem [shape: f32[32,1], index: 4, kind: input, shape index: {}]
  %s5 = inlined_call_operand.vmem [shape: bf16[9,64,32], index: 5, kind: input, shape index: {}]
  %s6 = inlined_call_operand.vmem [shape: f32[64,1], index: 6, kind: input, shape index: {}]
  %s7 = inlined_call_operand.hbm [shape: f32[2,64,256], index: 7, kind: output, shape index: {}]
  %s8 = sld [smem:[#allocation0]]
  $region61: #{tpu_custom_call.1} parent=0
    _
  %s10 = ssub.s32 1, %s8
  %s11 = scalar_select 0, %s10, %s8
  $region1: #{tpu_custom_call.1} parent=0
    #allocation2 [shape = 'u8[131072]{0}', space=vmem, size = 0x20000, scoped, tag = 'output window, operand 0']
    #allocation3 [shape = 's32[2]{0}', space=sflag, size = 0x8, scoped, tag = 'scoped memory for tpu_custom_call.1']
    %12 = vsyncpa [#allocation3], 0
    %s13 = scalar_lea.sflag [#allocation3], 1
    %14 = vsyncpa %s13, 0
    loop: start=0, step=1, limit=4
    $region2: #{tpu_custom_call.1} parent=1 // loop_pre_header
      _
    $region3: #{tpu_custom_call.1} parent=1 // loop_header
      %s16 = sphi 0, %s20
      %p17 = scmp.ge.s32.totalorder %s16, 4
      %s26 = sphi 0, %s28
      %s29 = sphi 0, %s26
      %s30 = sphi 0, %s29
      %s46 = sphi 0, %s30
      %s50 = sphi 0, %s50
      %s52 = sphi 0, %s50
      %s53 = sphi 0, %s52
      %s67 = sphi 0, %s53
      %s71 = sphi 0, %s71
      %s73 = sphi 0, %s71
      %s74 = sphi 0, %s73
      %s88 = sphi 0, %s74
      %s92 = sphi 0, %s92
      %s94 = sphi 0, %s92
      %s95 = sphi 0, %s94
      %s109 = sphi 0, %s95
      %s113 = sphi 0, %s113
      %s115 = sphi 0, %s113
      %s116 = sphi 0, %s115
      %s130 = sphi 0, %s116
      %s134 = sphi 0, %s134
      %s136 = sphi 0, %s134
      %s137 = sphi 0, %s136
      %s151 = sphi 0, %s137
      %s155 = sphi 0, %s155
      %s157 = sphi 0, %s155
      %s158 = sphi 0, %s157
      %s172 = sphi 0, %s158
      %s178 = sphi 0, %s180
      %s181 = sphi 0, %s178
      %s182 = sphi 0, %s181
      %s198 = sphi 0, %s182
    $region4: #{tpu_custom_call.1} parent=1 // loop_header_branch
      %19 = sbr.rel (%p17) target = $region8
    $region5: #{tpu_custom_call.1} parent=1 // loop_body
      %s21 = ssub.s32 %s16, 1
      %s22 = ssub.s32 %s16, 2
      %s23 = sadd.s32 %s16, 1
      %s24 = ssub.s32 %s16, %s23
      %p25 = scmp.eq.s32.totalorder %s24, 0
      %s27 = sadd.s32 %s26, 1
      %s28 = scalar_select %p25, %s26, %s27
      %p31 = pneg %p25
      %p32 = scmp.eq.s32.totalorder %s16, 1
      %p33 = por %p31, %p32
      %p34 = scmp.ne.s32.totalorder %s26, %s29
      %p35 = scmp.eq.s32.totalorder %s16, 0
      %p36 = por %p34, %p35
      %p37 = scmp.ne.s32.totalorder %s26, %s29
      %p38 = scmp.eq.s32.totalorder %s21, 1
      %p39 = por %p37, %p38
      %p40 = scmp.ne.s32.totalorder %s29, %s30
      %p41 = scmp.eq.s32.totalorder %s21, 0
      %p42 = por %p40, %p41
      %p43 = scmp.ne.s32.totalorder %s29, %s30
      %p44 = scmp.eq.s32.totalorder %s22, 1
      %p45 = por %p43, %p44
      %p47 = scmp.ne.s32.totalorder %s30, %s46
      %p48 = scmp.eq.s32.totalorder %s22, 0
      %p49 = por %p47, %p48
      %s51 = sadd.s32 %s50, 1
      %p54 = scmp.eq.s32.totalorder %s16, 1
      %p55 = scmp.ne.s32.totalorder %s50, %s52
      %p56 = scmp.eq.s32.totalorder %s16, 0
      %p57 = por %p55, %p56
      %p58 = scmp.ne.s32.totalorder %s50, %s52
      %p59 = scmp.eq.s32.totalorder %s21, 1
      %p60 = por %p58, %p59
      %p61 = scmp.ne.s32.totalorder %s52, %s53
      %p62 = scmp.eq.s32.totalorder %s21, 0
      %p63 = por %p61, %p62
      %p64 = scmp.ne.s32.totalorder %s52, %s53
      %p65 = scmp.eq.s32.totalorder %s22, 1
      %p66 = por %p64, %p65
      %p68 = scmp.ne.s32.totalorder %s53, %s67
      %p69 = scmp.eq.s32.totalorder %s22, 0
      %p70 = por %p68, %p69
      %s72 = sadd.s32 %s71, 1
      %p75 = scmp.eq.s32.totalorder %s16, 1
      %p76 = scmp.ne.s32.totalorder %s71, %s73
      %p77 = scmp.eq.s32.totalorder %s16, 0
      %p78 = por %p76, %p77
      %p79 = scmp.ne.s32.totalorder %s71, %s73
      %p80 = scmp.eq.s32.totalorder %s21, 1
      %p81 = por %p79, %p80
      %p82 = scmp.ne.s32.totalorder %s73, %s74
      %p83 = scmp.eq.s32.totalorder %s21, 0
      %p84 = por %p82, %p83
      %p85 = scmp.ne.s32.totalorder %s73, %s74
      %p86 = scmp.eq.s32.totalorder %s22, 1
      %p87 = por %p85, %p86
      %p89 = scmp.ne.s32.totalorder %s74, %s88
      %p90 = scmp.eq.s32.totalorder %s22, 0
      %p91 = por %p89, %p90
      %s93 = sadd.s32 %s92, 1
      %p96 = scmp.eq.s32.totalorder %s16, 1
      %p97 = scmp.ne.s32.totalorder %s92, %s94
      %p98 = scmp.eq.s32.totalorder %s16, 0
      %p99 = por %p97, %p98
      %p100 = scmp.ne.s32.totalorder %s92, %s94
      %p101 = scmp.eq.s32.totalorder %s21, 1
      %p102 = por %p100, %p101
      %p103 = scmp.ne.s32.totalorder %s94, %s95
      %p104 = scmp.eq.s32.totalorder %s21, 0
      %p105 = por %p103, %p104
      %p106 = scmp.ne.s32.totalorder %s94, %s95
      %p107 = scmp.eq.s32.totalorder %s22, 1
      %p108 = por %p106, %p107
      %p110 = scmp.ne.s32.totalorder %s95, %s109
      %p111 = scmp.eq.s32.totalorder %s22, 0
      %p112 = por %p110, %p111
      %s114 = sadd.s32 %s113, 1
      %p117 = scmp.eq.s32.totalorder %s16, 1
      %p118 = scmp.ne.s32.totalorder %s113, %s115
      %p119 = scmp.eq.s32.totalorder %s16, 0
      %p120 = por %p118, %p119
      %p121 = scmp.ne.s32.totalorder %s113, %s115
      %p122 = scmp.eq.s32.totalorder %s21, 1
      %p123 = por %p121, %p122
      %p124 = scmp.ne.s32.totalorder %s115, %s116
      %p125 = scmp.eq.s32.totalorder %s21, 0
      %p126 = por %p124, %p125
      %p127 = scmp.ne.s32.totalorder %s115, %s116
      %p128 = scmp.eq.s32.totalorder %s22, 1
      %p129 = por %p127, %p128
      %p131 = scmp.ne.s32.totalorder %s116, %s130
      %p132 = scmp.eq.s32.totalorder %s22, 0
      %p133 = por %p131, %p132
      %s135 = sadd.s32 %s134, 1
      %p138 = scmp.eq.s32.totalorder %s16, 1
      %p139 = scmp.ne.s32.totalorder %s134, %s136
      %p140 = scmp.eq.s32.totalorder %s16, 0
      %p141 = por %p139, %p140
      %p142 = scmp.ne.s32.totalorder %s134, %s136
      %p143 = scmp.eq.s32.totalorder %s21, 1
      %p144 = por %p142, %p143
      %p145 = scmp.ne.s32.totalorder %s136, %s137
      %p146 = scmp.eq.s32.totalorder %s21, 0
      %p147 = por %p145, %p146
      %p148 = scmp.ne.s32.totalorder %s136, %s137
      %p149 = scmp.eq.s32.totalorder %s22, 1
      %p150 = por %p148, %p149
      %p152 = scmp.ne.s32.totalorder %s137, %s151
      %p153 = scmp.eq.s32.totalorder %s22, 0
      %p154 = por %p152, %p153
      %s156 = sadd.s32 %s155, 1
      %p159 = scmp.eq.s32.totalorder %s16, 1
      %p160 = scmp.ne.s32.totalorder %s155, %s157
      %p161 = scmp.eq.s32.totalorder %s16, 0
      %p162 = por %p160, %p161
      %p163 = scmp.ne.s32.totalorder %s155, %s157
      %p164 = scmp.eq.s32.totalorder %s21, 1
      %p165 = por %p163, %p164
      %p166 = scmp.ne.s32.totalorder %s157, %s158
      %p167 = scmp.eq.s32.totalorder %s21, 0
      %p168 = por %p166, %p167
      %p169 = scmp.ne.s32.totalorder %s157, %s158
      %p170 = scmp.eq.s32.totalorder %s22, 1
      %p171 = por %p169, %p170
      %p173 = scmp.ne.s32.totalorder %s158, %s172
      %p174 = scmp.eq.s32.totalorder %s22, 0
      %p175 = por %p173, %p174
      %s176 = ssub.s32 %s16, %s23
      %p177 = scmp.eq.s32.totalorder %s176, 0
      %s179 = sadd.s32 %s178, 1
      %s180 = scalar_select %p177, %s178, %s179
      %p183 = pneg %p177
      %p184 = scmp.eq.s32.totalorder %s16, 1
      %p185 = por %p183, %p184
      %p186 = scmp.ne.s32.totalorder %s178, %s181
      %p187 = scmp.eq.s32.totalorder %s16, 0
      %p188 = por %p186, %p187
      %p189 = scmp.ne.s32.totalorder %s178, %s181
      %p190 = scmp.eq.s32.totalorder %s21, 1
      %p191 = por %p189, %p190
      %p192 = scmp.ne.s32.totalorder %s181, %s182
      %p193 = scmp.eq.s32.totalorder %s21, 0
      %p194 = por %p192, %p193
      %p195 = scmp.ne.s32.totalorder %s181, %s182
      %p196 = scmp.eq.s32.totalorder %s22, 1
      %p197 = por %p195, %p196
      %p199 = scmp.ne.s32.totalorder %s182, %s198
      %p200 = scmp.eq.s32.totalorder %s22, 0
      %p201 = por %p199, %p200
      %p202 = scmp.le.s32.totalorder 1, %s16
      %p203 = scmp.lt.s32.totalorder %s16, 3
      %p204 = pnand %p202, %p203
      %p205 = pneg %p204
      // Predicated region
      $region9: #{tpu_custom_call.1} parent=5 // pred_check
        _
      $region10: #{tpu_custom_call.1} parent=5 // pred_check_branch
        %207 = sbr.rel (%p204) target = $region12
      $region11: #{tpu_custom_call.1} parent=5 // pred_region
        %s208 = ssub.s32 %s16, 1
        // Predicated region
        $region13: #{tpu_custom_call.1} parent=11 // pred_check
          %p209 = pneg %p63
        $region14: #{tpu_custom_call.1} parent=11 // pred_check_branch
          %211 = sbr.rel (%p209) target = $region16
        $region15: #{tpu_custom_call.1} parent=11 // pred_region
          _
        $region16: #{tpu_custom_call.1} parent=11 // pred_fallthru
          _
        // Predicated region
        $region17: #{tpu_custom_call.1} parent=11 // pred_check
          %p212 = pneg %p84
        $region18: #{tpu_custom_call.1} parent=11 // pred_check_branch
          %214 = sbr.rel (%p212) target = $region20
        $region19: #{tpu_custom_call.1} parent=11 // pred_region
          _
        $region20: #{tpu_custom_call.1} parent=11 // pred_fallthru
          _
        // Predicated region
        $region21: #{tpu_custom_call.1} parent=11 // pred_check
          %p215 = pneg %p105
        $region22: #{tpu_custom_call.1} parent=11 // pred_check_branch
          %217 = sbr.rel (%p215) target = $region24
        $region23: #{tpu_custom_call.1} parent=11 // pred_region
          _
        $region24: #{tpu_custom_call.1} parent=11 // pred_fallthru
          _
        // Predicated region
        $region25: #{tpu_custom_call.1} parent=11 // pred_check
          %p218 = pneg %p126
        $region26: #{tpu_custom_call.1} parent=11 // pred_check_branch
          %220 = sbr.rel (%p218) target = $region28
        $region27: #{tpu_custom_call.1} parent=11 // pred_region
          _
        $region28: #{tpu_custom_call.1} parent=11 // pred_fallthru
          _
        // Predicated region
        $region29: #{tpu_custom_call.1} parent=11 // pred_check
          %p221 = pneg %p147
        $region30: #{tpu_custom_call.1} parent=11 // pred_check_branch
          %223 = sbr.rel (%p221) target = $region32
        $region31: #{tpu_custom_call.1} parent=11 // pred_region
          _
        $region32: #{tpu_custom_call.1} parent=11 // pred_fallthru
          _
        // Predicated region
        $region33: #{tpu_custom_call.1} parent=11 // pred_check
          %p224 = pneg %p168
        $region34: #{tpu_custom_call.1} parent=11 // pred_check_branch
          %226 = sbr.rel (%p224) target = $region36
        $region35: #{tpu_custom_call.1} parent=11 // pred_region
          _
        $region36: #{tpu_custom_call.1} parent=11 // pred_fallthru
          _
      $region12: #{tpu_custom_call.1} parent=5 // pred_fallthru
        _
      %p227 = scmp.lt.s32.totalorder %s16, 2
      // Predicated region
      $region37: #{tpu_custom_call.1} parent=5 // pred_check
        %p228 = pneg %p227
      $region38: #{tpu_custom_call.1} parent=5 // pred_check_branch
        %230 = sbr.rel (%p228) target = $region40
      $region39: #{tpu_custom_call.1} parent=5 // pred_region
        // Predicated region
        $region41: #{tpu_custom_call.1} parent=39 // pred_check
          %p231 = pneg %p36
        $region42: #{tpu_custom_call.1} parent=39 // pred_check_branch
          %233 = sbr.rel (%p231) target = $region44
        $region43: #{tpu_custom_call.1} parent=39 // pred_region
          %p234 = scmp.lt.s32.totalorder %s16, 1
          %s235 = scalar_select %p234, %s16, 1
          %s236 = smul.addr %s235, 2
          %s237 = smul.addr %s236, 8
          %s238 = scalar_lea.vmem %s0, %s237
        $region44: #{tpu_custom_call.1} parent=39 // pred_fallthru
          _
      $region40: #{tpu_custom_call.1} parent=5 // pred_fallthru
        _
      %p239 = scmp.le.s32.totalorder 1, %s16
      %p240 = scmp.lt.s32.totalorder %s16, 3
      %p241 = pnand %p239, %p240
      %p242 = pneg %p241
      // Predicated region
      $region45: #{tpu_custom_call.1} parent=5 // pred_check
        _
      $region46: #{tpu_custom_call.1} parent=5 // pred_check_branch
        %244 = sbr.rel (%p241) target = $region48
      $region47: #{tpu_custom_call.1} parent=5 // pred_region
        %s245 = ssub.s32 %s16, 1
        %p246 = scmp.lt.s32.totalorder %s21, 1
        %s247 = scalar_select %p246, %s21, 1
        %s248 = smul.addr %s247, 2
        %s249 = smul.addr %s248, 8
        %s250 = scalar_lea.vmem %s0, %s249
        %p251 = pneg %p42
        %p252 = pneg %p39
        %p253 = pneg %p63
        %p254 = pneg %p60
        %p255 = pneg %p84
        %p256 = pneg %p81
        %p257 = pneg %p105
        %p258 = pneg %p102
        %p259 = pneg %p126
        %p260 = pneg %p123
        %p261 = pneg %p147
        %p262 = pneg %p144
        %p263 = pneg %p168
        %p264 = pneg %p165
        %p265 = pneg %p194
        %p266 = pneg %p191
        %s267 = sand.u32 %s181, 1
        %s268 = scalar_lea.sflag [#allocation3], %s267
        %s269 = sand.u32 %s181, 1
        %s270 = smul.addr %s269, 128
        %s271 = scalar_lea.vmem [#allocation2], %s270
        %p272 = scmp.lt.s32.totalorder %s21, 1
        %s273 = scalar_select %p272, %s21, 1
        %s274 = smul.addr %s273, 2
        %s275 = smul.addr %s274, 8
        %s276 = scalar_lea.vmem %s0, %s275
        %v278 = vlaneseq
        %v279 = vand.u32 %v278, 127
        %v280 = vadd.s32 %v279, 128
        %v281 = vand.u32 %v279, 15
        %v282 = vand.u32 %v280, 15
        %vm283 = vcmp.ge.s32.totalorder %v279, 16
        %vm284 = vcmp.ge.s32.totalorder %v280, 16
        %vm285 = vcmp.lt.s32.totalorder %v279, 240
        %vm286 = vcmp.lt.s32.totalorder %v280, 240
        %vm287 = vcmp.ge.s32.totalorder %v281, 1
        %vm288 = vcmp.ge.s32.totalorder %v282, 1
        %vm289 = vcmp.le.s32.totalorder %v281, 14
        %vm290 = vcmp.le.s32.totalorder %v282, 14
        %vm291 = vmand %vm283, %vm287
        %vm292 = vmand %vm284, %vm288
        %vm293 = vmand %vm283, %vm289
        %vm294 = vmand %vm284, %vm290
        %vm295 = vmand %vm285, %vm287
        %vm296 = vmand %vm286, %vm288
        %vm297 = vmand %vm285, %vm289
        %vm298 = vmand %vm286, %vm290
        %v299 = vld [vmem:[%s276] sm:$0xff]
        %v300 = vld [vmem:[%s276 + $0x8] sm:$0xff]
        %301 = vrot.lane.b32.xlu0 %v299, 17
        %v302 = vpop.permute.xlu0 %301
        %303 = vrot.lane.b32.xlu0 %v300, 17
        %v304 = vpop.permute.xlu0 %303
        %vm305 = vcmp.lt.s32.totalorder %v279, 17
        %v306 = vsel %vm305, %v302, %v304
        %v307 = vsel %vm305, %v304, %v302
        %v308 = vsel %vm291, 1, 0
        %v309 = vsel %vm292, 1, 0
        %vm310 = vcmp.eq.s32.totalorder %v308, 1
        %vm311 = vcmp.eq.s32.totalorder %v309, 1
        %v312 = vsel %vm310, %v307, 0.0
        %v313 = vsel %vm311, %v306, 0.0
        %v314 = vld [vmem:[%s1] sm:$0xf]
        %v315 = vld [vmem:[%s1 + $0x4] sm:$0xf]
        %v316 = vpack.c.bf16 %v312, %v312
        %v317 = vpack.c.bf16 %v313, %v313
        %318 = vrot.lane.b32.xlu0 %v299, 16
        %v319 = vpop.permute.xlu0 %318
        %320 = vrot.lane.b32.xlu0 %v300, 16
        %v321 = vpop.permute.xlu0 %320
        %vm322 = vcmp.lt.s32.totalorder %v279, 16
        %v323 = vsel %vm322, %v319, %v321
        %v324 = vsel %vm322, %v321, %v319
        %v325 = vsel %vm283, 1, 0
        %v326 = vsel %vm284, 1, 0
        %vm327 = vcmp.eq.s32.totalorder %v325, 1
        %vm328 = vcmp.eq.s32.totalorder %v326, 1
        %v329 = vsel %vm327, %v324, 0.0
        %v330 = vsel %vm328, %v323, 0.0
        %s331 = scalar_lea.vmem %s1, 8
        %v332 = vld [vmem:[%s331] sm:$0xf]
        %v333 = vld [vmem:[%s331 + $0x4] sm:$0xf]
        %v334 = vpack.c.bf16 %v329, %v329
        %v335 = vpack.c.bf16 %v330, %v330
        %v338 = vunpack.c.l.b16 %v332
        %v339 = vunpack.c.l.b16 %v333
        %v340 = vpack.c.b16 %v339, %v338
        %vm341 = vcmask 64512
        %v343 = vsel %vm341, %v340, 0
        %vm345 = vcmask 1043456
        %v347 = vsel %vm345, %v334, 0
        %v350 = vsel %vm345, %v335, 0
        %352 = vmatpush.bf16.msra.mxu0 0
        %353 = vmatpush.bf16.msra.mxu0 0
        %354 = vmatpush.bf16.msra.mxu0 0
        %355 = vmatpush.bf16.msra.mxu0 0
        %356 = vmatpush.bf16.msra.mxu0 0
        %357 = vmatpush.bf16.msra.mxu0 0
        %358 = vmatpush.bf16.msra.mxu0 0
        %359 = vmatpush.bf16.msra.mxu0 %v347
        %360 = vmatmul.bf16.gmra.mxu0 %v343
        %v361 = vpop.f32.mrf.mxu0
        %v362 = vadd.f32 0.0, %v361
        %v363 = vpop.f32.mrf.mxu0
        %v364 = vadd.f32 0.0, %v363
        %365 = vdwg.mxu0
        %366 = vmatpush.bf16.msra.mxu0 0
        %367 = vmatpush.bf16.msra.mxu0 0
        %368 = vmatpush.bf16.msra.mxu0 0
        %369 = vmatpush.bf16.msra.mxu0 0
        %370 = vmatpush.bf16.msra.mxu0 0
        %371 = vmatpush.bf16.msra.mxu0 0
        %372 = vmatpush.bf16.msra.mxu0 0
        %373 = vmatpush.bf16.msra.mxu0 %v350
        %374 = vmatmul.bf16.gmra.mxu0 %v343
        %v375 = vpop.f32.mrf.mxu0
        %v376 = vadd.f32 0.0, %v375
        %v377 = vpop.f32.mrf.mxu0
        %v378 = vadd.f32 0.0, %v377
        %379 = vdwg.mxu0
        %v382 = vunpack.c.l.b16 %v314
        %v383 = vunpack.c.l.b16 %v315
        %v384 = vpack.c.b16 %v383, %v382
        %v386 = vsel %vm341, %v384, 0
        %v389 = vsel %vm345, %v316, 0
        %v392 = vsel %vm345, %v317, 0
        %394 = vmatpush.bf16.msra.mxu0 0
        %395 = vmatpush.bf16.msra.mxu0 0
        %396 = vmatpush.bf16.msra.mxu0 0
        %397 = vmatpush.bf16.msra.mxu0 0
        %398 = vmatpush.bf16.msra.mxu0 0
        %399 = vmatpush.bf16.msra.mxu0 0
        %400 = vmatpush.bf16.msra.mxu0 0
        %401 = vmatpush.bf16.msra.mxu0 %v389
        %402 = vmatmul.bf16.gmra.mxu0 %v386
        %v403 = vpop.f32.mrf.mxu0
        %v404 = vadd.f32 %v362, %v403
        %v405 = vpop.f32.mrf.mxu0
        %v406 = vadd.f32 %v364, %v405
        %407 = vdwg.mxu0
        %408 = vmatpush.bf16.msra.mxu0 0
        %409 = vmatpush.bf16.msra.mxu0 0
        %410 = vmatpush.bf16.msra.mxu0 0
        %411 = vmatpush.bf16.msra.mxu0 0
        %412 = vmatpush.bf16.msra.mxu0 0
        %413 = vmatpush.bf16.msra.mxu0 0
        %414 = vmatpush.bf16.msra.mxu0 0
        %415 = vmatpush.bf16.msra.mxu0 %v392
        %416 = vmatmul.bf16.gmra.mxu0 %v386
        %v417 = vpop.f32.mrf.mxu0
        %v418 = vadd.f32 %v376, %v417
        %v419 = vpop.f32.mrf.mxu0
        %v420 = vadd.f32 %v378, %v419
        %421 = vdwg.mxu0
        %422 = vrot.lane.b32.xlu0 %v299, 15
        %v423 = vpop.permute.xlu0 %422
        %424 = vrot.lane.b32.xlu0 %v300, 15
        %v425 = vpop.permute.xlu0 %424
        %vm426 = vcmp.lt.s32.totalorder %v279, 15
        %v427 = vsel %vm426, %v423, %v425
        %v428 = vsel %vm426, %v425, %v423
        %v429 = vsel %vm293, 1, 0
        %v430 = vsel %vm294, 1, 0
        %vm431 = vcmp.eq.s32.totalorder %v429, 1
        %vm432 = vcmp.eq.s32.totalorder %v430, 1
        %v433 = vsel %vm431, %v428, 0.0
        %v434 = vsel %vm432, %v427, 0.0
        %s435 = scalar_lea.vmem %s1, 16
        %v436 = vld [vmem:[%s435] sm:$0xf]
        %v437 = vld [vmem:[%s435 + $0x4] sm:$0xf]
        %v438 = vpack.c.bf16 %v433, %v433
        %v439 = vpack.c.bf16 %v434, %v434
        %v442 = vunpack.c.l.b16 %v436
        %v443 = vunpack.c.l.b16 %v437
        %v444 = vpack.c.b16 %v443, %v442
        %v446 = vsel %vm341, %v444, 0
        %v449 = vsel %vm345, %v438, 0
        %v452 = vsel %vm345, %v439, 0
        %454 = vmatpush.bf16.msra.mxu0 0
        %455 = vmatpush.bf16.msra.mxu0 0
        %456 = vmatpush.bf16.msra.mxu0 0
        %457 = vmatpush.bf16.msra.mxu0 0
        %458 = vmatpush.bf16.msra.mxu0 0
        %459 = vmatpush.bf16.msra.mxu0 0
        %460 = vmatpush.bf16.msra.mxu0 0
        %461 = vmatpush.bf16.msra.mxu0 %v449
        %462 = vmatmul.bf16.gmra.mxu0 %v446
        %v463 = vpop.f32.mrf.mxu0
        %v464 = vadd.f32 0.0, %v463
        %v465 = vpop.f32.mrf.mxu0
        %v466 = vadd.f32 0.0, %v465
        %467 = vdwg.mxu0
        %468 = vmatpush.bf16.msra.mxu0 0
        %469 = vmatpush.bf16.msra.mxu0 0
        %470 = vmatpush.bf16.msra.mxu0 0
        %471 = vmatpush.bf16.msra.mxu0 0
        %472 = vmatpush.bf16.msra.mxu0 0
        %473 = vmatpush.bf16.msra.mxu0 0
        %474 = vmatpush.bf16.msra.mxu0 0
        %475 = vmatpush.bf16.msra.mxu0 %v452
        %476 = vmatmul.bf16.gmra.mxu0 %v446
        %v477 = vpop.f32.mrf.mxu0
        %v478 = vadd.f32 0.0, %v477
        %v479 = vpop.f32.mrf.mxu0
        %v480 = vadd.f32 0.0, %v479
        %481 = vdwg.mxu0
        %v482 = vadd.f32 %v404, %v464
        %v483 = vadd.f32 %v418, %v478
        %v484 = vadd.f32 %v406, %v466
        %v485 = vadd.f32 %v420, %v480
        %486 = vrot.lane.b32.xlu0 %v299, 1
        %v487 = vpop.permute.xlu0 %486
        %488 = vrot.lane.b32.xlu0 %v300, 1
        %v489 = vpop.permute.xlu0 %488
        %vm490 = vcmp.lt.s32.totalorder %v279, 1
        %v491 = vsel %vm490, %v487, %v489
        %v492 = vsel %vm490, %v489, %v487
        %v493 = vsel %vm287, 1, 0
        %v494 = vsel %vm288, 1, 0
        %vm495 = vcmp.eq.s32.totalorder %v493, 1
        %vm496 = vcmp.eq.s32.totalorder %v494, 1
        %v497 = vsel %vm495, %v492, 0.0
        %v498 = vsel %vm496, %v491, 0.0
        %s499 = scalar_lea.vmem %s1, 24
        %v500 = vld [vmem:[%s499] sm:$0xf]
        %v501 = vld [vmem:[%s499 + $0x4] sm:$0xf]
        %v502 = vpack.c.bf16 %v497, %v497
        %v503 = vpack.c.bf16 %v498, %v498
        %v506 = vunpack.c.l.b16 %v500
        %v507 = vunpack.c.l.b16 %v501
        %v508 = vpack.c.b16 %v507, %v506
        %v510 = vsel %vm341, %v508, 0
        %v513 = vsel %vm345, %v502, 0
        %v516 = vsel %vm345, %v503, 0
        %518 = vmatpush.bf16.msra.mxu0 0
        %519 = vmatpush.bf16.msra.mxu0 0
        %520 = vmatpush.bf16.msra.mxu0 0
        %521 = vmatpush.bf16.msra.mxu0 0
        %522 = vmatpush.bf16.msra.mxu0 0
        %523 = vmatpush.bf16.msra.mxu0 0
        %524 = vmatpush.bf16.msra.mxu0 0
        %525 = vmatpush.bf16.msra.mxu0 %v513
        %526 = vmatmul.bf16.gmra.mxu0 %v510
        %v527 = vpop.f32.mrf.mxu0
        %v528 = vadd.f32 0.0, %v527
        %v529 = vpop.f32.mrf.mxu0
        %v530 = vadd.f32 0.0, %v529
        %531 = vdwg.mxu0
        %532 = vmatpush.bf16.msra.mxu0 0
        %533 = vmatpush.bf16.msra.mxu0 0
        %534 = vmatpush.bf16.msra.mxu0 0
        %535 = vmatpush.bf16.msra.mxu0 0
        %536 = vmatpush.bf16.msra.mxu0 0
        %537 = vmatpush.bf16.msra.mxu0 0
        %538 = vmatpush.bf16.msra.mxu0 0
        %539 = vmatpush.bf16.msra.mxu0 %v516
        %540 = vmatmul.bf16.gmra.mxu0 %v510
        %v541 = vpop.f32.mrf.mxu0
        %v542 = vadd.f32 0.0, %v541
        %v543 = vpop.f32.mrf.mxu0
        %v544 = vadd.f32 0.0, %v543
        %545 = vdwg.mxu0
        %v546 = vadd.f32 %v482, %v528
        %v547 = vadd.f32 %v483, %v542
        %v548 = vadd.f32 %v484, %v530
        %v549 = vadd.f32 %v485, %v544
        %s550 = scalar_lea.vmem %s1, 32
        %v551 = vld [vmem:[%s550] sm:$0xf]
        %v552 = vld [vmem:[%s550 + $0x4] sm:$0xf]
        %v553 = vpack.c.bf16 %v299, %v299
        %v554 = vpack.c.bf16 %v300, %v300
        %v557 = vunpack.c.l.b16 %v551
        %v558 = vunpack.c.l.b16 %v552
        %v559 = vpack.c.b16 %v558, %v557
        %v561 = vsel %vm341, %v559, 0
        %v564 = vsel %vm345, %v553, 0
        %v567 = vsel %vm345, %v554, 0
        %569 = vmatpush.bf16.msra.mxu0 0
        %570 = vmatpush.bf16.msra.mxu0 0
        %571 = vmatpush.bf16.msra.mxu0 0
        %572 = vmatpush.bf16.msra.mxu0 0
        %573 = vmatpush.bf16.msra.mxu0 0
        %574 = vmatpush.bf16.msra.mxu0 0
        %575 = vmatpush.bf16.msra.mxu0 0
        %576 = vmatpush.bf16.msra.mxu0 %v564
        %577 = vmatmul.bf16.gmra.mxu0 %v561
        %v578 = vpop.f32.mrf.mxu0
        %v579 = vadd.f32 0.0, %v578
        %v580 = vpop.f32.mrf.mxu0
        %v581 = vadd.f32 0.0, %v580
        %582 = vdwg.mxu0
        %583 = vmatpush.bf16.msra.mxu0 0
        %584 = vmatpush.bf16.msra.mxu0 0
        %585 = vmatpush.bf16.msra.mxu0 0
        %586 = vmatpush.bf16.msra.mxu0 0
        %587 = vmatpush.bf16.msra.mxu0 0
        %588 = vmatpush.bf16.msra.mxu0 0
        %589 = vmatpush.bf16.msra.mxu0 0
        %590 = vmatpush.bf16.msra.mxu0 %v567
        %591 = vmatmul.bf16.gmra.mxu0 %v561
        %v592 = vpop.f32.mrf.mxu0
        %v593 = vadd.f32 0.0, %v592
        %v594 = vpop.f32.mrf.mxu0
        %v595 = vadd.f32 0.0, %v594
        %596 = vdwg.mxu0
        %v597 = vadd.f32 %v546, %v579
        %v598 = vadd.f32 %v547, %v593
        %v599 = vadd.f32 %v548, %v581
        %v600 = vadd.f32 %v549, %v595
        %601 = vrot.lane.b32.xlu0 %v299, 127
        %v602 = vpop.permute.xlu0 %601
        %603 = vrot.lane.b32.xlu0 %v300, 127
        %v604 = vpop.permute.xlu0 %603
        %vm605 = vcmp.lt.s32.totalorder %v279, 127
        %v606 = vsel %vm605, %v602, %v604
        %v607 = vsel %vm605, %v604, %v602
        %v608 = vsel %vm289, 1, 0
        %v609 = vsel %vm290, 1, 0
        %vm610 = vcmp.eq.s32.totalorder %v608, 1
        %vm611 = vcmp.eq.s32.totalorder %v609, 1
        %v612 = vsel %vm610, %v606, 0.0
        %v613 = vsel %vm611, %v607, 0.0
        %s614 = scalar_lea.vmem %s1, 40
        %v615 = vld [vmem:[%s614] sm:$0xf]
        %v616 = vld [vmem:[%s614 + $0x4] sm:$0xf]
        %v617 = vpack.c.bf16 %v612, %v612
        %v618 = vpack.c.bf16 %v613, %v613
        %v621 = vunpack.c.l.b16 %v615
        %v622 = vunpack.c.l.b16 %v616
        %v623 = vpack.c.b16 %v622, %v621
        %v625 = vsel %vm341, %v623, 0
        %v628 = vsel %vm345, %v617, 0
        %v631 = vsel %vm345, %v618, 0
        %633 = vmatpush.bf16.msra.mxu0 0
        %634 = vmatpush.bf16.msra.mxu0 0
        %635 = vmatpush.bf16.msra.mxu0 0
        %636 = vmatpush.bf16.msra.mxu0 0
        %637 = vmatpush.bf16.msra.mxu0 0
        %638 = vmatpush.bf16.msra.mxu0 0
        %639 = vmatpush.bf16.msra.mxu0 0
        %640 = vmatpush.bf16.msra.mxu0 %v628
        %641 = vmatmul.bf16.gmra.mxu0 %v625
        %v642 = vpop.f32.mrf.mxu0
        %v643 = vadd.f32 0.0, %v642
        %v644 = vpop.f32.mrf.mxu0
        %v645 = vadd.f32 0.0, %v644
        %646 = vdwg.mxu0
        %647 = vmatpush.bf16.msra.mxu0 0
        %648 = vmatpush.bf16.msra.mxu0 0
        %649 = vmatpush.bf16.msra.mxu0 0
        %650 = vmatpush.bf16.msra.mxu0 0
        %651 = vmatpush.bf16.msra.mxu0 0
        %652 = vmatpush.bf16.msra.mxu0 0
        %653 = vmatpush.bf16.msra.mxu0 0
        %654 = vmatpush.bf16.msra.mxu0 %v631
        %655 = vmatmul.bf16.gmra.mxu0 %v625
        %v656 = vpop.f32.mrf.mxu0
        %v657 = vadd.f32 0.0, %v656
        %v658 = vpop.f32.mrf.mxu0
        %v659 = vadd.f32 0.0, %v658
        %660 = vdwg.mxu0
        %v661 = vadd.f32 %v597, %v643
        %v662 = vadd.f32 %v598, %v657
        %v663 = vadd.f32 %v599, %v645
        %v664 = vadd.f32 %v600, %v659
        %665 = vrot.lane.b32.xlu0 %v299, 113
        %v666 = vpop.permute.xlu0 %665
        %667 = vrot.lane.b32.xlu0 %v300, 113
        %v668 = vpop.permute.xlu0 %667
        %vm669 = vcmp.lt.s32.totalorder %v279, 113
        %v670 = vsel %vm669, %v666, %v668
        %v671 = vsel %vm669, %v668, %v666
        %v672 = vsel %vm295, 1, 0
        %v673 = vsel %vm296, 1, 0
        %vm674 = vcmp.eq.s32.totalorder %v672, 1
        %vm675 = vcmp.eq.s32.totalorder %v673, 1
        %v676 = vsel %vm674, %v670, 0.0
        %v677 = vsel %vm675, %v671, 0.0
        %s678 = scalar_lea.vmem %s1, 48
        %v679 = vld [vmem:[%s678] sm:$0xf]
        %v680 = vld [vmem:[%s678 + $0x4] sm:$0xf]
        %v681 = vpack.c.bf16 %v676, %v676
        %v682 = vpack.c.bf16 %v677, %v677
        %v685 = vunpack.c.l.b16 %v679
        %v686 = vunpack.c.l.b16 %v680
        %v687 = vpack.c.b16 %v686, %v685
        %v689 = vsel %vm341, %v687, 0
        %v692 = vsel %vm345, %v681, 0
        %v695 = vsel %vm345, %v682, 0
        %697 = vmatpush.bf16.msra.mxu0 0
        %698 = vmatpush.bf16.msra.mxu0 0
        %699 = vmatpush.bf16.msra.mxu0 0
        %700 = vmatpush.bf16.msra.mxu0 0
        %701 = vmatpush.bf16.msra.mxu0 0
        %702 = vmatpush.bf16.msra.mxu0 0
        %703 = vmatpush.bf16.msra.mxu0 0
        %704 = vmatpush.bf16.msra.mxu0 %v692
        %705 = vmatmul.bf16.gmra.mxu0 %v689
        %v706 = vpop.f32.mrf.mxu0
        %v707 = vadd.f32 0.0, %v706
        %v708 = vpop.f32.mrf.mxu0
        %v709 = vadd.f32 0.0, %v708
        %710 = vdwg.mxu0
        %711 = vmatpush.bf16.msra.mxu0 0
        %712 = vmatpush.bf16.msra.mxu0 0
        %713 = vmatpush.bf16.msra.mxu0 0
        %714 = vmatpush.bf16.msra.mxu0 0
        %715 = vmatpush.bf16.msra.mxu0 0
        %716 = vmatpush.bf16.msra.mxu0 0
        %717 = vmatpush.bf16.msra.mxu0 0
        %718 = vmatpush.bf16.msra.mxu0 %v695
        %719 = vmatmul.bf16.gmra.mxu0 %v689
        %v720 = vpop.f32.mrf.mxu0
        %v721 = vadd.f32 0.0, %v720
        %v722 = vpop.f32.mrf.mxu0
        %v723 = vadd.f32 0.0, %v722
        %724 = vdwg.mxu0
        %v725 = vadd.f32 %v661, %v707
        %v726 = vadd.f32 %v662, %v721
        %v727 = vadd.f32 %v663, %v709
        %v728 = vadd.f32 %v664, %v723
        %729 = vrot.lane.b32.xlu0 %v299, 112
        %v730 = vpop.permute.xlu0 %729
        %731 = vrot.lane.b32.xlu0 %v300, 112
        %v732 = vpop.permute.xlu0 %731
        %vm733 = vcmp.lt.s32.totalorder %v279, 112
        %v734 = vsel %vm733, %v730, %v732
        %v735 = vsel %vm733, %v732, %v730
        %v736 = vsel %vm285, 1, 0
        %v737 = vsel %vm286, 1, 0
        %vm738 = vcmp.eq.s32.totalorder %v736, 1
        %vm739 = vcmp.eq.s32.totalorder %v737, 1
        %v740 = vsel %vm738, %v734, 0.0
        %v741 = vsel %vm739, %v735, 0.0
        %s742 = scalar_lea.vmem %s1, 56
        %v743 = vld [vmem:[%s742] sm:$0xf]
        %v744 = vld [vmem:[%s742 + $0x4] sm:$0xf]
        %v745 = vpack.c.bf16 %v740, %v740
        %v746 = vpack.c.bf16 %v741, %v741
        %v749 = vunpack.c.l.b16 %v743
        %v750 = vunpack.c.l.b16 %v744
        %v751 = vpack.c.b16 %v750, %v749
        %v753 = vsel %vm341, %v751, 0
        %v756 = vsel %vm345, %v745, 0
        %v759 = vsel %vm345, %v746, 0
        %761 = vmatpush.bf16.msra.mxu0 0
        %762 = vmatpush.bf16.msra.mxu0 0
        %763 = vmatpush.bf16.msra.mxu0 0
        %764 = vmatpush.bf16.msra.mxu0 0
        %765 = vmatpush.bf16.msra.mxu0 0
        %766 = vmatpush.bf16.msra.mxu0 0
        %767 = vmatpush.bf16.msra.mxu0 0
        %768 = vmatpush.bf16.msra.mxu0 %v756
        %769 = vmatmul.bf16.gmra.mxu0 %v753
        %v770 = vpop.f32.mrf.mxu0
        %v771 = vadd.f32 0.0, %v770
        %v772 = vpop.f32.mrf.mxu0
        %v773 = vadd.f32 0.0, %v772
        %774 = vdwg.mxu0
        %775 = vmatpush.bf16.msra.mxu0 0
        %776 = vmatpush.bf16.msra.mxu0 0
        %777 = vmatpush.bf16.msra.mxu0 0
        %778 = vmatpush.bf16.msra.mxu0 0
        %779 = vmatpush.bf16.msra.mxu0 0
        %780 = vmatpush.bf16.msra.mxu0 0
        %781 = vmatpush.bf16.msra.mxu0 0
        %782 = vmatpush.bf16.msra.mxu0 %v759
        %783 = vmatmul.bf16.gmra.mxu0 %v753
        %v784 = vpop.f32.mrf.mxu0
        %v785 = vadd.f32 0.0, %v784
        %v786 = vpop.f32.mrf.mxu0
        %v787 = vadd.f32 0.0, %v786
        %788 = vdwg.mxu0
        %v789 = vadd.f32 %v725, %v771
        %v790 = vadd.f32 %v726, %v785
        %v791 = vadd.f32 %v727, %v773
        %v792 = vadd.f32 %v728, %v787
        %793 = vrot.lane.b32.xlu0 %v299, 111
        %v794 = vpop.permute.xlu0 %793
        %795 = vrot.lane.b32.xlu0 %v300, 111
        %v796 = vpop.permute.xlu0 %795
        %vm797 = vcmp.lt.s32.totalorder %v279, 111
        %v798 = vsel %vm797, %v794, %v796
        %v799 = vsel %vm797, %v796, %v794
        %v800 = vsel %vm297, 1, 0
        %v801 = vsel %vm298, 1, 0
        %vm802 = vcmp.eq.s32.totalorder %v800, 1
        %vm803 = vcmp.eq.s32.totalorder %v801, 1
        %v804 = vsel %vm802, %v798, 0.0
        %v805 = vsel %vm803, %v799, 0.0
        %s806 = scalar_lea.vmem %s1, 64
        %v807 = vld [vmem:[%s806] sm:$0xf]
        %v808 = vld [vmem:[%s806 + $0x4] sm:$0xf]
        %v809 = vpack.c.bf16 %v804, %v804
        %v810 = vpack.c.bf16 %v805, %v805
        %v813 = vunpack.c.l.b16 %v807
        %v814 = vunpack.c.l.b16 %v808
        %v815 = vpack.c.b16 %v814, %v813
        %v817 = vsel %vm341, %v815, 0
        %v820 = vsel %vm345, %v809, 0
        %v823 = vsel %vm345, %v810, 0
        %825 = vmatpush.bf16.msra.mxu0 0
        %826 = vmatpush.bf16.msra.mxu0 0
        %827 = vmatpush.bf16.msra.mxu0 0
        %828 = vmatpush.bf16.msra.mxu0 0
        %829 = vmatpush.bf16.msra.mxu0 0
        %830 = vmatpush.bf16.msra.mxu0 0
        %831 = vmatpush.bf16.msra.mxu0 0
        %832 = vmatpush.bf16.msra.mxu0 %v820
        %833 = vmatmul.bf16.gmra.mxu0 %v817
        %v834 = vpop.f32.mrf.mxu0
        %v835 = vadd.f32 0.0, %v834
        %v836 = vpop.f32.mrf.mxu0
        %v837 = vadd.f32 0.0, %v836
        %838 = vdwg.mxu0
        %839 = vmatpush.bf16.msra.mxu0 0
        %840 = vmatpush.bf16.msra.mxu0 0
        %841 = vmatpush.bf16.msra.mxu0 0
        %842 = vmatpush.bf16.msra.mxu0 0
        %843 = vmatpush.bf16.msra.mxu0 0
        %844 = vmatpush.bf16.msra.mxu0 0
        %845 = vmatpush.bf16.msra.mxu0 0
        %846 = vmatpush.bf16.msra.mxu0 %v823
        %847 = vmatmul.bf16.gmra.mxu0 %v817
        %v848 = vpop.f32.mrf.mxu0
        %v849 = vadd.f32 0.0, %v848
        %v850 = vpop.f32.mrf.mxu0
        %v851 = vadd.f32 0.0, %v850
        %852 = vdwg.mxu0
        %v853 = vadd.f32 %v789, %v835
        %v854 = vadd.f32 %v790, %v849
        %v855 = vadd.f32 %v791, %v837
        %v856 = vadd.f32 %v792, %v851
        %v857 = vld [vmem:[%s2] sm:$0xff]
        %v858 = vld [vmem:[%s2 + $0x8] sm:$0xff]
        %860 = vset.pattern.permute.xlu0 0
        %861 = vperm.xlu0 %860, %v857
        %v862 = vpop.permute.xlu0 %861
        %865 = vset.pattern.permute.xlu0 0
        %866 = vperm.xlu0 %865, %v858
        %v867 = vpop.permute.xlu0 %866
        %v869 = vadd.f32 %v853, %v862
        %v870 = vadd.f32 %v854, %v862
        %v871 = vadd.f32 %v855, %v867
        %v872 = vadd.f32 %v856, %v867
        %v873 = vmax.f32 %v869, 0.0
        %v874 = vmax.f32 %v870, 0.0
        %v875 = vmax.f32 %v871, 0.0
        %v876 = vmax.f32 %v872, 0.0
        %877 = vrot.lane.b32.xlu0 %v873, 17
        %v878 = vpop.permute.xlu0 %877
        %879 = vrot.lane.b32.xlu0 %v875, 17
        %v880 = vpop.permute.xlu0 %879
        %881 = vrot.lane.b32.xlu0 %v874, 17
        %v882 = vpop.permute.xlu0 %881
        %883 = vrot.lane.b32.xlu0 %v876, 17
        %v884 = vpop.permute.xlu0 %883
        %v885 = vsel %vm305, %v878, %v882
        %v886 = vsel %vm305, %v880, %v884
        %v887 = vsel %vm305, %v882, %v878
        %v888 = vsel %vm305, %v884, %v880
        %v889 = vsel %vm310, %v887, 0.0
        %v890 = vsel %vm311, %v885, 0.0
        %v891 = vsel %vm310, %v888, 0.0
        %v892 = vsel %vm311, %v886, 0.0
        %v893 = vld [vmem:[%s3] sm:$0xf]
        %v894 = vld [vmem:[%s3 + $0x4] sm:$0xf]
        %v895 = vld [vmem:[%s3 + $0x8] sm:$0xf]
        %v896 = vld [vmem:[%s3 + $0xc] sm:$0xf]
        %v897 = vpack.c.bf16 %v891, %v889
        %v898 = vpack.c.bf16 %v892, %v890
        %899 = vrot.lane.b32.xlu0 %v873, 16
        %v900 = vpop.permute.xlu0 %899
        %901 = vrot.lane.b32.xlu0 %v875, 16
        %v902 = vpop.permute.xlu0 %901
        %903 = vrot.lane.b32.xlu0 %v874, 16
        %v904 = vpop.permute.xlu0 %903
        %905 = vrot.lane.b32.xlu0 %v876, 16
        %v906 = vpop.permute.xlu0 %905
        %v907 = vsel %vm322, %v900, %v904
        %v908 = vsel %vm322, %v902, %v906
        %v909 = vsel %vm322, %v904, %v900
        %v910 = vsel %vm322, %v906, %v902
        %v911 = vsel %vm327, %v909, 0.0
        %v912 = vsel %vm328, %v907, 0.0
        %v913 = vsel %vm327, %v910, 0.0
        %v914 = vsel %vm328, %v908, 0.0
        %s915 = scalar_lea.vmem %s3, 16
        %v916 = vld [vmem:[%s915] sm:$0xf]
        %v917 = vld [vmem:[%s915 + $0x4] sm:$0xf]
        %v918 = vld [vmem:[%s915 + $0x8] sm:$0xf]
        %v919 = vld [vmem:[%s915 + $0xc] sm:$0xf]
        %v920 = vpack.c.bf16 %v913, %v911
        %v921 = vpack.c.bf16 %v914, %v912
        %v926 = vunpack.c.l.b16 %v916
        %v927 = vunpack.c.l.b16 %v917
        %v928 = vunpack.c.l.b16 %v918
        %v929 = vunpack.c.l.b16 %v919
        %v930 = vpack.c.b16 %v927, %v926
        %v931 = vpack.c.b16 %v929, %v928
        %vm932 = vcmask 130048
        %v934 = vsel %vm932, %v930, 0
        %v937 = vsel %vm932, %v931, 0
        %939 = vmatpush.bf16.msra.mxu0 0
        %940 = vmatpush.bf16.msra.mxu0 0
        %941 = vmatpush.bf16.msra.mxu0 0
        %942 = vmatpush.bf16.msra.mxu0 0
        %943 = vmatpush.bf16.msra.mxu0 0
        %944 = vmatpush.bf16.msra.mxu0 0
        %945 = vmatpush.bf16.msra.mxu0 0
        %946 = vmatpush.bf16.msra.mxu0 %v920
        %947 = vmatmul.bf16.gmra.mxu0 %v934
        %v948 = vpop.f32.mrf.mxu0
        %v949 = vadd.f32 0.0, %v948
        %v950 = vpop.f32.mrf.mxu0
        %v951 = vadd.f32 0.0, %v950
        %952 = vmatmul.bf16.gmra.mxu0 %v937
        %v953 = vpop.f32.mrf.mxu0
        %v954 = vadd.f32 0.0, %v953
        %v955 = vpop.f32.mrf.mxu0
        %v956 = vadd.f32 0.0, %v955
        %957 = vdwg.mxu0
        %958 = vmatpush.bf16.msra.mxu0 0
        %959 = vmatpush.bf16.msra.mxu0 0
        %960 = vmatpush.bf16.msra.mxu0 0
        %961 = vmatpush.bf16.msra.mxu0 0
        %962 = vmatpush.bf16.msra.mxu0 0
        %963 = vmatpush.bf16.msra.mxu0 0
        %964 = vmatpush.bf16.msra.mxu0 0
        %965 = vmatpush.bf16.msra.mxu0 %v921
        %966 = vmatmul.bf16.gmra.mxu0 %v934
        %v967 = vpop.f32.mrf.mxu0
        %v968 = vadd.f32 0.0, %v967
        %v969 = vpop.f32.mrf.mxu0
        %v970 = vadd.f32 0.0, %v969
        %971 = vmatmul.bf16.gmra.mxu0 %v937
        %v972 = vpop.f32.mrf.mxu0
        %v973 = vadd.f32 0.0, %v972
        %v974 = vpop.f32.mrf.mxu0
        %v975 = vadd.f32 0.0, %v974
        %976 = vdwg.mxu0
        %v981 = vunpack.c.l.b16 %v893
        %v982 = vunpack.c.l.b16 %v894
        %v983 = vunpack.c.l.b16 %v895
        %v984 = vunpack.c.l.b16 %v896
        %v985 = vpack.c.b16 %v982, %v981
        %v986 = vpack.c.b16 %v984, %v983
        %v988 = vsel %vm932, %v985, 0
        %v991 = vsel %vm932, %v986, 0
        %993 = vmatpush.bf16.msra.mxu0 0
        %994 = vmatpush.bf16.msra.mxu0 0
        %995 = vmatpush.bf16.msra.mxu0 0
        %996 = vmatpush.bf16.msra.mxu0 0
        %997 = vmatpush.bf16.msra.mxu0 0
        %998 = vmatpush.bf16.msra.mxu0 0
        %999 = vmatpush.bf16.msra.mxu0 0
        %1000 = vmatpush.bf16.msra.mxu0 %v897
        %1001 = vmatmul.bf16.gmra.mxu0 %v988
        %v1002 = vpop.f32.mrf.mxu0
        %v1003 = vadd.f32 %v949, %v1002
        %v1004 = vpop.f32.mrf.mxu0
        %v1005 = vadd.f32 %v951, %v1004
        %1006 = vmatmul.bf16.gmra.mxu0 %v991
        %v1007 = vpop.f32.mrf.mxu0
        %v1008 = vadd.f32 %v954, %v1007
        %v1009 = vpop.f32.mrf.mxu0
        %v1010 = vadd.f32 %v956, %v1009
        %1011 = vdwg.mxu0
        %1012 = vmatpush.bf16.msra.mxu0 0
        %1013 = vmatpush.bf16.msra.mxu0 0
        %1014 = vmatpush.bf16.msra.mxu0 0
        %1015 = vmatpush.bf16.msra.mxu0 0
        %1016 = vmatpush.bf16.msra.mxu0 0
        %1017 = vmatpush.bf16.msra.mxu0 0
        %1018 = vmatpush.bf16.msra.mxu0 0
        %1019 = vmatpush.bf16.msra.mxu0 %v898
        %1020 = vmatmul.bf16.gmra.mxu0 %v988
        %v1021 = vpop.f32.mrf.mxu0
        %v1022 = vadd.f32 %v968, %v1021
        %v1023 = vpop.f32.mrf.mxu0
        %v1024 = vadd.f32 %v970, %v1023
        %1025 = vmatmul.bf16.gmra.mxu0 %v991
        %v1026 = vpop.f32.mrf.mxu0
        %v1027 = vadd.f32 %v973, %v1026
        %v1028 = vpop.f32.mrf.mxu0
        %v1029 = vadd.f32 %v975, %v1028
        %1030 = vdwg.mxu0
        %1031 = vrot.lane.b32.xlu0 %v873, 15
        %v1032 = vpop.permute.xlu0 %1031
        %1033 = vrot.lane.b32.xlu0 %v875, 15
        %v1034 = vpop.permute.xlu0 %1033
        %1035 = vrot.lane.b32.xlu0 %v874, 15
        %v1036 = vpop.permute.xlu0 %1035
        %1037 = vrot.lane.b32.xlu0 %v876, 15
        %v1038 = vpop.permute.xlu0 %1037
        %v1039 = vsel %vm426, %v1032, %v1036
        %v1040 = vsel %vm426, %v1034, %v1038
        %v1041 = vsel %vm426, %v1036, %v1032
        %v1042 = vsel %vm426, %v1038, %v1034
        %v1043 = vsel %vm431, %v1041, 0.0
        %v1044 = vsel %vm432, %v1039, 0.0
        %v1045 = vsel %vm431, %v1042, 0.0
        %v1046 = vsel %vm432, %v1040, 0.0
        %s1047 = scalar_lea.vmem %s3, 32
        %v1048 = vld [vmem:[%s1047] sm:$0xf]
        %v1049 = vld [vmem:[%s1047 + $0x4] sm:$0xf]
        %v1050 = vld [vmem:[%s1047 + $0x8] sm:$0xf]
        %v1051 = vld [vmem:[%s1047 + $0xc] sm:$0xf]
        %v1052 = vpack.c.bf16 %v1045, %v1043
        %v1053 = vpack.c.bf16 %v1046, %v1044
        %v1058 = vunpack.c.l.b16 %v1048
        %v1059 = vunpack.c.l.b16 %v1049
        %v1060 = vunpack.c.l.b16 %v1050
        %v1061 = vunpack.c.l.b16 %v1051
        %v1062 = vpack.c.b16 %v1059, %v1058
        %v1063 = vpack.c.b16 %v1061, %v1060
        %v1065 = vsel %vm932, %v1062, 0
        %v1068 = vsel %vm932, %v1063, 0
        %1070 = vmatpush.bf16.msra.mxu0 0
        %1071 = vmatpush.bf16.msra.mxu0 0
        %1072 = vmatpush.bf16.msra.mxu0 0
        %1073 = vmatpush.bf16.msra.mxu0 0
        %1074 = vmatpush.bf16.msra.mxu0 0
        %1075 = vmatpush.bf16.msra.mxu0 0
        %1076 = vmatpush.bf16.msra.mxu0 0
        %1077 = vmatpush.bf16.msra.mxu0 %v1052
        %1078 = vmatmul.bf16.gmra.mxu0 %v1065
        %v1079 = vpop.f32.mrf.mxu0
        %v1080 = vadd.f32 0.0, %v1079
        %v1081 = vpop.f32.mrf.mxu0
        %v1082 = vadd.f32 0.0, %v1081
        %1083 = vmatmul.bf16.gmra.mxu0 %v1068
        %v1084 = vpop.f32.mrf.mxu0
        %v1085 = vadd.f32 0.0, %v1084
        %v1086 = vpop.f32.mrf.mxu0
        %v1087 = vadd.f32 0.0, %v1086
        %1088 = vdwg.mxu0
        %1089 = vmatpush.bf16.msra.mxu0 0
        %1090 = vmatpush.bf16.msra.mxu0 0
        %1091 = vmatpush.bf16.msra.mxu0 0
        %1092 = vmatpush.bf16.msra.mxu0 0
        %1093 = vmatpush.bf16.msra.mxu0 0
        %1094 = vmatpush.bf16.msra.mxu0 0
        %1095 = vmatpush.bf16.msra.mxu0 0
        %1096 = vmatpush.bf16.msra.mxu0 %v1053
        %1097 = vmatmul.bf16.gmra.mxu0 %v1065
        %v1098 = vpop.f32.mrf.mxu0
        %v1099 = vadd.f32 0.0, %v1098
        %v1100 = vpop.f32.mrf.mxu0
        %v1101 = vadd.f32 0.0, %v1100
        %1102 = vmatmul.bf16.gmra.mxu0 %v1068
        %v1103 = vpop.f32.mrf.mxu0
        %v1104 = vadd.f32 0.0, %v1103
        %v1105 = vpop.f32.mrf.mxu0
        %v1106 = vadd.f32 0.0, %v1105
        %1107 = vdwg.mxu0
        %v1108 = vadd.f32 %v1003, %v1080
        %v1109 = vadd.f32 %v1022, %v1099
        %v1110 = vadd.f32 %v1005, %v1082
        %v1111 = vadd.f32 %v1024, %v1101
        %v1112 = vadd.f32 %v1008, %v1085
        %v1113 = vadd.f32 %v1027, %v1104
        %v1114 = vadd.f32 %v1010, %v1087
        %v1115 = vadd.f32 %v1029, %v1106
        %1116 = vrot.lane.b32.xlu0 %v873, 1
        %v1117 = vpop.permute.xlu0 %1116
        %1118 = vrot.lane.b32.xlu0 %v875, 1
        %v1119 = vpop.permute.xlu0 %1118
        %1120 = vrot.lane.b32.xlu0 %v874, 1
        %v1121 = vpop.permute.xlu0 %1120
        %1122 = vrot.lane.b32.xlu0 %v876, 1
        %v1123 = vpop.permute.xlu0 %1122
        %v1124 = vsel %vm490, %v1117, %v1121
        %v1125 = vsel %vm490, %v1119, %v1123
        %v1126 = vsel %vm490, %v1121, %v1117
        %v1127 = vsel %vm490, %v1123, %v1119
        %v1128 = vsel %vm495, %v1126, 0.0
        %v1129 = vsel %vm496, %v1124, 0.0
        %v1130 = vsel %vm495, %v1127, 0.0
        %v1131 = vsel %vm496, %v1125, 0.0
        %s1132 = scalar_lea.vmem %s3, 48
        %v1133 = vld [vmem:[%s1132] sm:$0xf]
        %v1134 = vld [vmem:[%s1132 + $0x4] sm:$0xf]
        %v1135 = vld [vmem:[%s1132 + $0x8] sm:$0xf]
        %v1136 = vld [vmem:[%s1132 + $0xc] sm:$0xf]
        %v1137 = vpack.c.bf16 %v1130, %v1128
        %v1138 = vpack.c.bf16 %v1131, %v1129
        %v1143 = vunpack.c.l.b16 %v1133
        %v1144 = vunpack.c.l.b16 %v1134
        %v1145 = vunpack.c.l.b16 %v1135
        %v1146 = vunpack.c.l.b16 %v1136
        %v1147 = vpack.c.b16 %v1144, %v1143
        %v1148 = vpack.c.b16 %v1146, %v1145
        %v1150 = vsel %vm932, %v1147, 0
        %v1153 = vsel %vm932, %v1148, 0
        %1155 = vmatpush.bf16.msra.mxu0 0
        %1156 = vmatpush.bf16.msra.mxu0 0
        %1157 = vmatpush.bf16.msra.mxu0 0
        %1158 = vmatpush.bf16.msra.mxu0 0
        %1159 = vmatpush.bf16.msra.mxu0 0
        %1160 = vmatpush.bf16.msra.mxu0 0
        %1161 = vmatpush.bf16.msra.mxu0 0
        %1162 = vmatpush.bf16.msra.mxu0 %v1137
        %1163 = vmatmul.bf16.gmra.mxu0 %v1150
        %v1164 = vpop.f32.mrf.mxu0
        %v1165 = vadd.f32 0.0, %v1164
        %v1166 = vpop.f32.mrf.mxu0
        %v1167 = vadd.f32 0.0, %v1166
        %1168 = vmatmul.bf16.gmra.mxu0 %v1153
        %v1169 = vpop.f32.mrf.mxu0
        %v1170 = vadd.f32 0.0, %v1169
        %v1171 = vpop.f32.mrf.mxu0
        %v1172 = vadd.f32 0.0, %v1171
        %1173 = vdwg.mxu0
        %1174 = vmatpush.bf16.msra.mxu0 0
        %1175 = vmatpush.bf16.msra.mxu0 0
        %1176 = vmatpush.bf16.msra.mxu0 0
        %1177 = vmatpush.bf16.msra.mxu0 0
        %1178 = vmatpush.bf16.msra.mxu0 0
        %1179 = vmatpush.bf16.msra.mxu0 0
        %1180 = vmatpush.bf16.msra.mxu0 0
        %1181 = vmatpush.bf16.msra.mxu0 %v1138
        %1182 = vmatmul.bf16.gmra.mxu0 %v1150
        %v1183 = vpop.f32.mrf.mxu0
        %v1184 = vadd.f32 0.0, %v1183
        %v1185 = vpop.f32.mrf.mxu0
        %v1186 = vadd.f32 0.0, %v1185
        %1187 = vmatmul.bf16.gmra.mxu0 %v1153
        %v1188 = vpop.f32.mrf.mxu0
        %v1189 = vadd.f32 0.0, %v1188
        %v1190 = vpop.f32.mrf.mxu0
        %v1191 = vadd.f32 0.0, %v1190
        %1192 = vdwg.mxu0
        %v1193 = vadd.f32 %v1108, %v1165
        %v1194 = vadd.f32 %v1109, %v1184
        %v1195 = vadd.f32 %v1110, %v1167
        %v1196 = vadd.f32 %v1111, %v1186
        %v1197 = vadd.f32 %v1112, %v1170
        %v1198 = vadd.f32 %v1113, %v1189
        %v1199 = vadd.f32 %v1114, %v1172
        %v1200 = vadd.f32 %v1115, %v1191
        %s1201 = scalar_lea.vmem %s3, 64
        %v1202 = vld [vmem:[%s1201] sm:$0xf]
        %v1203 = vld [vmem:[%s1201 + $0x4] sm:$0xf]
        %v1204 = vld [vmem:[%s1201 + $0x8] sm:$0xf]
        %v1205 = vld [vmem:[%s1201 + $0xc] sm:$0xf]
        %v1206 = vpack.c.bf16 %v875, %v873
        %v1207 = vpack.c.bf16 %v876, %v874
        %v1212 = vunpack.c.l.b16 %v1202
        %v1213 = vunpack.c.l.b16 %v1203
        %v1214 = vunpack.c.l.b16 %v1204
        %v1215 = vunpack.c.l.b16 %v1205
        %v1216 = vpack.c.b16 %v1213, %v1212
        %v1217 = vpack.c.b16 %v1215, %v1214
        %v1219 = vsel %vm932, %v1216, 0
        %v1222 = vsel %vm932, %v1217, 0
        %1224 = vmatpush.bf16.msra.mxu0 0
        %1225 = vmatpush.bf16.msra.mxu0 0
        %1226 = vmatpush.bf16.msra.mxu0 0
        %1227 = vmatpush.bf16.msra.mxu0 0
        %1228 = vmatpush.bf16.msra.mxu0 0
        %1229 = vmatpush.bf16.msra.mxu0 0
        %1230 = vmatpush.bf16.msra.mxu0 0
        %1231 = vmatpush.bf16.msra.mxu0 %v1206
        %1232 = vmatmul.bf16.gmra.mxu0 %v1219
        %v1233 = vpop.f32.mrf.mxu0
        %v1234 = vadd.f32 0.0, %v1233
        %v1235 = vpop.f32.mrf.mxu0
        %v1236 = vadd.f32 0.0, %v1235
        %1237 = vmatmul.bf16.gmra.mxu0 %v1222
        %v1238 = vpop.f32.mrf.mxu0
        %v1239 = vadd.f32 0.0, %v1238
        %v1240 = vpop.f32.mrf.mxu0
        %v1241 = vadd.f32 0.0, %v1240
        %1242 = vdwg.mxu0
        %1243 = vmatpush.bf16.msra.mxu0 0
        %1244 = vmatpush.bf16.msra.mxu0 0
        %1245 = vmatpush.bf16.msra.mxu0 0
        %1246 = vmatpush.bf16.msra.mxu0 0
        %1247 = vmatpush.bf16.msra.mxu0 0
        %1248 = vmatpush.bf16.msra.mxu0 0
        %1249 = vmatpush.bf16.msra.mxu0 0
        %1250 = vmatpush.bf16.msra.mxu0 %v1207
        %1251 = vmatmul.bf16.gmra.mxu0 %v1219
        %v1252 = vpop.f32.mrf.mxu0
        %v1253 = vadd.f32 0.0, %v1252
        %v1254 = vpop.f32.mrf.mxu0
        %v1255 = vadd.f32 0.0, %v1254
        %1256 = vmatmul.bf16.gmra.mxu0 %v1222
        %v1257 = vpop.f32.mrf.mxu0
        %v1258 = vadd.f32 0.0, %v1257
        %v1259 = vpop.f32.mrf.mxu0
        %v1260 = vadd.f32 0.0, %v1259
        %1261 = vdwg.mxu0
        %v1262 = vadd.f32 %v1193, %v1234
        %v1263 = vadd.f32 %v1194, %v1253
        %v1264 = vadd.f32 %v1195, %v1236
        %v1265 = vadd.f32 %v1196, %v1255
        %v1266 = vadd.f32 %v1197, %v1239
        %v1267 = vadd.f32 %v1198, %v1258
        %v1268 = vadd.f32 %v1199, %v1241
        %v1269 = vadd.f32 %v1200, %v1260
        %1270 = vrot.lane.b32.xlu0 %v873, 127
        %v1271 = vpop.permute.xlu0 %1270
        %1272 = vrot.lane.b32.xlu0 %v875, 127
        %v1273 = vpop.permute.xlu0 %1272
        %1274 = vrot.lane.b32.xlu0 %v874, 127
        %v1275 = vpop.permute.xlu0 %1274
        %1276 = vrot.lane.b32.xlu0 %v876, 127
        %v1277 = vpop.permute.xlu0 %1276
        %v1278 = vsel %vm605, %v1271, %v1275
        %v1279 = vsel %vm605, %v1273, %v1277
        %v1280 = vsel %vm605, %v1275, %v1271
        %v1281 = vsel %vm605, %v1277, %v1273
        %v1282 = vsel %vm610, %v1278, 0.0
        %v1283 = vsel %vm611, %v1280, 0.0
        %v1284 = vsel %vm610, %v1279, 0.0
        %v1285 = vsel %vm611, %v1281, 0.0
        %s1286 = scalar_lea.vmem %s3, 80
        %v1287 = vld [vmem:[%s1286] sm:$0xf]
        %v1288 = vld [vmem:[%s1286 + $0x4] sm:$0xf]
        %v1289 = vld [vmem:[%s1286 + $0x8] sm:$0xf]
        %v1290 = vld [vmem:[%s1286 + $0xc] sm:$0xf]
        %v1291 = vpack.c.bf16 %v1284, %v1282
        %v1292 = vpack.c.bf16 %v1285, %v1283
        %v1297 = vunpack.c.l.b16 %v1287
        %v1298 = vunpack.c.l.b16 %v1288
        %v1299 = vunpack.c.l.b16 %v1289
        %v1300 = vunpack.c.l.b16 %v1290
        %v1301 = vpack.c.b16 %v1298, %v1297
        %v1302 = vpack.c.b16 %v1300, %v1299
        %v1304 = vsel %vm932, %v1301, 0
        %v1307 = vsel %vm932, %v1302, 0
        %1309 = vmatpush.bf16.msra.mxu0 0
        %1310 = vmatpush.bf16.msra.mxu0 0
        %1311 = vmatpush.bf16.msra.mxu0 0
        %1312 = vmatpush.bf16.msra.mxu0 0
        %1313 = vmatpush.bf16.msra.mxu0 0
        %1314 = vmatpush.bf16.msra.mxu0 0
        %1315 = vmatpush.bf16.msra.mxu0 0
        %1316 = vmatpush.bf16.msra.mxu0 %v1291
        %1317 = vmatmul.bf16.gmra.mxu0 %v1304
        %v1318 = vpop.f32.mrf.mxu0
        %v1319 = vadd.f32 0.0, %v1318
        %v1320 = vpop.f32.mrf.mxu0
        %v1321 = vadd.f32 0.0, %v1320
        %1322 = vmatmul.bf16.gmra.mxu0 %v1307
        %v1323 = vpop.f32.mrf.mxu0
        %v1324 = vadd.f32 0.0, %v1323
        %v1325 = vpop.f32.mrf.mxu0
        %v1326 = vadd.f32 0.0, %v1325
        %1327 = vdwg.mxu0
        %1328 = vmatpush.bf16.msra.mxu0 0
        %1329 = vmatpush.bf16.msra.mxu0 0
        %1330 = vmatpush.bf16.msra.mxu0 0
        %1331 = vmatpush.bf16.msra.mxu0 0
        %1332 = vmatpush.bf16.msra.mxu0 0
        %1333 = vmatpush.bf16.msra.mxu0 0
        %1334 = vmatpush.bf16.msra.mxu0 0
        %1335 = vmatpush.bf16.msra.mxu0 %v1292
        %1336 = vmatmul.bf16.gmra.mxu0 %v1304
        %v1337 = vpop.f32.mrf.mxu0
        %v1338 = vadd.f32 0.0, %v1337
        %v1339 = vpop.f32.mrf.mxu0
        %v1340 = vadd.f32 0.0, %v1339
        %1341 = vmatmul.bf16.gmra.mxu0 %v1307
        %v1342 = vpop.f32.mrf.mxu0
        %v1343 = vadd.f32 0.0, %v1342
        %v1344 = vpop.f32.mrf.mxu0
        %v1345 = vadd.f32 0.0, %v1344
        %1346 = vdwg.mxu0
        %v1347 = vadd.f32 %v1262, %v1319
        %v1348 = vadd.f32 %v1263, %v1338
        %v1349 = vadd.f32 %v1264, %v1321
        %v1350 = vadd.f32 %v1265, %v1340
        %v1351 = vadd.f32 %v1266, %v1324
        %v1352 = vadd.f32 %v1267, %v1343
        %v1353 = vadd.f32 %v1268, %v1326
        %v1354 = vadd.f32 %v1269, %v1345
        %1355 = vrot.lane.b32.xlu0 %v873, 113
        %v1356 = vpop.permute.xlu0 %1355
        %1357 = vrot.lane.b32.xlu0 %v875, 113
        %v1358 = vpop.permute.xlu0 %1357
        %1359 = vrot.lane.b32.xlu0 %v874, 113
        %v1360 = vpop.permute.xlu0 %1359
        %1361 = vrot.lane.b32.xlu0 %v876, 113
        %v1362 = vpop.permute.xlu0 %1361
        %v1363 = vsel %vm669, %v1356, %v1360
        %v1364 = vsel %vm669, %v1358, %v1362
        %v1365 = vsel %vm669, %v1360, %v1356
        %v1366 = vsel %vm669, %v1362, %v1358
        %v1367 = vsel %vm674, %v1363, 0.0
        %v1368 = vsel %vm675, %v1365, 0.0
        %v1369 = vsel %vm674, %v1364, 0.0
        %v1370 = vsel %vm675, %v1366, 0.0
        %s1371 = scalar_lea.vmem %s3, 96
        %v1372 = vld [vmem:[%s1371] sm:$0xf]
        %v1373 = vld [vmem:[%s1371 + $0x4] sm:$0xf]
        %v1374 = vld [vmem:[%s1371 + $0x8] sm:$0xf]
        %v1375 = vld [vmem:[%s1371 + $0xc] sm:$0xf]
        %v1376 = vpack.c.bf16 %v1369, %v1367
        %v1377 = vpack.c.bf16 %v1370, %v1368
        %v1382 = vunpack.c.l.b16 %v1372
        %v1383 = vunpack.c.l.b16 %v1373
        %v1384 = vunpack.c.l.b16 %v1374
        %v1385 = vunpack.c.l.b16 %v1375
        %v1386 = vpack.c.b16 %v1383, %v1382
        %v1387 = vpack.c.b16 %v1385, %v1384
        %v1389 = vsel %vm932, %v1386, 0
        %v1392 = vsel %vm932, %v1387, 0
        %1394 = vmatpush.bf16.msra.mxu0 0
        %1395 = vmatpush.bf16.msra.mxu0 0
        %1396 = vmatpush.bf16.msra.mxu0 0
        %1397 = vmatpush.bf16.msra.mxu0 0
        %1398 = vmatpush.bf16.msra.mxu0 0
        %1399 = vmatpush.bf16.msra.mxu0 0
        %1400 = vmatpush.bf16.msra.mxu0 0
        %1401 = vmatpush.bf16.msra.mxu0 %v1376
        %1402 = vmatmul.bf16.gmra.mxu0 %v1389
        %v1403 = vpop.f32.mrf.mxu0
        %v1404 = vadd.f32 0.0, %v1403
        %v1405 = vpop.f32.mrf.mxu0
        %v1406 = vadd.f32 0.0, %v1405
        %1407 = vmatmul.bf16.gmra.mxu0 %v1392
        %v1408 = vpop.f32.mrf.mxu0
        %v1409 = vadd.f32 0.0, %v1408
        %v1410 = vpop.f32.mrf.mxu0
        %v1411 = vadd.f32 0.0, %v1410
        %1412 = vdwg.mxu0
        %1413 = vmatpush.bf16.msra.mxu0 0
        %1414 = vmatpush.bf16.msra.mxu0 0
        %1415 = vmatpush.bf16.msra.mxu0 0
        %1416 = vmatpush.bf16.msra.mxu0 0
        %1417 = vmatpush.bf16.msra.mxu0 0
        %1418 = vmatpush.bf16.msra.mxu0 0
        %1419 = vmatpush.bf16.msra.mxu0 0
        %1420 = vmatpush.bf16.msra.mxu0 %v1377
        %1421 = vmatmul.bf16.gmra.mxu0 %v1389
        %v1422 = vpop.f32.mrf.mxu0
        %v1423 = vadd.f32 0.0, %v1422
        %v1424 = vpop.f32.mrf.mxu0
        %v1425 = vadd.f32 0.0, %v1424
        %1426 = vmatmul.bf16.gmra.mxu0 %v1392
        %v1427 = vpop.f32.mrf.mxu0
        %v1428 = vadd.f32 0.0, %v1427
        %v1429 = vpop.f32.mrf.mxu0
        %v1430 = vadd.f32 0.0, %v1429
        %1431 = vdwg.mxu0
        %v1432 = vadd.f32 %v1347, %v1404
        %v1433 = vadd.f32 %v1348, %v1423
        %v1434 = vadd.f32 %v1349, %v1406
        %v1435 = vadd.f32 %v1350, %v1425
        %v1436 = vadd.f32 %v1351, %v1409
        %v1437 = vadd.f32 %v1352, %v1428
        %v1438 = vadd.f32 %v1353, %v1411
        %v1439 = vadd.f32 %v1354, %v1430
        %1440 = vrot.lane.b32.xlu0 %v873, 112
        %v1441 = vpop.permute.xlu0 %1440
        %1442 = vrot.lane.b32.xlu0 %v875, 112
        %v1443 = vpop.permute.xlu0 %1442
        %1444 = vrot.lane.b32.xlu0 %v874, 112
        %v1445 = vpop.permute.xlu0 %1444
        %1446 = vrot.lane.b32.xlu0 %v876, 112
        %v1447 = vpop.permute.xlu0 %1446
        %v1448 = vsel %vm733, %v1441, %v1445
        %v1449 = vsel %vm733, %v1443, %v1447
        %v1450 = vsel %vm733, %v1445, %v1441
        %v1451 = vsel %vm733, %v1447, %v1443
        %v1452 = vsel %vm738, %v1448, 0.0
        %v1453 = vsel %vm739, %v1450, 0.0
        %v1454 = vsel %vm738, %v1449, 0.0
        %v1455 = vsel %vm739, %v1451, 0.0
        %s1456 = scalar_lea.vmem %s3, 112
        %v1457 = vld [vmem:[%s1456] sm:$0xf]
        %v1458 = vld [vmem:[%s1456 + $0x4] sm:$0xf]
        %v1459 = vld [vmem:[%s1456 + $0x8] sm:$0xf]
        %v1460 = vld [vmem:[%s1456 + $0xc] sm:$0xf]
        %v1461 = vpack.c.bf16 %v1454, %v1452
        %v1462 = vpack.c.bf16 %v1455, %v1453
        %v1467 = vunpack.c.l.b16 %v1457
        %v1468 = vunpack.c.l.b16 %v1458
        %v1469 = vunpack.c.l.b16 %v1459
        %v1470 = vunpack.c.l.b16 %v1460
        %v1471 = vpack.c.b16 %v1468, %v1467
        %v1472 = vpack.c.b16 %v1470, %v1469
        %v1474 = vsel %vm932, %v1471, 0
        %v1477 = vsel %vm932, %v1472, 0
        %1479 = vmatpush.bf16.msra.mxu0 0
        %1480 = vmatpush.bf16.msra.mxu0 0
        %1481 = vmatpush.bf16.msra.mxu0 0
        %1482 = vmatpush.bf16.msra.mxu0 0
        %1483 = vmatpush.bf16.msra.mxu0 0
        %1484 = vmatpush.bf16.msra.mxu0 0
        %1485 = vmatpush.bf16.msra.mxu0 0
        %1486 = vmatpush.bf16.msra.mxu0 %v1461
        %1487 = vmatmul.bf16.gmra.mxu0 %v1474
        %v1488 = vpop.f32.mrf.mxu0
        %v1489 = vadd.f32 0.0, %v1488
        %v1490 = vpop.f32.mrf.mxu0
        %v1491 = vadd.f32 0.0, %v1490
        %1492 = vmatmul.bf16.gmra.mxu0 %v1477
        %v1493 = vpop.f32.mrf.mxu0
        %v1494 = vadd.f32 0.0, %v1493
        %v1495 = vpop.f32.mrf.mxu0
        %v1496 = vadd.f32 0.0, %v1495
        %1497 = vdwg.mxu0
        %1498 = vmatpush.bf16.msra.mxu0 0
        %1499 = vmatpush.bf16.msra.mxu0 0
        %1500 = vmatpush.bf16.msra.mxu0 0
        %1501 = vmatpush.bf16.msra.mxu0 0
        %1502 = vmatpush.bf16.msra.mxu0 0
        %1503 = vmatpush.bf16.msra.mxu0 0
        %1504 = vmatpush.bf16.msra.mxu0 0
        %1505 = vmatpush.bf16.msra.mxu0 %v1462
        %1506 = vmatmul.bf16.gmra.mxu0 %v1474
        %v1507 = vpop.f32.mrf.mxu0
        %v1508 = vadd.f32 0.0, %v1507
        %v1509 = vpop.f32.mrf.mxu0
        %v1510 = vadd.f32 0.0, %v1509
        %1511 = vmatmul.bf16.gmra.mxu0 %v1477
        %v1512 = vpop.f32.mrf.mxu0
        %v1513 = vadd.f32 0.0, %v1512
        %v1514 = vpop.f32.mrf.mxu0
        %v1515 = vadd.f32 0.0, %v1514
        %1516 = vdwg.mxu0
        %v1517 = vadd.f32 %v1432, %v1489
        %v1518 = vadd.f32 %v1433, %v1508
        %v1519 = vadd.f32 %v1434, %v1491
        %v1520 = vadd.f32 %v1435, %v1510
        %v1521 = vadd.f32 %v1436, %v1494
        %v1522 = vadd.f32 %v1437, %v1513
        %v1523 = vadd.f32 %v1438, %v1496
        %v1524 = vadd.f32 %v1439, %v1515
        %1525 = vrot.lane.b32.xlu0 %v873, 111
        %v1526 = vpop.permute.xlu0 %1525
        %1527 = vrot.lane.b32.xlu0 %v875, 111
        %v1528 = vpop.permute.xlu0 %1527
        %1529 = vrot.lane.b32.xlu0 %v874, 111
        %v1530 = vpop.permute.xlu0 %1529
        %1531 = vrot.lane.b32.xlu0 %v876, 111
        %v1532 = vpop.permute.xlu0 %1531
        %v1533 = vsel %vm797, %v1526, %v1530
        %v1534 = vsel %vm797, %v1528, %v1532
        %v1535 = vsel %vm797, %v1530, %v1526
        %v1536 = vsel %vm797, %v1532, %v1528
        %v1537 = vsel %vm802, %v1533, 0.0
        %v1538 = vsel %vm803, %v1535, 0.0
        %v1539 = vsel %vm802, %v1534, 0.0
        %v1540 = vsel %vm803, %v1536, 0.0
        %s1541 = scalar_lea.vmem %s3, 128
        %v1542 = vld [vmem:[%s1541] sm:$0xf]
        %v1543 = vld [vmem:[%s1541 + $0x4] sm:$0xf]
        %v1544 = vld [vmem:[%s1541 + $0x8] sm:$0xf]
        %v1545 = vld [vmem:[%s1541 + $0xc] sm:$0xf]
        %v1546 = vpack.c.bf16 %v1539, %v1537
        %v1547 = vpack.c.bf16 %v1540, %v1538
        %v1552 = vunpack.c.l.b16 %v1542
        %v1553 = vunpack.c.l.b16 %v1543
        %v1554 = vunpack.c.l.b16 %v1544
        %v1555 = vunpack.c.l.b16 %v1545
        %v1556 = vpack.c.b16 %v1553, %v1552
        %v1557 = vpack.c.b16 %v1555, %v1554
        %v1559 = vsel %vm932, %v1556, 0
        %v1562 = vsel %vm932, %v1557, 0
        %1564 = vmatpush.bf16.msra.mxu0 0
        %1565 = vmatpush.bf16.msra.mxu0 0
        %1566 = vmatpush.bf16.msra.mxu0 0
        %1567 = vmatpush.bf16.msra.mxu0 0
        %1568 = vmatpush.bf16.msra.mxu0 0
        %1569 = vmatpush.bf16.msra.mxu0 0
        %1570 = vmatpush.bf16.msra.mxu0 0
        %1571 = vmatpush.bf16.msra.mxu0 %v1546
        %1572 = vmatmul.bf16.gmra.mxu0 %v1559
        %v1573 = vpop.f32.mrf.mxu0
        %v1574 = vadd.f32 0.0, %v1573
        %v1575 = vpop.f32.mrf.mxu0
        %v1576 = vadd.f32 0.0, %v1575
        %1577 = vmatmul.bf16.gmra.mxu0 %v1562
        %v1578 = vpop.f32.mrf.mxu0
        %v1579 = vadd.f32 0.0, %v1578
        %v1580 = vpop.f32.mrf.mxu0
        %v1581 = vadd.f32 0.0, %v1580
        %1582 = vdwg.mxu0
        %1583 = vmatpush.bf16.msra.mxu0 0
        %1584 = vmatpush.bf16.msra.mxu0 0
        %1585 = vmatpush.bf16.msra.mxu0 0
        %1586 = vmatpush.bf16.msra.mxu0 0
        %1587 = vmatpush.bf16.msra.mxu0 0
        %1588 = vmatpush.bf16.msra.mxu0 0
        %1589 = vmatpush.bf16.msra.mxu0 0
        %1590 = vmatpush.bf16.msra.mxu0 %v1547
        %1591 = vmatmul.bf16.gmra.mxu0 %v1559
        %v1592 = vpop.f32.mrf.mxu0
        %v1593 = vadd.f32 0.0, %v1592
        %v1594 = vpop.f32.mrf.mxu0
        %v1595 = vadd.f32 0.0, %v1594
        %1596 = vmatmul.bf16.gmra.mxu0 %v1562
        %v1597 = vpop.f32.mrf.mxu0
        %v1598 = vadd.f32 0.0, %v1597
        %v1599 = vpop.f32.mrf.mxu0
        %v1600 = vadd.f32 0.0, %v1599
        %1601 = vdwg.mxu0
        %v1602 = vadd.f32 %v1517, %v1574
        %v1603 = vadd.f32 %v1518, %v1593
        %v1604 = vadd.f32 %v1519, %v1576
        %v1605 = vadd.f32 %v1520, %v1595
        %v1606 = vadd.f32 %v1521, %v1579
        %v1607 = vadd.f32 %v1522, %v1598
        %v1608 = vadd.f32 %v1523, %v1581
        %v1609 = vadd.f32 %v1524, %v1600
        %v1610 = vld [vmem:[%s4] sm:$0xff]
        %v1611 = vld [vmem:[%s4 + $0x8] sm:$0xff]
        %v1612 = vld [vmem:[%s4 + $0x10] sm:$0xff]
        %v1613 = vld [vmem:[%s4 + $0x18] sm:$0xff]
        %1615 = vset.pattern.permute.xlu0 0
        %1616 = vperm.xlu0 %1615, %v1610
        %v1617 = vpop.permute.xlu0 %1616
        %1620 = vset.pattern.permute.xlu0 0
        %1621 = vperm.xlu0 %1620, %v1611
        %v1622 = vpop.permute.xlu0 %1621
        %1625 = vset.pattern.permute.xlu0 0
        %1626 = vperm.xlu0 %1625, %v1612
        %v1627 = vpop.permute.xlu0 %1626
        %1630 = vset.pattern.permute.xlu0 0
        %1631 = vperm.xlu0 %1630, %v1613
        %v1632 = vpop.permute.xlu0 %1631
        %v1634 = vadd.f32 %v1602, %v1617
        %v1635 = vadd.f32 %v1603, %v1617
        %v1636 = vadd.f32 %v1604, %v1622
        %v1637 = vadd.f32 %v1605, %v1622
        %v1638 = vadd.f32 %v1606, %v1627
        %v1639 = vadd.f32 %v1607, %v1627
        %v1640 = vadd.f32 %v1608, %v1632
        %v1641 = vadd.f32 %v1609, %v1632
        %v1642 = vmax.f32 %v1634, 0.0
        %v1643 = vmax.f32 %v1635, 0.0
        %v1644 = vmax.f32 %v1636, 0.0
        %v1645 = vmax.f32 %v1637, 0.0
        %v1646 = vmax.f32 %v1638, 0.0
        %v1647 = vmax.f32 %v1639, 0.0
        %v1648 = vmax.f32 %v1640, 0.0
        %v1649 = vmax.f32 %v1641, 0.0
        %1650 = vrot.lane.b32.xlu0 %v1642, 17
        %v1651 = vpop.permute.xlu0 %1650
        %1652 = vrot.lane.b32.xlu0 %v1644, 17
        %v1653 = vpop.permute.xlu0 %1652
        %1654 = vrot.lane.b32.xlu0 %v1646, 17
        %v1655 = vpop.permute.xlu0 %1654
        %1656 = vrot.lane.b32.xlu0 %v1648, 17
        %v1657 = vpop.permute.xlu0 %1656
        %1658 = vrot.lane.b32.xlu0 %v1643, 17
        %v1659 = vpop.permute.xlu0 %1658
        %1660 = vrot.lane.b32.xlu0 %v1645, 17
        %v1661 = vpop.permute.xlu0 %1660
        %1662 = vrot.lane.b32.xlu0 %v1647, 17
        %v1663 = vpop.permute.xlu0 %1662
        %1664 = vrot.lane.b32.xlu0 %v1649, 17
        %v1665 = vpop.permute.xlu0 %1664
        %v1666 = vsel %vm305, %v1651, %v1659
        %v1667 = vsel %vm305, %v1653, %v1661
        %v1668 = vsel %vm305, %v1655, %v1663
        %v1669 = vsel %vm305, %v1657, %v1665
        %v1670 = vsel %vm305, %v1659, %v1651
        %v1671 = vsel %vm305, %v1661, %v1653
        %v1672 = vsel %vm305, %v1663, %v1655
        %v1673 = vsel %vm305, %v1665, %v1657
        %v1674 = vsel %vm310, %v1670, 0.0
        %v1675 = vsel %vm311, %v1666, 0.0
        %v1676 = vsel %vm310, %v1671, 0.0
        %v1677 = vsel %vm311, %v1667, 0.0
        %v1678 = vsel %vm310, %v1672, 0.0
        %v1679 = vsel %vm311, %v1668, 0.0
        %v1680 = vsel %vm310, %v1673, 0.0
        %v1681 = vsel %vm311, %v1669, 0.0
        %v1682 = vld [vmem:[%s5] sm:$0xf]
        %v1683 = vld [vmem:[%s5 + $0x4] sm:$0xf]
        %v1684 = vld [vmem:[%s5 + $0x8] sm:$0xf]
        %v1685 = vld [vmem:[%s5 + $0xc] sm:$0xf]
        %v1686 = vld [vmem:[%s5 + $0x10] sm:$0xf]
        %v1687 = vld [vmem:[%s5 + $0x14] sm:$0xf]
        %v1688 = vld [vmem:[%s5 + $0x18] sm:$0xf]
        %v1689 = vld [vmem:[%s5 + $0x1c] sm:$0xf]
        %v1690 = vpack.c.bf16 %v1676, %v1674
        %v1691 = vpack.c.bf16 %v1677, %v1675
        %v1692 = vpack.c.bf16 %v1680, %v1678
        %v1693 = vpack.c.bf16 %v1681, %v1679
        %1694 = vrot.lane.b32.xlu0 %v1642, 16
        %v1695 = vpop.permute.xlu0 %1694
        %1696 = vrot.lane.b32.xlu0 %v1644, 16
        %v1697 = vpop.permute.xlu0 %1696
        %1698 = vrot.lane.b32.xlu0 %v1646, 16
        %v1699 = vpop.permute.xlu0 %1698
        %1700 = vrot.lane.b32.xlu0 %v1648, 16
        %v1701 = vpop.permute.xlu0 %1700
        %1702 = vrot.lane.b32.xlu0 %v1643, 16
        %v1703 = vpop.permute.xlu0 %1702
        %1704 = vrot.lane.b32.xlu0 %v1645, 16
        %v1705 = vpop.permute.xlu0 %1704
        %1706 = vrot.lane.b32.xlu0 %v1647, 16
        %v1707 = vpop.permute.xlu0 %1706
        %1708 = vrot.lane.b32.xlu0 %v1649, 16
        %v1709 = vpop.permute.xlu0 %1708
        %v1710 = vsel %vm322, %v1695, %v1703
        %v1711 = vsel %vm322, %v1697, %v1705
        %v1712 = vsel %vm322, %v1699, %v1707
        %v1713 = vsel %vm322, %v1701, %v1709
        %v1714 = vsel %vm322, %v1703, %v1695
        %v1715 = vsel %vm322, %v1705, %v1697
        %v1716 = vsel %vm322, %v1707, %v1699
        %v1717 = vsel %vm322, %v1709, %v1701
        %v1718 = vsel %vm327, %v1714, 0.0
        %v1719 = vsel %vm328, %v1710, 0.0
        %v1720 = vsel %vm327, %v1715, 0.0
        %v1721 = vsel %vm328, %v1711, 0.0
        %v1722 = vsel %vm327, %v1716, 0.0
        %v1723 = vsel %vm328, %v1712, 0.0
        %v1724 = vsel %vm327, %v1717, 0.0
        %v1725 = vsel %vm328, %v1713, 0.0
        %s1726 = scalar_lea.vmem %s5, 32
        %v1727 = vld [vmem:[%s1726] sm:$0xf]
        %v1728 = vld [vmem:[%s1726 + $0x4] sm:$0xf]
        %v1729 = vld [vmem:[%s1726 + $0x8] sm:$0xf]
        %v1730 = vld [vmem:[%s1726 + $0xc] sm:$0xf]
        %v1731 = vld [vmem:[%s1726 + $0x10] sm:$0xf]
        %v1732 = vld [vmem:[%s1726 + $0x14] sm:$0xf]
        %v1733 = vld [vmem:[%s1726 + $0x18] sm:$0xf]
        %v1734 = vld [vmem:[%s1726 + $0x1c] sm:$0xf]
        %v1735 = vpack.c.bf16 %v1720, %v1718
        %v1736 = vpack.c.bf16 %v1721, %v1719
        %v1737 = vpack.c.bf16 %v1724, %v1722
        %v1738 = vpack.c.bf16 %v1725, %v1723
        %v1747 = vunpack.c.l.b16 %v1727
        %v1748 = vunpack.c.l.b16 %v1728
        %v1749 = vunpack.c.l.b16 %v1729
        %v1750 = vunpack.c.l.b16 %v1730
        %v1751 = vunpack.c.l.b16 %v1731
        %v1752 = vunpack.c.l.b16 %v1732
        %v1753 = vunpack.c.l.b16 %v1733
        %v1754 = vunpack.c.l.b16 %v1734
        %v1755 = vpack.c.b16 %v1748, %v1747
        %v1756 = vpack.c.b16 %v1750, %v1749
        %v1757 = vpack.c.b16 %v1752, %v1751
        %v1758 = vpack.c.b16 %v1754, %v1753
        %vm1759 = vcmask 261120
        %v1761 = vsel %vm1759, %v1755, 0
        %v1764 = vsel %vm1759, %v1756, 0
        %v1767 = vsel %vm1759, %v1757, 0
        %v1770 = vsel %vm1759, %v1758, 0
        %1772 = vmatpush.bf16.msra.mxu0 0
        %1773 = vmatpush.bf16.msra.mxu0 0
        %1774 = vmatpush.bf16.msra.mxu0 0
        %1775 = vmatpush.bf16.msra.mxu0 0
        %1776 = vmatpush.bf16.msra.mxu0 0
        %1777 = vmatpush.bf16.msra.mxu0 0
        %1778 = vmatpush.bf16.msra.mxu0 %v1737
        %1779 = vmatpush.bf16.msra.mxu0 %v1735
        %1780 = vmatmul.bf16.gmra.mxu0 %v1761
        %v1781 = vpop.f32.mrf.mxu0
        %v1782 = vadd.f32 0.0, %v1781
        %v1783 = vpop.f32.mrf.mxu0
        %v1784 = vadd.f32 0.0, %v1783
        %1785 = vmatmul.bf16.gmra.mxu0 %v1764
        %v1786 = vpop.f32.mrf.mxu0
        %v1787 = vadd.f32 0.0, %v1786
        %v1788 = vpop.f32.mrf.mxu0
        %v1789 = vadd.f32 0.0, %v1788
        %1790 = vmatmul.bf16.gmra.mxu0 %v1767
        %v1791 = vpop.f32.mrf.mxu0
        %v1792 = vadd.f32 0.0, %v1791
        %v1793 = vpop.f32.mrf.mxu0
        %v1794 = vadd.f32 0.0, %v1793
        %1795 = vmatmul.bf16.gmra.mxu0 %v1770
        %v1796 = vpop.f32.mrf.mxu0
        %v1797 = vadd.f32 0.0, %v1796
        %v1798 = vpop.f32.mrf.mxu0
        %v1799 = vadd.f32 0.0, %v1798
        %1800 = vdwg.mxu0
        %1801 = vmatpush.bf16.msra.mxu0 0
        %1802 = vmatpush.bf16.msra.mxu0 0
        %1803 = vmatpush.bf16.msra.mxu0 0
        %1804 = vmatpush.bf16.msra.mxu0 0
        %1805 = vmatpush.bf16.msra.mxu0 0
        %1806 = vmatpush.bf16.msra.mxu0 0
        %1807 = vmatpush.bf16.msra.mxu0 %v1738
        %1808 = vmatpush.bf16.msra.mxu0 %v1736
        %1809 = vmatmul.bf16.gmra.mxu0 %v1761
        %v1810 = vpop.f32.mrf.mxu0
        %v1811 = vadd.f32 0.0, %v1810
        %v1812 = vpop.f32.mrf.mxu0
        %v1813 = vadd.f32 0.0, %v1812
        %1814 = vmatmul.bf16.gmra.mxu0 %v1764
        %v1815 = vpop.f32.mrf.mxu0
        %v1816 = vadd.f32 0.0, %v1815
        %v1817 = vpop.f32.mrf.mxu0
        %v1818 = vadd.f32 0.0, %v1817
        %1819 = vmatmul.bf16.gmra.mxu0 %v1767
        %v1820 = vpop.f32.mrf.mxu0
        %v1821 = vadd.f32 0.0, %v1820
        %v1822 = vpop.f32.mrf.mxu0
        %v1823 = vadd.f32 0.0, %v1822
        %1824 = vmatmul.bf16.gmra.mxu0 %v1770
        %v1825 = vpop.f32.mrf.mxu0
        %v1826 = vadd.f32 0.0, %v1825
        %v1827 = vpop.f32.mrf.mxu0
        %v1828 = vadd.f32 0.0, %v1827
        %1829 = vdwg.mxu0
        %v1838 = vunpack.c.l.b16 %v1682
        %v1839 = vunpack.c.l.b16 %v1683
        %v1840 = vunpack.c.l.b16 %v1684
        %v1841 = vunpack.c.l.b16 %v1685
        %v1842 = vunpack.c.l.b16 %v1686
        %v1843 = vunpack.c.l.b16 %v1687
        %v1844 = vunpack.c.l.b16 %v1688
        %v1845 = vunpack.c.l.b16 %v1689
        %v1846 = vpack.c.b16 %v1839, %v1838
        %v1847 = vpack.c.b16 %v1841, %v1840
        %v1848 = vpack.c.b16 %v1843, %v1842
        %v1849 = vpack.c.b16 %v1845, %v1844
        %v1851 = vsel %vm1759, %v1846, 0
        %v1854 = vsel %vm1759, %v1847, 0
        %v1857 = vsel %vm1759, %v1848, 0
        %v1860 = vsel %vm1759, %v1849, 0
        %1862 = vmatpush.bf16.msra.mxu0 0
        %1863 = vmatpush.bf16.msra.mxu0 0
        %1864 = vmatpush.bf16.msra.mxu0 0
        %1865 = vmatpush.bf16.msra.mxu0 0
        %1866 = vmatpush.bf16.msra.mxu0 0
        %1867 = vmatpush.bf16.msra.mxu0 0
        %1868 = vmatpush.bf16.msra.mxu0 %v1692
        %1869 = vmatpush.bf16.msra.mxu0 %v1690
        %1870 = vmatmul.bf16.gmra.mxu0 %v1851
        %v1871 = vpop.f32.mrf.mxu0
        %v1872 = vadd.f32 %v1782, %v1871
        %v1873 = vpop.f32.mrf.mxu0
        %v1874 = vadd.f32 %v1784, %v1873
        %1875 = vmatmul.bf16.gmra.mxu0 %v1854
        %v1876 = vpop.f32.mrf.mxu0
        %v1877 = vadd.f32 %v1787, %v1876
        %v1878 = vpop.f32.mrf.mxu0
        %v1879 = vadd.f32 %v1789, %v1878
        %1880 = vmatmul.bf16.gmra.mxu0 %v1857
        %v1881 = vpop.f32.mrf.mxu0
        %v1882 = vadd.f32 %v1792, %v1881
        %v1883 = vpop.f32.mrf.mxu0
        %v1884 = vadd.f32 %v1794, %v1883
        %1885 = vmatmul.bf16.gmra.mxu0 %v1860
        %v1886 = vpop.f32.mrf.mxu0
        %v1887 = vadd.f32 %v1797, %v1886
        %v1888 = vpop.f32.mrf.mxu0
        %v1889 = vadd.f32 %v1799, %v1888
        %1890 = vdwg.mxu0
        %1891 = vmatpush.bf16.msra.mxu0 0
        %1892 = vmatpush.bf16.msra.mxu0 0
        %1893 = vmatpush.bf16.msra.mxu0 0
        %1894 = vmatpush.bf16.msra.mxu0 0
        %1895 = vmatpush.bf16.msra.mxu0 0
        %1896 = vmatpush.bf16.msra.mxu0 0
        %1897 = vmatpush.bf16.msra.mxu0 %v1693
        %1898 = vmatpush.bf16.msra.mxu0 %v1691
        %1899 = vmatmul.bf16.gmra.mxu0 %v1851
        %v1900 = vpop.f32.mrf.mxu0
        %v1901 = vadd.f32 %v1811, %v1900
        %v1902 = vpop.f32.mrf.mxu0
        %v1903 = vadd.f32 %v1813, %v1902
        %1904 = vmatmul.bf16.gmra.mxu0 %v1854
        %v1905 = vpop.f32.mrf.mxu0
        %v1906 = vadd.f32 %v1816, %v1905
        %v1907 = vpop.f32.mrf.mxu0
        %v1908 = vadd.f32 %v1818, %v1907
        %1909 = vmatmul.bf16.gmra.mxu0 %v1857
        %v1910 = vpop.f32.mrf.mxu0
        %v1911 = vadd.f32 %v1821, %v1910
        %v1912 = vpop.f32.mrf.mxu0
        %v1913 = vadd.f32 %v1823, %v1912
        %1914 = vmatmul.bf16.gmra.mxu0 %v1860
        %v1915 = vpop.f32.mrf.mxu0
        %v1916 = vadd.f32 %v1826, %v1915
        %v1917 = vpop.f32.mrf.mxu0
        %v1918 = vadd.f32 %v1828, %v1917
        %1919 = vdwg.mxu0
        %1920 = vrot.lane.b32.xlu0 %v1642, 15
        %v1921 = vpop.permute.xlu0 %1920
        %1922 = vrot.lane.b32.xlu0 %v1644, 15
        %v1923 = vpop.permute.xlu0 %1922
        %1924 = vrot.lane.b32.xlu0 %v1646, 15
        %v1925 = vpop.permute.xlu0 %1924
        %1926 = vrot.lane.b32.xlu0 %v1648, 15
        %v1927 = vpop.permute.xlu0 %1926
        %1928 = vrot.lane.b32.xlu0 %v1643, 15
        %v1929 = vpop.permute.xlu0 %1928
        %1930 = vrot.lane.b32.xlu0 %v1645, 15
        %v1931 = vpop.permute.xlu0 %1930
        %1932 = vrot.lane.b32.xlu0 %v1647, 15
        %v1933 = vpop.permute.xlu0 %1932
        %1934 = vrot.lane.b32.xlu0 %v1649, 15
        %v1935 = vpop.permute.xlu0 %1934
        %v1936 = vsel %vm426, %v1921, %v1929
        %v1937 = vsel %vm426, %v1923, %v1931
        %v1938 = vsel %vm426, %v1925, %v1933
        %v1939 = vsel %vm426, %v1927, %v1935
        %v1940 = vsel %vm426, %v1929, %v1921
        %v1941 = vsel %vm426, %v1931, %v1923
        %v1942 = vsel %vm426, %v1933, %v1925
        %v1943 = vsel %vm426, %v1935, %v1927
        %v1944 = vsel %vm431, %v1940, 0.0
        %v1945 = vsel %vm432, %v1936, 0.0
        %v1946 = vsel %vm431, %v1941, 0.0
        %v1947 = vsel %vm432, %v1937, 0.0
        %v1948 = vsel %vm431, %v1942, 0.0
        %v1949 = vsel %vm432, %v1938, 0.0
        %v1950 = vsel %vm431, %v1943, 0.0
        %v1951 = vsel %vm432, %v1939, 0.0
        %s1952 = scalar_lea.vmem %s5, 64
        %v1953 = vld [vmem:[%s1952] sm:$0xf]
        %v1954 = vld [vmem:[%s1952 + $0x4] sm:$0xf]
        %v1955 = vld [vmem:[%s1952 + $0x8] sm:$0xf]
        %v1956 = vld [vmem:[%s1952 + $0xc] sm:$0xf]
        %v1957 = vld [vmem:[%s1952 + $0x10] sm:$0xf]
        %v1958 = vld [vmem:[%s1952 + $0x14] sm:$0xf]
        %v1959 = vld [vmem:[%s1952 + $0x18] sm:$0xf]
        %v1960 = vld [vmem:[%s1952 + $0x1c] sm:$0xf]
        %v1961 = vpack.c.bf16 %v1946, %v1944
        %v1962 = vpack.c.bf16 %v1947, %v1945
        %v1963 = vpack.c.bf16 %v1950, %v1948
        %v1964 = vpack.c.bf16 %v1951, %v1949
        %v1973 = vunpack.c.l.b16 %v1953
        %v1974 = vunpack.c.l.b16 %v1954
        %v1975 = vunpack.c.l.b16 %v1955
        %v1976 = vunpack.c.l.b16 %v1956
        %v1977 = vunpack.c.l.b16 %v1957
        %v1978 = vunpack.c.l.b16 %v1958
        %v1979 = vunpack.c.l.b16 %v1959
        %v1980 = vunpack.c.l.b16 %v1960
        %v1981 = vpack.c.b16 %v1974, %v1973
        %v1982 = vpack.c.b16 %v1976, %v1975
        %v1983 = vpack.c.b16 %v1978, %v1977
        %v1984 = vpack.c.b16 %v1980, %v1979
        %v1986 = vsel %vm1759, %v1981, 0
        %v1989 = vsel %vm1759, %v1982, 0
        %v1992 = vsel %vm1759, %v1983, 0
        %v1995 = vsel %vm1759, %v1984, 0
        %1997 = vmatpush.bf16.msra.mxu0 0
        %1998 = vmatpush.bf16.msra.mxu0 0
        %1999 = vmatpush.bf16.msra.mxu0 0
        %2000 = vmatpush.bf16.msra.mxu0 0
        %2001 = vmatpush.bf16.msra.mxu0 0
        %2002 = vmatpush.bf16.msra.mxu0 0
        %2003 = vmatpush.bf16.msra.mxu0 %v1963
        %2004 = vmatpush.bf16.msra.mxu0 %v1961
        %2005 = vmatmul.bf16.gmra.mxu0 %v1986
        %v2006 = vpop.f32.mrf.mxu0
        %v2007 = vadd.f32 0.0, %v2006
        %v2008 = vpop.f32.mrf.mxu0
        %v2009 = vadd.f32 0.0, %v2008
        %2010 = vmatmul.bf16.gmra.mxu0 %v1989
        %v2011 = vpop.f32.mrf.mxu0
        %v2012 = vadd.f32 0.0, %v2011
        %v2013 = vpop.f32.mrf.mxu0
        %v2014 = vadd.f32 0.0, %v2013
        %2015 = vmatmul.bf16.gmra.mxu0 %v1992
        %v2016 = vpop.f32.mrf.mxu0
        %v2017 = vadd.f32 0.0, %v2016
        %v2018 = vpop.f32.mrf.mxu0
        %v2019 = vadd.f32 0.0, %v2018
        %2020 = vmatmul.bf16.gmra.mxu0 %v1995
        %v2021 = vpop.f32.mrf.mxu0
        %v2022 = vadd.f32 0.0, %v2021
        %v2023 = vpop.f32.mrf.mxu0
        %v2024 = vadd.f32 0.0, %v2023
        %2025 = vdwg.mxu0
        %2026 = vmatpush.bf16.msra.mxu0 0
        %2027 = vmatpush.bf16.msra.mxu0 0
        %2028 = vmatpush.bf16.msra.mxu0 0
        %2029 = vmatpush.bf16.msra.mxu0 0
        %2030 = vmatpush.bf16.msra.mxu0 0
        %2031 = vmatpush.bf16.msra.mxu0 0
        %2032 = vmatpush.bf16.msra.mxu0 %v1964
        %2033 = vmatpush.bf16.msra.mxu0 %v1962
        %2034 = vmatmul.bf16.gmra.mxu0 %v1986
        %v2035 = vpop.f32.mrf.mxu0
        %v2036 = vadd.f32 0.0, %v2035
        %v2037 = vpop.f32.mrf.mxu0
        %v2038 = vadd.f32 0.0, %v2037
        %2039 = vmatmul.bf16.gmra.mxu0 %v1989
        %v2040 = vpop.f32.mrf.mxu0
        %v2041 = vadd.f32 0.0, %v2040
        %v2042 = vpop.f32.mrf.mxu0
        %v2043 = vadd.f32 0.0, %v2042
        %2044 = vmatmul.bf16.gmra.mxu0 %v1992
        %v2045 = vpop.f32.mrf.mxu0
        %v2046 = vadd.f32 0.0, %v2045
        %v2047 = vpop.f32.mrf.mxu0
        %v2048 = vadd.f32 0.0, %v2047
        %2049 = vmatmul.bf16.gmra.mxu0 %v1995
        %v2050 = vpop.f32.mrf.mxu0
        %v2051 = vadd.f32 0.0, %v2050
        %v2052 = vpop.f32.mrf.mxu0
        %v2053 = vadd.f32 0.0, %v2052
        %2054 = vdwg.mxu0
        %v2055 = vadd.f32 %v1872, %v2007
        %v2056 = vadd.f32 %v1901, %v2036
        %v2057 = vadd.f32 %v1874, %v2009
        %v2058 = vadd.f32 %v1903, %v2038
        %v2059 = vadd.f32 %v1877, %v2012
        %v2060 = vadd.f32 %v1906, %v2041
        %v2061 = vadd.f32 %v1879, %v2014
        %v2062 = vadd.f32 %v1908, %v2043
        %v2063 = vadd.f32 %v1882, %v2017
        %v2064 = vadd.f32 %v1911, %v2046
        %v2065 = vadd.f32 %v1884, %v2019
        %v2066 = vadd.f32 %v1913, %v2048
        %v2067 = vadd.f32 %v1887, %v2022
        %v2068 = vadd.f32 %v1916, %v2051
        %v2069 = vadd.f32 %v1889, %v2024
        %v2070 = vadd.f32 %v1918, %v2053
        %2071 = vrot.lane.b32.xlu0 %v1642, 1
        %v2072 = vpop.permute.xlu0 %2071
        %2073 = vrot.lane.b32.xlu0 %v1644, 1
        %v2074 = vpop.permute.xlu0 %2073
        %2075 = vrot.lane.b32.xlu0 %v1646, 1
        %v2076 = vpop.permute.xlu0 %2075
        %2077 = vrot.lane.b32.xlu0 %v1648, 1
        %v2078 = vpop.permute.xlu0 %2077
        %2079 = vrot.lane.b32.xlu0 %v1643, 1
        %v2080 = vpop.permute.xlu0 %2079
        %2081 = vrot.lane.b32.xlu0 %v1645, 1
        %v2082 = vpop.permute.xlu0 %2081
        %2083 = vrot.lane.b32.xlu0 %v1647, 1
        %v2084 = vpop.permute.xlu0 %2083
        %2085 = vrot.lane.b32.xlu0 %v1649, 1
        %v2086 = vpop.permute.xlu0 %2085
        %v2087 = vsel %vm490, %v2072, %v2080
        %v2088 = vsel %vm490, %v2074, %v2082
        %v2089 = vsel %vm490, %v2076, %v2084
        %v2090 = vsel %vm490, %v2078, %v2086
        %v2091 = vsel %vm490, %v2080, %v2072
        %v2092 = vsel %vm490, %v2082, %v2074
        %v2093 = vsel %vm490, %v2084, %v2076
        %v2094 = vsel %vm490, %v2086, %v2078
        %v2095 = vsel %vm495, %v2091, 0.0
        %v2096 = vsel %vm496, %v2087, 0.0
        %v2097 = vsel %vm495, %v2092, 0.0
        %v2098 = vsel %vm496, %v2088, 0.0
        %v2099 = vsel %vm495, %v2093, 0.0
        %v2100 = vsel %vm496, %v2089, 0.0
        %v2101 = vsel %vm495, %v2094, 0.0
        %v2102 = vsel %vm496, %v2090, 0.0
        %s2103 = scalar_lea.vmem %s5, 96
        %v2104 = vld [vmem:[%s2103] sm:$0xf]
        %v2105 = vld [vmem:[%s2103 + $0x4] sm:$0xf]
        %v2106 = vld [vmem:[%s2103 + $0x8] sm:$0xf]
        %v2107 = vld [vmem:[%s2103 + $0xc] sm:$0xf]
        %v2108 = vld [vmem:[%s2103 + $0x10] sm:$0xf]
        %v2109 = vld [vmem:[%s2103 + $0x14] sm:$0xf]
        %v2110 = vld [vmem:[%s2103 + $0x18] sm:$0xf]
        %v2111 = vld [vmem:[%s2103 + $0x1c] sm:$0xf]
        %v2112 = vpack.c.bf16 %v2097, %v2095
        %v2113 = vpack.c.bf16 %v2098, %v2096
        %v2114 = vpack.c.bf16 %v2101, %v2099
        %v2115 = vpack.c.bf16 %v2102, %v2100
        %v2124 = vunpack.c.l.b16 %v2104
        %v2125 = vunpack.c.l.b16 %v2105
        %v2126 = vunpack.c.l.b16 %v2106
        %v2127 = vunpack.c.l.b16 %v2107
        %v2128 = vunpack.c.l.b16 %v2108
        %v2129 = vunpack.c.l.b16 %v2109
        %v2130 = vunpack.c.l.b16 %v2110
        %v2131 = vunpack.c.l.b16 %v2111
        %v2132 = vpack.c.b16 %v2125, %v2124
        %v2133 = vpack.c.b16 %v2127, %v2126
        %v2134 = vpack.c.b16 %v2129, %v2128
        %v2135 = vpack.c.b16 %v2131, %v2130
        %v2137 = vsel %vm1759, %v2132, 0
        %v2140 = vsel %vm1759, %v2133, 0
        %v2143 = vsel %vm1759, %v2134, 0
        %v2146 = vsel %vm1759, %v2135, 0
        %2148 = vmatpush.bf16.msra.mxu0 0
        %2149 = vmatpush.bf16.msra.mxu0 0
        %2150 = vmatpush.bf16.msra.mxu0 0
        %2151 = vmatpush.bf16.msra.mxu0 0
        %2152 = vmatpush.bf16.msra.mxu0 0
        %2153 = vmatpush.bf16.msra.mxu0 0
        %2154 = vmatpush.bf16.msra.mxu0 %v2114
        %2155 = vmatpush.bf16.msra.mxu0 %v2112
        %2156 = vmatmul.bf16.gmra.mxu0 %v2137
        %v2157 = vpop.f32.mrf.mxu0
        %v2158 = vadd.f32 0.0, %v2157
        %v2159 = vpop.f32.mrf.mxu0
        %v2160 = vadd.f32 0.0, %v2159
        %2161 = vmatmul.bf16.gmra.mxu0 %v2140
        %v2162 = vpop.f32.mrf.mxu0
        %v2163 = vadd.f32 0.0, %v2162
        %v2164 = vpop.f32.mrf.mxu0
        %v2165 = vadd.f32 0.0, %v2164
        %2166 = vmatmul.bf16.gmra.mxu0 %v2143
        %v2167 = vpop.f32.mrf.mxu0
        %v2168 = vadd.f32 0.0, %v2167
        %v2169 = vpop.f32.mrf.mxu0
        %v2170 = vadd.f32 0.0, %v2169
        %2171 = vmatmul.bf16.gmra.mxu0 %v2146
        %v2172 = vpop.f32.mrf.mxu0
        %v2173 = vadd.f32 0.0, %v2172
        %v2174 = vpop.f32.mrf.mxu0
        %v2175 = vadd.f32 0.0, %v2174
        %2176 = vdwg.mxu0
        %2177 = vmatpush.bf16.msra.mxu0 0
        %2178 = vmatpush.bf16.msra.mxu0 0
        %2179 = vmatpush.bf16.msra.mxu0 0
        %2180 = vmatpush.bf16.msra.mxu0 0
        %2181 = vmatpush.bf16.msra.mxu0 0
        %2182 = vmatpush.bf16.msra.mxu0 0
        %2183 = vmatpush.bf16.msra.mxu0 %v2115
        %2184 = vmatpush.bf16.msra.mxu0 %v2113
        %2185 = vmatmul.bf16.gmra.mxu0 %v2137
        %v2186 = vpop.f32.mrf.mxu0
        %v2187 = vadd.f32 0.0, %v2186
        %v2188 = vpop.f32.mrf.mxu0
        %v2189 = vadd.f32 0.0, %v2188
        %2190 = vmatmul.bf16.gmra.mxu0 %v2140
        %v2191 = vpop.f32.mrf.mxu0
        %v2192 = vadd.f32 0.0, %v2191
        %v2193 = vpop.f32.mrf.mxu0
        %v2194 = vadd.f32 0.0, %v2193
        %2195 = vmatmul.bf16.gmra.mxu0 %v2143
        %v2196 = vpop.f32.mrf.mxu0
        %v2197 = vadd.f32 0.0, %v2196
        %v2198 = vpop.f32.mrf.mxu0
        %v2199 = vadd.f32 0.0, %v2198
        %2200 = vmatmul.bf16.gmra.mxu0 %v2146
        %v2201 = vpop.f32.mrf.mxu0
        %v2202 = vadd.f32 0.0, %v2201
        %v2203 = vpop.f32.mrf.mxu0
        %v2204 = vadd.f32 0.0, %v2203
        %2205 = vdwg.mxu0
        %v2206 = vadd.f32 %v2055, %v2158
        %v2207 = vadd.f32 %v2056, %v2187
        %v2208 = vadd.f32 %v2057, %v2160
        %v2209 = vadd.f32 %v2058, %v2189
        %v2210 = vadd.f32 %v2059, %v2163
        %v2211 = vadd.f32 %v2060, %v2192
        %v2212 = vadd.f32 %v2061, %v2165
        %v2213 = vadd.f32 %v2062, %v2194
        %v2214 = vadd.f32 %v2063, %v2168
        %v2215 = vadd.f32 %v2064, %v2197
        %v2216 = vadd.f32 %v2065, %v2170
        %v2217 = vadd.f32 %v2066, %v2199
        %v2218 = vadd.f32 %v2067, %v2173
        %v2219 = vadd.f32 %v2068, %v2202
        %v2220 = vadd.f32 %v2069, %v2175
        %v2221 = vadd.f32 %v2070, %v2204
        %s2222 = scalar_lea.vmem %s5, 128
        %v2223 = vld [vmem:[%s2222] sm:$0xf]
        %v2224 = vld [vmem:[%s2222 + $0x4] sm:$0xf]
        %v2225 = vld [vmem:[%s2222 + $0x8] sm:$0xf]
        %v2226 = vld [vmem:[%s2222 + $0xc] sm:$0xf]
        %v2227 = vld [vmem:[%s2222 + $0x10] sm:$0xf]
        %v2228 = vld [vmem:[%s2222 + $0x14] sm:$0xf]
        %v2229 = vld [vmem:[%s2222 + $0x18] sm:$0xf]
        %v2230 = vld [vmem:[%s2222 + $0x1c] sm:$0xf]
        %v2231 = vpack.c.bf16 %v1644, %v1642
        %v2232 = vpack.c.bf16 %v1645, %v1643
        %v2233 = vpack.c.bf16 %v1648, %v1646
        %v2234 = vpack.c.bf16 %v1649, %v1647
        %v2243 = vunpack.c.l.b16 %v2223
        %v2244 = vunpack.c.l.b16 %v2224
        %v2245 = vunpack.c.l.b16 %v2225
        %v2246 = vunpack.c.l.b16 %v2226
        %v2247 = vunpack.c.l.b16 %v2227
        %v2248 = vunpack.c.l.b16 %v2228
        %v2249 = vunpack.c.l.b16 %v2229
        %v2250 = vunpack.c.l.b16 %v2230
        %v2251 = vpack.c.b16 %v2244, %v2243
        %v2252 = vpack.c.b16 %v2246, %v2245
        %v2253 = vpack.c.b16 %v2248, %v2247
        %v2254 = vpack.c.b16 %v2250, %v2249
        %v2256 = vsel %vm1759, %v2251, 0
        %v2259 = vsel %vm1759, %v2252, 0
        %v2262 = vsel %vm1759, %v2253, 0
        %v2265 = vsel %vm1759, %v2254, 0
        %2267 = vmatpush.bf16.msra.mxu0 0
        %2268 = vmatpush.bf16.msra.mxu0 0
        %2269 = vmatpush.bf16.msra.mxu0 0
        %2270 = vmatpush.bf16.msra.mxu0 0
        %2271 = vmatpush.bf16.msra.mxu0 0
        %2272 = vmatpush.bf16.msra.mxu0 0
        %2273 = vmatpush.bf16.msra.mxu0 %v2233
        %2274 = vmatpush.bf16.msra.mxu0 %v2231
        %2275 = vmatmul.bf16.gmra.mxu0 %v2256
        %v2276 = vpop.f32.mrf.mxu0
        %v2277 = vadd.f32 0.0, %v2276
        %v2278 = vpop.f32.mrf.mxu0
        %v2279 = vadd.f32 0.0, %v2278
        %2280 = vmatmul.bf16.gmra.mxu0 %v2259
        %v2281 = vpop.f32.mrf.mxu0
        %v2282 = vadd.f32 0.0, %v2281
        %v2283 = vpop.f32.mrf.mxu0
        %v2284 = vadd.f32 0.0, %v2283
        %2285 = vmatmul.bf16.gmra.mxu0 %v2262
        %v2286 = vpop.f32.mrf.mxu0
        %v2287 = vadd.f32 0.0, %v2286
        %v2288 = vpop.f32.mrf.mxu0
        %v2289 = vadd.f32 0.0, %v2288
        %2290 = vmatmul.bf16.gmra.mxu0 %v2265
        %v2291 = vpop.f32.mrf.mxu0
        %v2292 = vadd.f32 0.0, %v2291
        %v2293 = vpop.f32.mrf.mxu0
        %v2294 = vadd.f32 0.0, %v2293
        %2295 = vdwg.mxu0
        %2296 = vmatpush.bf16.msra.mxu0 0
        %2297 = vmatpush.bf16.msra.mxu0 0
        %2298 = vmatpush.bf16.msra.mxu0 0
        %2299 = vmatpush.bf16.msra.mxu0 0
        %2300 = vmatpush.bf16.msra.mxu0 0
        %2301 = vmatpush.bf16.msra.mxu0 0
        %2302 = vmatpush.bf16.msra.mxu0 %v2234
        %2303 = vmatpush.bf16.msra.mxu0 %v2232
        %2304 = vmatmul.bf16.gmra.mxu0 %v2256
        %v2305 = vpop.f32.mrf.mxu0
        %v2306 = vadd.f32 0.0, %v2305
        %v2307 = vpop.f32.mrf.mxu0
        %v2308 = vadd.f32 0.0, %v2307
        %2309 = vmatmul.bf16.gmra.mxu0 %v2259
        %v2310 = vpop.f32.mrf.mxu0
        %v2311 = vadd.f32 0.0, %v2310
        %v2312 = vpop.f32.mrf.mxu0
        %v2313 = vadd.f32 0.0, %v2312
        %2314 = vmatmul.bf16.gmra.mxu0 %v2262
        %v2315 = vpop.f32.mrf.mxu0
        %v2316 = vadd.f32 0.0, %v2315
        %v2317 = vpop.f32.mrf.mxu0
        %v2318 = vadd.f32 0.0, %v2317
        %2319 = vmatmul.bf16.gmra.mxu0 %v2265
        %v2320 = vpop.f32.mrf.mxu0
        %v2321 = vadd.f32 0.0, %v2320
        %v2322 = vpop.f32.mrf.mxu0
        %v2323 = vadd.f32 0.0, %v2322
        %2324 = vdwg.mxu0
        %v2325 = vadd.f32 %v2206, %v2277
        %v2326 = vadd.f32 %v2207, %v2306
        %v2327 = vadd.f32 %v2208, %v2279
        %v2328 = vadd.f32 %v2209, %v2308
        %v2329 = vadd.f32 %v2210, %v2282
        %v2330 = vadd.f32 %v2211, %v2311
        %v2331 = vadd.f32 %v2212, %v2284
        %v2332 = vadd.f32 %v2213, %v2313
        %v2333 = vadd.f32 %v2214, %v2287
        %v2334 = vadd.f32 %v2215, %v2316
        %v2335 = vadd.f32 %v2216, %v2289
        %v2336 = vadd.f32 %v2217, %v2318
        %v2337 = vadd.f32 %v2218, %v2292
        %v2338 = vadd.f32 %v2219, %v2321
        %v2339 = vadd.f32 %v2220, %v2294
        %v2340 = vadd.f32 %v2221, %v2323
        %2341 = vrot.lane.b32.xlu0 %v1642, 127
        %v2342 = vpop.permute.xlu0 %2341
        %2343 = vrot.lane.b32.xlu0 %v1644, 127
        %v2344 = vpop.permute.xlu0 %2343
        %2345 = vrot.lane.b32.xlu0 %v1646, 127
        %v2346 = vpop.permute.xlu0 %2345
        %2347 = vrot.lane.b32.xlu0 %v1648, 127
        %v2348 = vpop.permute.xlu0 %2347
        %2349 = vrot.lane.b32.xlu0 %v1643, 127
        %v2350 = vpop.permute.xlu0 %2349
        %2351 = vrot.lane.b32.xlu0 %v1645, 127
        %v2352 = vpop.permute.xlu0 %2351
        %2353 = vrot.lane.b32.xlu0 %v1647, 127
        %v2354 = vpop.permute.xlu0 %2353
        %2355 = vrot.lane.b32.xlu0 %v1649, 127
        %v2356 = vpop.permute.xlu0 %2355
        %v2357 = vsel %vm605, %v2342, %v2350
        %v2358 = vsel %vm605, %v2344, %v2352
        %v2359 = vsel %vm605, %v2346, %v2354
        %v2360 = vsel %vm605, %v2348, %v2356
        %v2361 = vsel %vm605, %v2350, %v2342
        %v2362 = vsel %vm605, %v2352, %v2344
        %v2363 = vsel %vm605, %v2354, %v2346
        %v2364 = vsel %vm605, %v2356, %v2348
        %v2365 = vsel %vm610, %v2357, 0.0
        %v2366 = vsel %vm611, %v2361, 0.0
        %v2367 = vsel %vm610, %v2358, 0.0
        %v2368 = vsel %vm611, %v2362, 0.0
        %v2369 = vsel %vm610, %v2359, 0.0
        %v2370 = vsel %vm611, %v2363, 0.0
        %v2371 = vsel %vm610, %v2360, 0.0
        %v2372 = vsel %vm611, %v2364, 0.0
        %s2373 = scalar_lea.vmem %s5, 160
        %v2374 = vld [vmem:[%s2373] sm:$0xf]
        %v2375 = vld [vmem:[%s2373 + $0x4] sm:$0xf]
        %v2376 = vld [vmem:[%s2373 + $0x8] sm:$0xf]
        %v2377 = vld [vmem:[%s2373 + $0xc] sm:$0xf]
        %v2378 = vld [vmem:[%s2373 + $0x10] sm:$0xf]
        %v2379 = vld [vmem:[%s2373 + $0x14] sm:$0xf]
        %v2380 = vld [vmem:[%s2373 + $0x18] sm:$0xf]
        %v2381 = vld [vmem:[%s2373 + $0x1c] sm:$0xf]
        %v2382 = vpack.c.bf16 %v2367, %v2365
        %v2383 = vpack.c.bf16 %v2368, %v2366
        %v2384 = vpack.c.bf16 %v2371, %v2369
        %v2385 = vpack.c.bf16 %v2372, %v2370
        %v2394 = vunpack.c.l.b16 %v2374
        %v2395 = vunpack.c.l.b16 %v2375
        %v2396 = vunpack.c.l.b16 %v2376
        %v2397 = vunpack.c.l.b16 %v2377
        %v2398 = vunpack.c.l.b16 %v2378
        %v2399 = vunpack.c.l.b16 %v2379
        %v2400 = vunpack.c.l.b16 %v2380
        %v2401 = vunpack.c.l.b16 %v2381
        %v2402 = vpack.c.b16 %v2395, %v2394
        %v2403 = vpack.c.b16 %v2397, %v2396
        %v2404 = vpack.c.b16 %v2399, %v2398
        %v2405 = vpack.c.b16 %v2401, %v2400
        %v2407 = vsel %vm1759, %v2402, 0
        %v2410 = vsel %vm1759, %v2403, 0
        %v2413 = vsel %vm1759, %v2404, 0
        %v2416 = vsel %vm1759, %v2405, 0
        %2418 = vmatpush.bf16.msra.mxu0 0
        %2419 = vmatpush.bf16.msra.mxu0 0
        %2420 = vmatpush.bf16.msra.mxu0 0
        %2421 = vmatpush.bf16.msra.mxu0 0
        %2422 = vmatpush.bf16.msra.mxu0 0
        %2423 = vmatpush.bf16.msra.mxu0 0
        %2424 = vmatpush.bf16.msra.mxu0 %v2384
        %2425 = vmatpush.bf16.msra.mxu0 %v2382
        %2426 = vmatmul.bf16.gmra.mxu0 %v2407
        %v2427 = vpop.f32.mrf.mxu0
        %v2428 = vadd.f32 0.0, %v2427
        %v2429 = vpop.f32.mrf.mxu0
        %v2430 = vadd.f32 0.0, %v2429
        %2431 = vmatmul.bf16.gmra.mxu0 %v2410
        %v2432 = vpop.f32.mrf.mxu0
        %v2433 = vadd.f32 0.0, %v2432
        %v2434 = vpop.f32.mrf.mxu0
        %v2435 = vadd.f32 0.0, %v2434
        %2436 = vmatmul.bf16.gmra.mxu0 %v2413
        %v2437 = vpop.f32.mrf.mxu0
        %v2438 = vadd.f32 0.0, %v2437
        %v2439 = vpop.f32.mrf.mxu0
        %v2440 = vadd.f32 0.0, %v2439
        %2441 = vmatmul.bf16.gmra.mxu0 %v2416
        %v2442 = vpop.f32.mrf.mxu0
        %v2443 = vadd.f32 0.0, %v2442
        %v2444 = vpop.f32.mrf.mxu0
        %v2445 = vadd.f32 0.0, %v2444
        %2446 = vdwg.mxu0
        %2447 = vmatpush.bf16.msra.mxu0 0
        %2448 = vmatpush.bf16.msra.mxu0 0
        %2449 = vmatpush.bf16.msra.mxu0 0
        %2450 = vmatpush.bf16.msra.mxu0 0
        %2451 = vmatpush.bf16.msra.mxu0 0
        %2452 = vmatpush.bf16.msra.mxu0 0
        %2453 = vmatpush.bf16.msra.mxu0 %v2385
        %2454 = vmatpush.bf16.msra.mxu0 %v2383
        %2455 = vmatmul.bf16.gmra.mxu0 %v2407
        %v2456 = vpop.f32.mrf.mxu0
        %v2457 = vadd.f32 0.0, %v2456
        %v2458 = vpop.f32.mrf.mxu0
        %v2459 = vadd.f32 0.0, %v2458
        %2460 = vmatmul.bf16.gmra.mxu0 %v2410
        %v2461 = vpop.f32.mrf.mxu0
        %v2462 = vadd.f32 0.0, %v2461
        %v2463 = vpop.f32.mrf.mxu0
        %v2464 = vadd.f32 0.0, %v2463
        %2465 = vmatmul.bf16.gmra.mxu0 %v2413
        %v2466 = vpop.f32.mrf.mxu0
        %v2467 = vadd.f32 0.0, %v2466
        %v2468 = vpop.f32.mrf.mxu0
        %v2469 = vadd.f32 0.0, %v2468
        %2470 = vmatmul.bf16.gmra.mxu0 %v2416
        %v2471 = vpop.f32.mrf.mxu0
        %v2472 = vadd.f32 0.0, %v2471
        %v2473 = vpop.f32.mrf.mxu0
        %v2474 = vadd.f32 0.0, %v2473
        %2475 = vdwg.mxu0
        %v2476 = vadd.f32 %v2325, %v2428
        %v2477 = vadd.f32 %v2326, %v2457
        %v2478 = vadd.f32 %v2327, %v2430
        %v2479 = vadd.f32 %v2328, %v2459
        %v2480 = vadd.f32 %v2329, %v2433
        %v2481 = vadd.f32 %v2330, %v2462
        %v2482 = vadd.f32 %v2331, %v2435
        %v2483 = vadd.f32 %v2332, %v2464
        %v2484 = vadd.f32 %v2333, %v2438
        %v2485 = vadd.f32 %v2334, %v2467
        %v2486 = vadd.f32 %v2335, %v2440
        %v2487 = vadd.f32 %v2336, %v2469
        %v2488 = vadd.f32 %v2337, %v2443
        %v2489 = vadd.f32 %v2338, %v2472
        %v2490 = vadd.f32 %v2339, %v2445
        %v2491 = vadd.f32 %v2340, %v2474
        %2492 = vrot.lane.b32.xlu0 %v1642, 113
        %v2493 = vpop.permute.xlu0 %2492
        %2494 = vrot.lane.b32.xlu0 %v1644, 113
        %v2495 = vpop.permute.xlu0 %2494
        %2496 = vrot.lane.b32.xlu0 %v1646, 113
        %v2497 = vpop.permute.xlu0 %2496
        %2498 = vrot.lane.b32.xlu0 %v1648, 113
        %v2499 = vpop.permute.xlu0 %2498
        %2500 = vrot.lane.b32.xlu0 %v1643, 113
        %v2501 = vpop.permute.xlu0 %2500
        %2502 = vrot.lane.b32.xlu0 %v1645, 113
        %v2503 = vpop.permute.xlu0 %2502
        %2504 = vrot.lane.b32.xlu0 %v1647, 113
        %v2505 = vpop.permute.xlu0 %2504
        %2506 = vrot.lane.b32.xlu0 %v1649, 113
        %v2507 = vpop.permute.xlu0 %2506
        %v2508 = vsel %vm669, %v2493, %v2501
        %v2509 = vsel %vm669, %v2495, %v2503
        %v2510 = vsel %vm669, %v2497, %v2505
        %v2511 = vsel %vm669, %v2499, %v2507
        %v2512 = vsel %vm669, %v2501, %v2493
        %v2513 = vsel %vm669, %v2503, %v2495
        %v2514 = vsel %vm669, %v2505, %v2497
        %v2515 = vsel %vm669, %v2507, %v2499
        %v2516 = vsel %vm674, %v2508, 0.0
        %v2517 = vsel %vm675, %v2512, 0.0
        %v2518 = vsel %vm674, %v2509, 0.0
        %v2519 = vsel %vm675, %v2513, 0.0
        %v2520 = vsel %vm674, %v2510, 0.0
        %v2521 = vsel %vm675, %v2514, 0.0
        %v2522 = vsel %vm674, %v2511, 0.0
        %v2523 = vsel %vm675, %v2515, 0.0
        %s2524 = scalar_lea.vmem %s5, 192
        %v2525 = vld [vmem:[%s2524] sm:$0xf]
        %v2526 = vld [vmem:[%s2524 + $0x4] sm:$0xf]
        %v2527 = vld [vmem:[%s2524 + $0x8] sm:$0xf]
        %v2528 = vld [vmem:[%s2524 + $0xc] sm:$0xf]
        %v2529 = vld [vmem:[%s2524 + $0x10] sm:$0xf]
        %v2530 = vld [vmem:[%s2524 + $0x14] sm:$0xf]
        %v2531 = vld [vmem:[%s2524 + $0x18] sm:$0xf]
        %v2532 = vld [vmem:[%s2524 + $0x1c] sm:$0xf]
        %v2533 = vpack.c.bf16 %v2518, %v2516
        %v2534 = vpack.c.bf16 %v2519, %v2517
        %v2535 = vpack.c.bf16 %v2522, %v2520
        %v2536 = vpack.c.bf16 %v2523, %v2521
        %v2545 = vunpack.c.l.b16 %v2525
        %v2546 = vunpack.c.l.b16 %v2526
        %v2547 = vunpack.c.l.b16 %v2527
        %v2548 = vunpack.c.l.b16 %v2528
        %v2549 = vunpack.c.l.b16 %v2529
        %v2550 = vunpack.c.l.b16 %v2530
        %v2551 = vunpack.c.l.b16 %v2531
        %v2552 = vunpack.c.l.b16 %v2532
        %v2553 = vpack.c.b16 %v2546, %v2545
        %v2554 = vpack.c.b16 %v2548, %v2547
        %v2555 = vpack.c.b16 %v2550, %v2549
        %v2556 = vpack.c.b16 %v2552, %v2551
        %v2558 = vsel %vm1759, %v2553, 0
        %v2561 = vsel %vm1759, %v2554, 0
        %v2564 = vsel %vm1759, %v2555, 0
        %v2567 = vsel %vm1759, %v2556, 0
        %2569 = vmatpush.bf16.msra.mxu0 0
        %2570 = vmatpush.bf16.msra.mxu0 0
        %2571 = vmatpush.bf16.msra.mxu0 0
        %2572 = vmatpush.bf16.msra.mxu0 0
        %2573 = vmatpush.bf16.msra.mxu0 0
        %2574 = vmatpush.bf16.msra.mxu0 0
        %2575 = vmatpush.bf16.msra.mxu0 %v2535
        %2576 = vmatpush.bf16.msra.mxu0 %v2533
        %2577 = vmatmul.bf16.gmra.mxu0 %v2558
        %v2578 = vpop.f32.mrf.mxu0
        %v2579 = vadd.f32 0.0, %v2578
        %v2580 = vpop.f32.mrf.mxu0
        %v2581 = vadd.f32 0.0, %v2580
        %2582 = vmatmul.bf16.gmra.mxu0 %v2561
        %v2583 = vpop.f32.mrf.mxu0
        %v2584 = vadd.f32 0.0, %v2583
        %v2585 = vpop.f32.mrf.mxu0
        %v2586 = vadd.f32 0.0, %v2585
        %2587 = vmatmul.bf16.gmra.mxu0 %v2564
        %v2588 = vpop.f32.mrf.mxu0
        %v2589 = vadd.f32 0.0, %v2588
        %v2590 = vpop.f32.mrf.mxu0
        %v2591 = vadd.f32 0.0, %v2590
        %2592 = vmatmul.bf16.gmra.mxu0 %v2567
        %v2593 = vpop.f32.mrf.mxu0
        %v2594 = vadd.f32 0.0, %v2593
        %v2595 = vpop.f32.mrf.mxu0
        %v2596 = vadd.f32 0.0, %v2595
        %2597 = vdwg.mxu0
        %2598 = vmatpush.bf16.msra.mxu0 0
        %2599 = vmatpush.bf16.msra.mxu0 0
        %2600 = vmatpush.bf16.msra.mxu0 0
        %2601 = vmatpush.bf16.msra.mxu0 0
        %2602 = vmatpush.bf16.msra.mxu0 0
        %2603 = vmatpush.bf16.msra.mxu0 0
        %2604 = vmatpush.bf16.msra.mxu0 %v2536
        %2605 = vmatpush.bf16.msra.mxu0 %v2534
        %2606 = vmatmul.bf16.gmra.mxu0 %v2558
        %v2607 = vpop.f32.mrf.mxu0
        %v2608 = vadd.f32 0.0, %v2607
        %v2609 = vpop.f32.mrf.mxu0
        %v2610 = vadd.f32 0.0, %v2609
        %2611 = vmatmul.bf16.gmra.mxu0 %v2561
        %v2612 = vpop.f32.mrf.mxu0
        %v2613 = vadd.f32 0.0, %v2612
        %v2614 = vpop.f32.mrf.mxu0
        %v2615 = vadd.f32 0.0, %v2614
        %2616 = vmatmul.bf16.gmra.mxu0 %v2564
        %v2617 = vpop.f32.mrf.mxu0
        %v2618 = vadd.f32 0.0, %v2617
        %v2619 = vpop.f32.mrf.mxu0
        %v2620 = vadd.f32 0.0, %v2619
        %2621 = vmatmul.bf16.gmra.mxu0 %v2567
        %v2622 = vpop.f32.mrf.mxu0
        %v2623 = vadd.f32 0.0, %v2622
        %v2624 = vpop.f32.mrf.mxu0
        %v2625 = vadd.f32 0.0, %v2624
        %2626 = vdwg.mxu0
        %v2627 = vadd.f32 %v2476, %v2579
        %v2628 = vadd.f32 %v2477, %v2608
        %v2629 = vadd.f32 %v2478, %v2581
        %v2630 = vadd.f32 %v2479, %v2610
        %v2631 = vadd.f32 %v2480, %v2584
        %v2632 = vadd.f32 %v2481, %v2613
        %v2633 = vadd.f32 %v2482, %v2586
        %v2634 = vadd.f32 %v2483, %v2615
        %v2635 = vadd.f32 %v2484, %v2589
        %v2636 = vadd.f32 %v2485, %v2618
        %v2637 = vadd.f32 %v2486, %v2591
        %v2638 = vadd.f32 %v2487, %v2620
        %v2639 = vadd.f32 %v2488, %v2594
        %v2640 = vadd.f32 %v2489, %v2623
        %v2641 = vadd.f32 %v2490, %v2596
        %v2642 = vadd.f32 %v2491, %v2625
        %2643 = vrot.lane.b32.xlu0 %v1642, 112
        %v2644 = vpop.permute.xlu0 %2643
        %2645 = vrot.lane.b32.xlu0 %v1644, 112
        %v2646 = vpop.permute.xlu0 %2645
        %2647 = vrot.lane.b32.xlu0 %v1646, 112
        %v2648 = vpop.permute.xlu0 %2647
        %2649 = vrot.lane.b32.xlu0 %v1648, 112
        %v2650 = vpop.permute.xlu0 %2649
        %2651 = vrot.lane.b32.xlu0 %v1643, 112
        %v2652 = vpop.permute.xlu0 %2651
        %2653 = vrot.lane.b32.xlu0 %v1645, 112
        %v2654 = vpop.permute.xlu0 %2653
        %2655 = vrot.lane.b32.xlu0 %v1647, 112
        %v2656 = vpop.permute.xlu0 %2655
        %2657 = vrot.lane.b32.xlu0 %v1649, 112
        %v2658 = vpop.permute.xlu0 %2657
        %v2659 = vsel %vm733, %v2644, %v2652
        %v2660 = vsel %vm733, %v2646, %v2654
        %v2661 = vsel %vm733, %v2648, %v2656
        %v2662 = vsel %vm733, %v2650, %v2658
        %v2663 = vsel %vm733, %v2652, %v2644
        %v2664 = vsel %vm733, %v2654, %v2646
        %v2665 = vsel %vm733, %v2656, %v2648
        %v2666 = vsel %vm733, %v2658, %v2650
        %v2667 = vsel %vm738, %v2659, 0.0
        %v2668 = vsel %vm739, %v2663, 0.0
        %v2669 = vsel %vm738, %v2660, 0.0
        %v2670 = vsel %vm739, %v2664, 0.0
        %v2671 = vsel %vm738, %v2661, 0.0
        %v2672 = vsel %vm739, %v2665, 0.0
        %v2673 = vsel %vm738, %v2662, 0.0
        %v2674 = vsel %vm739, %v2666, 0.0
        %s2675 = scalar_lea.vmem %s5, 224
        %v2676 = vld [vmem:[%s2675] sm:$0xf]
        %v2677 = vld [vmem:[%s2675 + $0x4] sm:$0xf]
        %v2678 = vld [vmem:[%s2675 + $0x8] sm:$0xf]
        %v2679 = vld [vmem:[%s2675 + $0xc] sm:$0xf]
        %v2680 = vld [vmem:[%s2675 + $0x10] sm:$0xf]
        %v2681 = vld [vmem:[%s2675 + $0x14] sm:$0xf]
        %v2682 = vld [vmem:[%s2675 + $0x18] sm:$0xf]
        %v2683 = vld [vmem:[%s2675 + $0x1c] sm:$0xf]
        %v2684 = vpack.c.bf16 %v2669, %v2667
        %v2685 = vpack.c.bf16 %v2670, %v2668
        %v2686 = vpack.c.bf16 %v2673, %v2671
        %v2687 = vpack.c.bf16 %v2674, %v2672
        %v2696 = vunpack.c.l.b16 %v2676
        %v2697 = vunpack.c.l.b16 %v2677
        %v2698 = vunpack.c.l.b16 %v2678
        %v2699 = vunpack.c.l.b16 %v2679
        %v2700 = vunpack.c.l.b16 %v2680
        %v2701 = vunpack.c.l.b16 %v2681
        %v2702 = vunpack.c.l.b16 %v2682
        %v2703 = vunpack.c.l.b16 %v2683
        %v2704 = vpack.c.b16 %v2697, %v2696
        %v2705 = vpack.c.b16 %v2699, %v2698
        %v2706 = vpack.c.b16 %v2701, %v2700
        %v2707 = vpack.c.b16 %v2703, %v2702
        %v2709 = vsel %vm1759, %v2704, 0
        %v2712 = vsel %vm1759, %v2705, 0
        %v2715 = vsel %vm1759, %v2706, 0
        %v2718 = vsel %vm1759, %v2707, 0
        %2720 = vmatpush.bf16.msra.mxu0 0
        %2721 = vmatpush.bf16.msra.mxu0 0
        %2722 = vmatpush.bf16.msra.mxu0 0
        %2723 = vmatpush.bf16.msra.mxu0 0
        %2724 = vmatpush.bf16.msra.mxu0 0
        %2725 = vmatpush.bf16.msra.mxu0 0
        %2726 = vmatpush.bf16.msra.mxu0 %v2686
        %2727 = vmatpush.bf16.msra.mxu0 %v2684
        %2728 = vmatmul.bf16.gmra.mxu0 %v2709
        %v2729 = vpop.f32.mrf.mxu0
        %v2730 = vadd.f32 0.0, %v2729
        %v2731 = vpop.f32.mrf.mxu0
        %v2732 = vadd.f32 0.0, %v2731
        %2733 = vmatmul.bf16.gmra.mxu0 %v2712
        %v2734 = vpop.f32.mrf.mxu0
        %v2735 = vadd.f32 0.0, %v2734
        %v2736 = vpop.f32.mrf.mxu0
        %v2737 = vadd.f32 0.0, %v2736
        %2738 = vmatmul.bf16.gmra.mxu0 %v2715
        %v2739 = vpop.f32.mrf.mxu0
        %v2740 = vadd.f32 0.0, %v2739
        %v2741 = vpop.f32.mrf.mxu0
        %v2742 = vadd.f32 0.0, %v2741
        %2743 = vmatmul.bf16.gmra.mxu0 %v2718
        %v2744 = vpop.f32.mrf.mxu0
        %v2745 = vadd.f32 0.0, %v2744
        %v2746 = vpop.f32.mrf.mxu0
        %v2747 = vadd.f32 0.0, %v2746
        %2748 = vdwg.mxu0
        %2749 = vmatpush.bf16.msra.mxu0 0
        %2750 = vmatpush.bf16.msra.mxu0 0
        %2751 = vmatpush.bf16.msra.mxu0 0
        %2752 = vmatpush.bf16.msra.mxu0 0
        %2753 = vmatpush.bf16.msra.mxu0 0
        %2754 = vmatpush.bf16.msra.mxu0 0
        %2755 = vmatpush.bf16.msra.mxu0 %v2687
        %2756 = vmatpush.bf16.msra.mxu0 %v2685
        %2757 = vmatmul.bf16.gmra.mxu0 %v2709
        %v2758 = vpop.f32.mrf.mxu0
        %v2759 = vadd.f32 0.0, %v2758
        %v2760 = vpop.f32.mrf.mxu0
        %v2761 = vadd.f32 0.0, %v2760
        %2762 = vmatmul.bf16.gmra.mxu0 %v2712
        %v2763 = vpop.f32.mrf.mxu0
        %v2764 = vadd.f32 0.0, %v2763
        %v2765 = vpop.f32.mrf.mxu0
        %v2766 = vadd.f32 0.0, %v2765
        %2767 = vmatmul.bf16.gmra.mxu0 %v2715
        %v2768 = vpop.f32.mrf.mxu0
        %v2769 = vadd.f32 0.0, %v2768
        %v2770 = vpop.f32.mrf.mxu0
        %v2771 = vadd.f32 0.0, %v2770
        %2772 = vmatmul.bf16.gmra.mxu0 %v2718
        %v2773 = vpop.f32.mrf.mxu0
        %v2774 = vadd.f32 0.0, %v2773
        %v2775 = vpop.f32.mrf.mxu0
        %v2776 = vadd.f32 0.0, %v2775
        %2777 = vdwg.mxu0
        %v2778 = vadd.f32 %v2627, %v2730
        %v2779 = vadd.f32 %v2628, %v2759
        %v2780 = vadd.f32 %v2629, %v2732
        %v2781 = vadd.f32 %v2630, %v2761
        %v2782 = vadd.f32 %v2631, %v2735
        %v2783 = vadd.f32 %v2632, %v2764
        %v2784 = vadd.f32 %v2633, %v2737
        %v2785 = vadd.f32 %v2634, %v2766
        %v2786 = vadd.f32 %v2635, %v2740
        %v2787 = vadd.f32 %v2636, %v2769
        %v2788 = vadd.f32 %v2637, %v2742
        %v2789 = vadd.f32 %v2638, %v2771
        %v2790 = vadd.f32 %v2639, %v2745
        %v2791 = vadd.f32 %v2640, %v2774
        %v2792 = vadd.f32 %v2641, %v2747
        %v2793 = vadd.f32 %v2642, %v2776
        %2794 = vrot.lane.b32.xlu0 %v1642, 111
        %v2795 = vpop.permute.xlu0 %2794
        %2796 = vrot.lane.b32.xlu0 %v1644, 111
        %v2797 = vpop.permute.xlu0 %2796
        %2798 = vrot.lane.b32.xlu0 %v1646, 111
        %v2799 = vpop.permute.xlu0 %2798
        %2800 = vrot.lane.b32.xlu0 %v1648, 111
        %v2801 = vpop.permute.xlu0 %2800
        %2802 = vrot.lane.b32.xlu0 %v1643, 111
        %v2803 = vpop.permute.xlu0 %2802
        %2804 = vrot.lane.b32.xlu0 %v1645, 111
        %v2805 = vpop.permute.xlu0 %2804
        %2806 = vrot.lane.b32.xlu0 %v1647, 111
        %v2807 = vpop.permute.xlu0 %2806
        %2808 = vrot.lane.b32.xlu0 %v1649, 111
        %v2809 = vpop.permute.xlu0 %2808
        %v2810 = vsel %vm797, %v2795, %v2803
        %v2811 = vsel %vm797, %v2797, %v2805
        %v2812 = vsel %vm797, %v2799, %v2807
        %v2813 = vsel %vm797, %v2801, %v2809
        %v2814 = vsel %vm797, %v2803, %v2795
        %v2815 = vsel %vm797, %v2805, %v2797
        %v2816 = vsel %vm797, %v2807, %v2799
        %v2817 = vsel %vm797, %v2809, %v2801
        %v2818 = vsel %vm802, %v2810, 0.0
        %v2819 = vsel %vm803, %v2814, 0.0
        %v2820 = vsel %vm802, %v2811, 0.0
        %v2821 = vsel %vm803, %v2815, 0.0
        %v2822 = vsel %vm802, %v2812, 0.0
        %v2823 = vsel %vm803, %v2816, 0.0
        %v2824 = vsel %vm802, %v2813, 0.0
        %v2825 = vsel %vm803, %v2817, 0.0
        %s2826 = scalar_lea.vmem %s5, 256
        %v2827 = vld [vmem:[%s2826] sm:$0xf]
        %v2828 = vld [vmem:[%s2826 + $0x4] sm:$0xf]
        %v2829 = vld [vmem:[%s2826 + $0x8] sm:$0xf]
        %v2830 = vld [vmem:[%s2826 + $0xc] sm:$0xf]
        %v2831 = vld [vmem:[%s2826 + $0x10] sm:$0xf]
        %v2832 = vld [vmem:[%s2826 + $0x14] sm:$0xf]
        %v2833 = vld [vmem:[%s2826 + $0x18] sm:$0xf]
        %v2834 = vld [vmem:[%s2826 + $0x1c] sm:$0xf]
        %v2835 = vpack.c.bf16 %v2820, %v2818
        %v2836 = vpack.c.bf16 %v2821, %v2819
        %v2837 = vpack.c.bf16 %v2824, %v2822
        %v2838 = vpack.c.bf16 %v2825, %v2823
        %v2847 = vunpack.c.l.b16 %v2827
        %v2848 = vunpack.c.l.b16 %v2828
        %v2849 = vunpack.c.l.b16 %v2829
        %v2850 = vunpack.c.l.b16 %v2830
        %v2851 = vunpack.c.l.b16 %v2831
        %v2852 = vunpack.c.l.b16 %v2832
        %v2853 = vunpack.c.l.b16 %v2833
        %v2854 = vunpack.c.l.b16 %v2834
        %v2855 = vpack.c.b16 %v2848, %v2847
        %v2856 = vpack.c.b16 %v2850, %v2849
        %v2857 = vpack.c.b16 %v2852, %v2851
        %v2858 = vpack.c.b16 %v2854, %v2853
        %v2860 = vsel %vm1759, %v2855, 0
        %v2863 = vsel %vm1759, %v2856, 0
        %v2866 = vsel %vm1759, %v2857, 0
        %v2869 = vsel %vm1759, %v2858, 0
        %2871 = vmatpush.bf16.msra.mxu0 0
        %2872 = vmatpush.bf16.msra.mxu0 0
        %2873 = vmatpush.bf16.msra.mxu0 0
        %2874 = vmatpush.bf16.msra.mxu0 0
        %2875 = vmatpush.bf16.msra.mxu0 0
        %2876 = vmatpush.bf16.msra.mxu0 0
        %2877 = vmatpush.bf16.msra.mxu0 %v2837
        %2878 = vmatpush.bf16.msra.mxu0 %v2835
        %2879 = vmatmul.bf16.gmra.mxu0 %v2860
        %v2880 = vpop.f32.mrf.mxu0
        %v2881 = vadd.f32 0.0, %v2880
        %v2882 = vpop.f32.mrf.mxu0
        %v2883 = vadd.f32 0.0, %v2882
        %2884 = vmatmul.bf16.gmra.mxu0 %v2863
        %v2885 = vpop.f32.mrf.mxu0
        %v2886 = vadd.f32 0.0, %v2885
        %v2887 = vpop.f32.mrf.mxu0
        %v2888 = vadd.f32 0.0, %v2887
        %2889 = vmatmul.bf16.gmra.mxu0 %v2866
        %v2890 = vpop.f32.mrf.mxu0
        %v2891 = vadd.f32 0.0, %v2890
        %v2892 = vpop.f32.mrf.mxu0
        %v2893 = vadd.f32 0.0, %v2892
        %2894 = vmatmul.bf16.gmra.mxu0 %v2869
        %v2895 = vpop.f32.mrf.mxu0
        %v2896 = vadd.f32 0.0, %v2895
        %v2897 = vpop.f32.mrf.mxu0
        %v2898 = vadd.f32 0.0, %v2897
        %2899 = vdwg.mxu0
        %2900 = vmatpush.bf16.msra.mxu0 0
        %2901 = vmatpush.bf16.msra.mxu0 0
        %2902 = vmatpush.bf16.msra.mxu0 0
        %2903 = vmatpush.bf16.msra.mxu0 0
        %2904 = vmatpush.bf16.msra.mxu0 0
        %2905 = vmatpush.bf16.msra.mxu0 0
        %2906 = vmatpush.bf16.msra.mxu0 %v2838
        %2907 = vmatpush.bf16.msra.mxu0 %v2836
        %2908 = vmatmul.bf16.gmra.mxu0 %v2860
        %v2909 = vpop.f32.mrf.mxu0
        %v2910 = vadd.f32 0.0, %v2909
        %v2911 = vpop.f32.mrf.mxu0
        %v2912 = vadd.f32 0.0, %v2911
        %2913 = vmatmul.bf16.gmra.mxu0 %v2863
        %v2914 = vpop.f32.mrf.mxu0
        %v2915 = vadd.f32 0.0, %v2914
        %v2916 = vpop.f32.mrf.mxu0
        %v2917 = vadd.f32 0.0, %v2916
        %2918 = vmatmul.bf16.gmra.mxu0 %v2866
        %v2919 = vpop.f32.mrf.mxu0
        %v2920 = vadd.f32 0.0, %v2919
        %v2921 = vpop.f32.mrf.mxu0
        %v2922 = vadd.f32 0.0, %v2921
        %2923 = vmatmul.bf16.gmra.mxu0 %v2869
        %v2924 = vpop.f32.mrf.mxu0
        %v2925 = vadd.f32 0.0, %v2924
        %v2926 = vpop.f32.mrf.mxu0
        %v2927 = vadd.f32 0.0, %v2926
        %2928 = vdwg.mxu0
        %v2929 = vadd.f32 %v2778, %v2881
        %v2930 = vadd.f32 %v2779, %v2910
        %v2931 = vadd.f32 %v2780, %v2883
        %v2932 = vadd.f32 %v2781, %v2912
        %v2933 = vadd.f32 %v2782, %v2886
        %v2934 = vadd.f32 %v2783, %v2915
        %v2935 = vadd.f32 %v2784, %v2888
        %v2936 = vadd.f32 %v2785, %v2917
        %v2937 = vadd.f32 %v2786, %v2891
        %v2938 = vadd.f32 %v2787, %v2920
        %v2939 = vadd.f32 %v2788, %v2893
        %v2940 = vadd.f32 %v2789, %v2922
        %v2941 = vadd.f32 %v2790, %v2896
        %v2942 = vadd.f32 %v2791, %v2925
        %v2943 = vadd.f32 %v2792, %v2898
        %v2944 = vadd.f32 %v2793, %v2927
        %v2945 = vld [vmem:[%s6] sm:$0xff]
        %v2946 = vld [vmem:[%s6 + $0x8] sm:$0xff]
        %v2947 = vld [vmem:[%s6 + $0x10] sm:$0xff]
        %v2948 = vld [vmem:[%s6 + $0x18] sm:$0xff]
        %v2949 = vld [vmem:[%s6 + $0x20] sm:$0xff]
        %v2950 = vld [vmem:[%s6 + $0x28] sm:$0xff]
        %v2951 = vld [vmem:[%s6 + $0x30] sm:$0xff]
        %v2952 = vld [vmem:[%s6 + $0x38] sm:$0xff]
        %2954 = vset.pattern.permute.xlu0 0
        %2955 = vperm.xlu0 %2954, %v2945
        %v2956 = vpop.permute.xlu0 %2955
        %2959 = vset.pattern.permute.xlu0 0
        %2960 = vperm.xlu0 %2959, %v2946
        %v2961 = vpop.permute.xlu0 %2960
        %2964 = vset.pattern.permute.xlu0 0
        %2965 = vperm.xlu0 %2964, %v2947
        %v2966 = vpop.permute.xlu0 %2965
        %2969 = vset.pattern.permute.xlu0 0
        %2970 = vperm.xlu0 %2969, %v2948
        %v2971 = vpop.permute.xlu0 %2970
        %2974 = vset.pattern.permute.xlu0 0
        %2975 = vperm.xlu0 %2974, %v2949
        %v2976 = vpop.permute.xlu0 %2975
        %2979 = vset.pattern.permute.xlu0 0
        %2980 = vperm.xlu0 %2979, %v2950
        %v2981 = vpop.permute.xlu0 %2980
        %2984 = vset.pattern.permute.xlu0 0
        %2985 = vperm.xlu0 %2984, %v2951
        %v2986 = vpop.permute.xlu0 %2985
        %2989 = vset.pattern.permute.xlu0 0
        %2990 = vperm.xlu0 %2989, %v2952
        %v2991 = vpop.permute.xlu0 %2990
        %v2993 = vadd.f32 %v2929, %v2956
        %v2994 = vadd.f32 %v2930, %v2956
        %v2995 = vadd.f32 %v2931, %v2961
        %v2996 = vadd.f32 %v2932, %v2961
        %v2997 = vadd.f32 %v2933, %v2966
        %v2998 = vadd.f32 %v2934, %v2966
        %v2999 = vadd.f32 %v2935, %v2971
        %v3000 = vadd.f32 %v2936, %v2971
        %v3001 = vadd.f32 %v2937, %v2976
        %v3002 = vadd.f32 %v2938, %v2976
        %v3003 = vadd.f32 %v2939, %v2981
        %v3004 = vadd.f32 %v2940, %v2981
        %v3005 = vadd.f32 %v2941, %v2986
        %v3006 = vadd.f32 %v2942, %v2986
        %v3007 = vadd.f32 %v2943, %v2991
        %v3008 = vadd.f32 %v2944, %v2991
        %v3009 = vmax.f32 %v2993, 0.0
        %v3010 = vmax.f32 %v2994, 0.0
        %v3011 = vmax.f32 %v2995, 0.0
        %v3012 = vmax.f32 %v2996, 0.0
        %v3013 = vmax.f32 %v2997, 0.0
        %v3014 = vmax.f32 %v2998, 0.0
        %v3015 = vmax.f32 %v2999, 0.0
        %v3016 = vmax.f32 %v3000, 0.0
        %v3017 = vmax.f32 %v3001, 0.0
        %v3018 = vmax.f32 %v3002, 0.0
        %v3019 = vmax.f32 %v3003, 0.0
        %v3020 = vmax.f32 %v3004, 0.0
        %v3021 = vmax.f32 %v3005, 0.0
        %v3022 = vmax.f32 %v3006, 0.0
        %v3023 = vmax.f32 %v3007, 0.0
        %v3024 = vmax.f32 %v3008, 0.0
        %3025 = vst [vmem:[%s271] sm:$0xff] %v3009
        %3026 = vst [vmem:[%s271 + $0x8] sm:$0xff] %v3010
        %3027 = vst [vmem:[%s271 + $0x10] sm:$0xff] %v3011
        %3028 = vst [vmem:[%s271 + $0x18] sm:$0xff] %v3012
        %3029 = vst [vmem:[%s271 + $0x20] sm:$0xff] %v3013
        %3030 = vst [vmem:[%s271 + $0x28] sm:$0xff] %v3014
        %3031 = vst [vmem:[%s271 + $0x30] sm:$0xff] %v3015
        %3032 = vst [vmem:[%s271 + $0x38] sm:$0xff] %v3016
        %3033 = vst [vmem:[%s271 + $0x40] sm:$0xff] %v3017
        %3034 = vst [vmem:[%s271 + $0x48] sm:$0xff] %v3018
        %3035 = vst [vmem:[%s271 + $0x50] sm:$0xff] %v3019
        %3036 = vst [vmem:[%s271 + $0x58] sm:$0xff] %v3020
        %3037 = vst [vmem:[%s271 + $0x60] sm:$0xff] %v3021
        %3038 = vst [vmem:[%s271 + $0x68] sm:$0xff] %v3022
        %3039 = vst [vmem:[%s271 + $0x70] sm:$0xff] %v3023
        %3040 = vst [vmem:[%s271 + $0x78] sm:$0xff] %v3024
        %s3041 = sand.u32 %s181, 1
        %s3042 = scalar_lea.sflag [#allocation3], %s3041
        %s3043 = sand.u32 %s181, 1
        %s3044 = smul.addr %s3043, 128
        %s3045 = scalar_lea.vmem [#allocation2], %s3044
        // Predicated region
        $region49: #{tpu_custom_call.1} parent=47 // pred_check
          %p3046 = pneg %p191
        $region50: #{tpu_custom_call.1} parent=47 // pred_check_branch
          %3048 = sbr.rel (%p3046) target = $region52
        $region51: #{tpu_custom_call.1} parent=47 // pred_region
          %3050 = vsyncadd %s3042, 0
          %s3051 = smul.addr %s21, 16
          %s3052 = smul.addr %s3051, 8
          %s3053 = scalar_lea.hbm %s7, %s3052
          %s3054 = sshll.u32 %s3045, 4
          %s3055 = int_to_ptr.vmem [resolvable:$true] %s3054
          %s3056 = sshll.u32 %s3053, 4
          %s3057 = int_to_ptr.hbm [resolvable:$true] %s3056
          %3062 = dma.vmem_to_hbm [thread:$0]  %s3055, 2048, %s3057, %s3042, 256, 256, 16
        $region52: #{tpu_custom_call.1} parent=47 // pred_fallthru
          _
      $region48: #{tpu_custom_call.1} parent=5 // pred_fallthru
        _
      %p3063 = scmp.le.s32.totalorder 2, %s16
      // Predicated region
      $region53: #{tpu_custom_call.1} parent=5 // pred_check
        %p3064 = pneg %p3063
      $region54: #{tpu_custom_call.1} parent=5 // pred_check_branch
        %3066 = sbr.rel (%p3064) target = $region56
      $region55: #{tpu_custom_call.1} parent=5 // pred_region
        %s3067 = ssub.s32 %s16, 2
        // Predicated region
        $region57: #{tpu_custom_call.1} parent=55 // pred_check
          %p3068 = pneg %p197
        $region58: #{tpu_custom_call.1} parent=55 // pred_check_branch
          %3070 = sbr.rel (%p3068) target = $region60
        $region59: #{tpu_custom_call.1} parent=55 // pred_region
          %s3071 = sand.u32 %s182, 1
          %s3072 = scalar_lea.sflag [#allocation3], %s3071
          %s3073 = sand.u32 %s182, 1
          %s3074 = smul.addr %s3073, 128
          %s3075 = scalar_lea.vmem [#allocation2], %s3074
          %3077 = dma.done %s3072, 2048
        $region60: #{tpu_custom_call.1} parent=55 // pred_fallthru
          _
      $region56: #{tpu_custom_call.1} parent=5 // pred_fallthru
        _
    $region6: #{tpu_custom_call.1} parent=1 // loop_footer
      %s20 = sadd.s32 1, %s16
    $region7: #{tpu_custom_call.1} parent=1 // loop_footer_branch
      %15 = sbr.rel target = $region3
    $region8: #{tpu_custom_call.1} parent=1 // loop_exit
      _
    %3078 = vsyncpa [#allocation3], 1
    %s3079 = scalar_lea.sflag [#allocation3], 1
    %3080 = vsyncpa %s3079, 1

</llo_original>
